<compile_context>
chip_gen: v6e
topology: v6e:2x2x1
jax: 0.10.0
libtpu: 0.0.40
codegen_flags: <defaults>
</compile_context>

<pallas_src>
import math

import jax
import jax.numpy as jnp
import numpy as np
from jax.experimental import pallas as pl
from jax.experimental.pallas import tpu as pltpu


def _block_vmem_bytes(bh, Wo, C2, Cp, Cout_p8, in_isz, out_isz, transpose_out):
    """Per-grid-step VMEM footprint (worst-case double buffering on everything)."""
    x_main = 2 * bh * 2 * (Wo + 1) * C2 * in_isz      # main block, 2 buffers
    x_halo = 2 * 1 * 2 * (Wo + 1) * C2 * in_isz       # halo super-row, 2 buffers
    w = 2 * 8 * C2 * Cp * in_isz                      # packed weight (assume 2 bufs)
    bsz = 2 * Cp * 4                                  # bias
    acc = bh * Wo * Cp * 4                            # f32 accumulator scratch
    if transpose_out:
        outb = 2 * Cout_p8 * bh * Wo * out_isz        # output block, 2 buffers
        tmp = bh * Wo * Cp * 4                        # in-kernel transpose temporary
    else:
        outb = 2 * bh * Wo * Cp * out_isz
        tmp = 0
    return x_main + x_halo + w + bsz + acc + outb + tmp


def _pick_block_rows(Ho, Wo, C2, Cp, Cout_p8, in_isz, out_isz, transpose_out,
                     target_m, budget):
    """Pick output-rows-per-step so M ~= target_m and everything fits the budget."""
    def fits(bh):
        need = _block_vmem_bytes(bh, Wo, C2, Cp, Cout_p8, in_isz, out_isz,
                                 transpose_out)
        return need * 1.2 + (2 << 20) <= budget

    bh = max(1, min(Ho, math.ceil(target_m / Wo)))
    while bh > 1 and not fits(bh):
        bh -= 1
    return bh


def _make_kernel(bh, Wo, Cin, Cp, Cout_p8, relu_after, transpose_out):
    C2 = 2 * Cin
    M = bh * Wo
    Mm = (bh - 1) * Wo      # rows fed by the main block for kernel rows kh in {2,3}

    def kernel(x_main_ref, x_halo_ref, w_ref, b_ref, o_ref, acc_ref):
        first = True
        # 8 taps: kh in {0..3} (kernel row), d in {0,1} (column-pair offset).
        # Each tap contracts 2*Cin channels (both columns of a pair at once).
        for kh in range(4):
            p = kh % 2
            for d in range(2):
                t = 2 * kh + d
                w_t = w_ref[t]                                        # (C2, Cp)
                if kh < 2:
                    # Tap fully inside the main block (super-rows 0..bh-1).
                    tap = x_main_ref[:, p, d:d + Wo, :].reshape(M, C2)
                    part = jnp.dot(tap, w_t, preferred_element_type=jnp.float32)
                    if first:                       # fold bias into the first tap
                        acc_ref[...] = part + b_ref[...]
                        first = False
                    else:
                        acc_ref[...] += part
                else:
                    # Tap needs super-rows 1..bh: split main-tail + halo row.
                    if bh > 1:
                        tap_m = x_main_ref[1:bh, p, d:d + Wo, :].reshape(Mm, C2)
                        acc_ref[0:Mm, :] += jnp.dot(
                            tap_m, w_t, preferred_element_type=jnp.float32)
                    tap_h = x_halo_ref[0, p, d:d + Wo, :].reshape(Wo, C2)
                    acc_ref[Mm:M, :] += jnp.dot(
                        tap_h, w_t, preferred_element_type=jnp.float32)

        res = acc_ref[...]
        if relu_after:
            res = jnp.maximum(res, 0.0)
        if transpose_out:
            # NCHW-friendly store: (Cout_p8, M) with spatial on lanes; skips the
            # 128-lane padding write entirely for Cout < 128.
            o_ref[...] = jnp.transpose(res)[:Cout_p8, :].astype(o_ref.dtype)
        else:
            o_ref[...] = res.astype(o_ref.dtype)

    return kernel


def downsample_forward(
    x_nchw,
    weight,          # [Cout, Cin, 4, 4]  (PyTorch Conv2d layout)
    bias,            # [Cout]
    *,
    activate_before="none",
    activate_after="none",
    downsample_type="conv",
    partial_conv=False,
    mask=None,
    compute_dtype=jnp.bfloat16,   # MXU/HBM-friendly default; f32 accumulate inside
    block_rows=None,              # output rows per grid step (auto if None)
    target_block_m=None,          # target matmul-M per step (auto if None)
    vmem_limit_bytes=None,
):
    assert downsample_type == "conv", "only the default 'conv' path is implemented"
    assert not partial_conv and mask is None
    # TODO(synk): 'bilinear'/'nearest'/'maxpool'/'avgpool' pre-resampling and the
    # PartialConv2d (mask_in) path are not implemented.
    if activate_before not in ("relu", "none"):
        raise NotImplementedError(activate_before)
    if activate_after not in ("relu", "none"):
        raise NotImplementedError(activate_after)

    N, Cin, H, W = x_nchw.shape
    Cout, Cin_w, KH, KW = weight.shape
    assert Cin == Cin_w and (KH, KW) == (4, 4)
    # TODO(synk): odd H/W (which PyTorch handles by floor division) not supported.
    assert H % 2 == 0 and W % 2 == 0
    Ho, Wo = H // 2, W // 2
    out_dtype = x_nchw.dtype
    cdt = compute_dtype if compute_dtype is not None else out_dtype

    C2 = 2 * Cin
    Cp = max(128, ((Cout + 127) // 128) * 128)        # lane-dense matmul-N
    transpose_out = Cout < 128                        # NCHW-friendly small-Cout store
    Cout_p8 = ((Cout + 7) // 8) * 8 if transpose_out else Cout

    # ---- generation-aware VMEM budget / target block size ----
    try:
        vmem_cap = int(pltpu.get_tpu_info().vmem_capacity_bytes)
    except Exception:
        vmem_cap = 64 * 1024 * 1024                   # conservative (v7x per-core)
    if target_block_m is None:
        target_block_m = 1024 if vmem_cap >= 100 * 1024 * 1024 else 512
    budget = min(int(0.6 * vmem_cap), 96 * 1024 * 1024)

    in_isz = jnp.dtype(cdt).itemsize
    out_isz = jnp.dtype(out_dtype).itemsize

    # ---- glue: NCHW -> NHWC, optional pre-ReLU + cast, pad, pair rows/cols ----
    x = jnp.transpose(x_nchw, (0, 2, 3, 1))
    if activate_before == "relu":
        x = jnp.maximum(x, 0)
    x = x.astype(cdt)
    x = jnp.pad(x, ((0, 0), (1, 1), (1, 1), (0, 0)))  # [N, 2*(Ho+1), 2*(Wo+1), Cin]
    # Pure metadata reshape: pair rows (super-row, parity) and columns (pair, parity
    # merged into channels).  No data expansion.
    x5 = x.reshape(N, Ho + 1, 2, Wo + 1, C2)          # [N, Ho+1, 2, Wo+1, 2*Cin]

    # ---- row-block tiling ----
    if block_rows is None:
        bh = _pick_block_rows(Ho, Wo, C2, Cp, Cout_p8, in_isz, out_isz,
                              transpose_out, target_block_m, budget)
    else:
        bh = max(1, min(int(block_rows), Ho))
    n_rb = math.ceil(Ho / bh)
    Ho_p = n_rb * bh
    if Ho_p > Ho:    # tiny zero-pad of the super-row axis only
        x5 = jnp.pad(x5, ((0, 0), (0, Ho_p - Ho), (0, 0), (0, 0), (0, 0)))

    if vmem_limit_bytes is None:
        need = _block_vmem_bytes(bh, Wo, C2, Cp, Cout_p8, in_isz, out_isz,
                                 transpose_out)
        vmem_limit_bytes = max(int(need * 1.2) + (2 << 20), 8 << 20)
        vmem_limit_bytes = min(vmem_limit_bytes, int(0.95 * vmem_cap))

    # ---- pack weight / bias: [Cout, Cin, 4, 4] -> [8, 2*Cin, Cp], [1, Cp] ----
    # tap index t = 2*kh + d, contraction index e*Cin + cin  <->  kw = 2*d + e
    wt = jnp.transpose(weight, (2, 3, 1, 0)).reshape(8, C2, Cout)
    b2 = bias.astype(jnp.float32)
    if Cp != Cout:
        wt = jnp.pad(wt, ((0, 0), (0, 0), (0, Cp - Cout)))
        b2 = jnp.pad(b2, (0, Cp - Cout))
    w2 = wt.astype(cdt)
    b2 = b2.reshape(1, Cp)

    kernel = _make_kernel(bh, Wo, Cin, Cp, Cout_p8,
                          activate_after == "relu", transpose_out)

    M = bh * Wo
    if transpose_out:
        out_shape = jax.ShapeDtypeStruct((N, n_rb, Cout_p8, M), out_dtype)
        out_block = pl.BlockSpec((None, None, Cout_p8, M), lambda n, r: (n, r, 0, 0))
        out_bytes = N * n_rb * Cout_p8 * M * out_isz
    else:
        out_shape = jax.ShapeDtypeStruct((N, n_rb, M, Cp), out_dtype)
        out_block = pl.BlockSpec((None, None, M, Cp), lambda n, r: (n, r, 0, 0))
        out_bytes = N * n_rb * M * Cp * out_isz

    flops = 2 * N * Ho_p * Wo * (16 * Cin) * Cp
    bytes_accessed = (int(np.prod(x5.shape)) * in_isz + 8 * C2 * Cp * in_isz
                      + Cp * 4 + out_bytes)
    cost = pl.CostEstimate(flops=flops, transcendentals=0,
                           bytes_accessed=bytes_accessed)

    def run(single_buffer_resident):
        if single_buffer_resident:
            # Constant index_map => resident weight/bias; single buffer saves VMEM.
            w_spec = pl.BlockSpec((8, C2, Cp), lambda n, r: (0, 0, 0),
                                  pipeline_mode=pl.Buffered(1))
            b_spec = pl.BlockSpec((1, Cp), lambda n, r: (0, 0),
                                  pipeline_mode=pl.Buffered(1))
        else:
            w_spec = pl.BlockSpec((8, C2, Cp), lambda n, r: (0, 0, 0))
            b_spec = pl.BlockSpec((1, Cp), lambda n, r: (0, 0))
        return pl.pallas_call(
            kernel,
            out_shape=out_shape,
            grid_spec=pltpu.PrefetchScalarGridSpec(
                num_scalar_prefetch=0,
                grid=(N, n_rb),
                in_specs=[
                    # main: bh super-rows of the (row-paired) padded image
                    pl.BlockSpec((None, bh, 2, Wo + 1, C2),
                                 lambda n, r: (n, r, 0, 0, 0)),
                    # halo: the single super-row just below the main block
                    pl.BlockSpec((None, 1, 2, Wo + 1, C2),
                                 lambda n, r: (n, r * bh + bh, 0, 0, 0)),
                    w_spec,
                    b_spec,
                ],
                out_specs=out_block,
                scratch_shapes=[pltpu.VMEM((M, Cp), jnp.float32)],
            ),
            compiler_params=pltpu.CompilerParams(
                dimension_semantics=("parallel", "parallel"),
                vmem_limit_bytes=int(vmem_limit_bytes),
            ),
            cost_estimate=cost,
        )(x5, x5, w2, b2)

    try:
        out = run(True)
    except Exception:
        # Fallback for Pallas versions without BlockSpec(pipeline_mode=...).
        out = run(False)

    # ---- back to NCHW ----
    if transpose_out:
        out = out.reshape(N, n_rb, Cout_p8, bh, Wo)
        out = jnp.transpose(out, (0, 2, 1, 3, 4)).reshape(N, Cout_p8, Ho_p, Wo)
        return out[:, :Cout, :Ho, :]
    out = out.reshape(N, Ho_p, Wo, Cp)[:, :Ho, :, :Cout]
    return jnp.transpose(out, (0, 3, 1, 2))


if __name__ == "__main__":
    key = jax.random.PRNGKey(0)
    kx, kw_, kb, k2x, k2w, k2b = jax.random.split(key, 6)

    def conv_ref(xx, ww, bb):
        return jax.lax.conv_general_dilated(
            xx, ww, window_strides=(2, 2), padding=((1, 1), (1, 1)),
            dimension_numbers=("NCHW", "OIHW", "NCHW"),
        ) + bb.reshape(1, -1, 1, 1)

    # ---- primary config: small-Cout (transposed-output) path ----
    N, Cin, H, W = 2, 4, 16, 16
    Cout = 8
    x = jax.random.normal(kx, (N, Cin, H, W), dtype=jnp.float32)
    fan_in = Cin * 4 * 4
    bound = 1.0 / np.sqrt(fan_in)
    weight = jax.random.uniform(kw_, (Cout, Cin, 4, 4), jnp.float32, -bound, bound)
    bias = jax.random.uniform(kb, (Cout,), jnp.float32, -bound, bound)

    ref = conv_ref(x, weight, bias)

    # f32 compute path: exact check.
    y32 = jax.block_until_ready(
        downsample_forward(x, weight, bias, compute_dtype=jnp.float32))
    assert y32.shape == (N, Cout, H // 2, W // 2)
    np.testing.assert_allclose(np.asarray(y32), np.asarray(ref), rtol=1e-4, atol=1e-4)

    # bf16 fast path (default): loose check (f32 accumulation inside).
    y16 = jax.block_until_ready(downsample_forward(x, weight, bias))
    np.testing.assert_allclose(np.asarray(y16), np.asarray(ref), rtol=5e-2, atol=5e-2)

    # Fused pre/post-ReLU path.
    yr = jax.block_until_ready(
        downsample_forward(x, weight, bias, activate_before="relu",
                           activate_after="relu", compute_dtype=jnp.float32))
    ref_r = jnp.maximum(conv_ref(jnp.maximum(x, 0.0), weight, bias), 0.0)
    np.testing.assert_allclose(np.asarray(yr), np.asarray(ref_r), rtol=1e-4, atol=1e-4)

    # ---- secondary config: Cout >= 128 (lane-dense, non-transposed) path ----
    N2, Cin2, H2, W2, Cout2 = 1, 8, 16, 16, 128
    x2 = jax.random.normal(k2x, (N2, Cin2, H2, W2), dtype=jnp.float32)
    bound2 = 1.0 / np.sqrt(Cin2 * 16)
    w2_ = jax.random.uniform(k2w, (Cout2, Cin2, 4, 4), jnp.float32, -bound2, bound2)
    bb2 = jax.random.uniform(k2b, (Cout2,), jnp.float32, -bound2, bound2)
    y2 = jax.block_until_ready(
        downsample_forward(x2, w2_, bb2, compute_dtype=jnp.float32))
    np.testing.assert_allclose(np.asarray(y2), np.asarray(conv_ref(x2, w2_, bb2)),
                               rtol=1e-4, atol=1e-4)

    print("KERNEL_OK")
</pallas_src>

<mosaic_0001>
module attributes {stable_mosaic.version = 11 : i64} {
  func.func @kernel(%arg0: i32, %arg1: i32, %arg2: memref<1x8x2x9x8xf32, #tpu.memory_space<vmem>>, %arg3: memref<1x1x2x9x8xf32, #tpu.memory_space<vmem>>, %arg4: memref<8x8x128xf32, #tpu.memory_space<vmem>>, %arg5: memref<1x128xf32, #tpu.memory_space<vmem>>, %arg6: memref<1x1x8x64xf32, #tpu.memory_space<vmem>>, %arg7: memref<64x128xf32, #tpu.memory_space<vmem>>) attributes {dimension_semantics = [#tpu.dimension_semantics<parallel>, #tpu.dimension_semantics<parallel>], iteration_bounds = array<i64: 2, 1>, scalar_prefetch = 0 : i64, scratch_operands = 1 : i64, tpu.core_type = #tpu.core_type<tc>, window_params = [{transform_indices = @transform_0, window_bounds = array<i64: 1, 8, 2, 9, 8>}, {transform_indices = @transform_1, window_bounds = array<i64: 1, 1, 2, 9, 8>}, {pipeline_mode = #tpu.pipeline_mode<synchronous>, transform_indices = @transform_2, window_bounds = array<i64: 8, 8, 128>}, {pipeline_mode = #tpu.pipeline_mode<synchronous>, transform_indices = @transform_3, window_bounds = array<i64: 1, 128>}, {transform_indices = @transform_4, window_bounds = array<i64: 1, 1, 8, 64>}]} {
    %c0 = arith.constant 0 : index
    %c0_0 = arith.constant 0 : index
    %c0_1 = arith.constant 0 : index
    %0 = vector.load %arg4[%c0, %c0_0, %c0_1] : memref<8x8x128xf32, #tpu.memory_space<vmem>>, vector<1x8x128xf32>
    %1 = vector.shape_cast %0 : vector<1x8x128xf32> to vector<8x128xf32>
    %c0_2 = arith.constant 0 : index
    %c0_3 = arith.constant 0 : index
    %c0_4 = arith.constant 0 : index
    %c0_5 = arith.constant 0 : index
    %c0_6 = arith.constant 0 : index
    %2 = vector.load %arg2[%c0_2, %c0_3, %c0_4, %c0_5, %c0_6] : memref<1x8x2x9x8xf32, #tpu.memory_space<vmem>>, vector<1x8x1x8x8xf32>
    %3 = vector.shape_cast %2 : vector<1x8x1x8x8xf32> to vector<8x8x8xf32>
    %4 = vector.shape_cast %3 : vector<8x8x8xf32> to vector<64x8xf32>
    %cst = arith.constant dense<0.000000e+00> : vector<64x128xf32>
    %5 = tpu.matmul %4, %1, %cst {dimension_numbers = #tpu.dot_dimension_numbers<[1], [0], [0], [1], [0, 0, 1, 1], [], []>} : vector<64x8xf32>, vector<8x128xf32>, vector<64x128xf32> -> vector<64x128xf32>
    %c0_7 = arith.constant 0 : index
    %c0_8 = arith.constant 0 : index
    %6 = vector.load %arg5[%c0_7, %c0_8] : memref<1x128xf32, #tpu.memory_space<vmem>>, vector<1x128xf32>
    %7 = vector.broadcast %6 : vector<1x128xf32> to vector<64x128xf32>
    %8 = arith.addf %5, %7 : vector<64x128xf32>
    %c0_9 = arith.constant 0 : index
    %c0_10 = arith.constant 0 : index
    %9 = vector.load %arg7[%c0_9, %c0_10] : memref<64x128xf32, #tpu.memory_space<vmem>>, vector<64x128xf32>
    tpu.vector_store %arg7[%c0_9, %c0_10], %8 {strides = array<i32>} : memref<64x128xf32, #tpu.memory_space<vmem>>, vector<64x128xf32>,
    %c1 = arith.constant 1 : index
    %c0_11 = arith.constant 0 : index
    %c0_12 = arith.constant 0 : index
    %10 = vector.load %arg4[%c1, %c0_11, %c0_12] : memref<8x8x128xf32, #tpu.memory_space<vmem>>, vector<1x8x128xf32>
    %11 = vector.shape_cast %10 : vector<1x8x128xf32> to vector<8x128xf32>
    %c0_13 = arith.constant 0 : index
    %c0_14 = arith.constant 0 : index
    %c0_15 = arith.constant 0 : index
    %c1_16 = arith.constant 1 : index
    %c0_17 = arith.constant 0 : index
    %12 = vector.load %arg2[%c0_13, %c0_14, %c0_15, %c1_16, %c0_17] : memref<1x8x2x9x8xf32, #tpu.memory_space<vmem>>, vector<1x8x1x8x8xf32>
    %13 = vector.shape_cast %12 : vector<1x8x1x8x8xf32> to vector<8x8x8xf32>
    %14 = vector.shape_cast %13 : vector<8x8x8xf32> to vector<64x8xf32>
    %cst_18 = arith.constant dense<0.000000e+00> : vector<64x128xf32>
    %15 = tpu.matmul %14, %11, %cst_18 {dimension_numbers = #tpu.dot_dimension_numbers<[1], [0], [0], [1], [0, 0, 1, 1], [], []>} : vector<64x8xf32>, vector<8x128xf32>, vector<64x128xf32> -> vector<64x128xf32>
    %c0_19 = arith.constant 0 : index
    %c0_20 = arith.constant 0 : index
    %16 = vector.load %arg7[%c0_19, %c0_20] : memref<64x128xf32, #tpu.memory_space<vmem>>, vector<64x128xf32>
    %17 = arith.addf %16, %15 : vector<64x128xf32>
    %c0_21 = arith.constant 0 : index
    %c0_22 = arith.constant 0 : index
    %18 = vector.load %arg7[%c0_21, %c0_22] : memref<64x128xf32, #tpu.memory_space<vmem>>, vector<64x128xf32>
    tpu.vector_store %arg7[%c0_21, %c0_22], %17 {strides = array<i32>} : memref<64x128xf32, #tpu.memory_space<vmem>>, vector<64x128xf32>,
    %c2 = arith.constant 2 : index
    %c0_23 = arith.constant 0 : index
    %c0_24 = arith.constant 0 : index
    %19 = vector.load %arg4[%c2, %c0_23, %c0_24] : memref<8x8x128xf32, #tpu.memory_space<vmem>>, vector<1x8x128xf32>
    %20 = vector.shape_cast %19 : vector<1x8x128xf32> to vector<8x128xf32>
    %c0_25 = arith.constant 0 : index
    %c0_26 = arith.constant 0 : index
    %c1_27 = arith.constant 1 : index
    %c0_28 = arith.constant 0 : index
    %c0_29 = arith.constant 0 : index
    %21 = vector.load %arg2[%c0_25, %c0_26, %c1_27, %c0_28, %c0_29] : memref<1x8x2x9x8xf32, #tpu.memory_space<vmem>>, vector<1x8x1x8x8xf32>
    %22 = vector.shape_cast %21 : vector<1x8x1x8x8xf32> to vector<8x8x8xf32>
    %23 = vector.shape_cast %22 : vector<8x8x8xf32> to vector<64x8xf32>
    %cst_30 = arith.constant dense<0.000000e+00> : vector<64x128xf32>
    %24 = tpu.matmul %23, %20, %cst_30 {dimension_numbers = #tpu.dot_dimension_numbers<[1], [0], [0], [1], [0, 0, 1, 1], [], []>} : vector<64x8xf32>, vector<8x128xf32>, vector<64x128xf32> -> vector<64x128xf32>
    %c0_31 = arith.constant 0 : index
    %c0_32 = arith.constant 0 : index
    %25 = vector.load %arg7[%c0_31, %c0_32] : memref<64x128xf32, #tpu.memory_space<vmem>>, vector<64x128xf32>
    %26 = arith.addf %25, %24 : vector<64x128xf32>
    %c0_33 = arith.constant 0 : index
    %c0_34 = arith.constant 0 : index
    %27 = vector.load %arg7[%c0_33, %c0_34] : memref<64x128xf32, #tpu.memory_space<vmem>>, vector<64x128xf32>
    tpu.vector_store %arg7[%c0_33, %c0_34], %26 {strides = array<i32>} : memref<64x128xf32, #tpu.memory_space<vmem>>, vector<64x128xf32>,
    %c3 = arith.constant 3 : index
    %c0_35 = arith.constant 0 : index
    %c0_36 = arith.constant 0 : index
    %28 = vector.load %arg4[%c3, %c0_35, %c0_36] : memref<8x8x128xf32, #tpu.memory_space<vmem>>, vector<1x8x128xf32>
    %29 = vector.shape_cast %28 : vector<1x8x128xf32> to vector<8x128xf32>
    %c0_37 = arith.constant 0 : index
    %c0_38 = arith.constant 0 : index
    %c1_39 = arith.constant 1 : index
    %c1_40 = arith.constant 1 : index
    %c0_41 = arith.constant 0 : index
    %30 = vector.load %arg2[%c0_37, %c0_38, %c1_39, %c1_40, %c0_41] : memref<1x8x2x9x8xf32, #tpu.memory_space<vmem>>, vector<1x8x1x8x8xf32>
    %31 = vector.shape_cast %30 : vector<1x8x1x8x8xf32> to vector<8x8x8xf32>
    %32 = vector.shape_cast %31 : vector<8x8x8xf32> to vector<64x8xf32>
    %cst_42 = arith.constant dense<0.000000e+00> : vector<64x128xf32>
    %33 = tpu.matmul %32, %29, %cst_42 {dimension_numbers = #tpu.dot_dimension_numbers<[1], [0], [0], [1], [0, 0, 1, 1], [], []>} : vector<64x8xf32>, vector<8x128xf32>, vector<64x128xf32> -> vector<64x128xf32>
    %c0_43 = arith.constant 0 : index
    %c0_44 = arith.constant 0 : index
    %34 = vector.load %arg7[%c0_43, %c0_44] : memref<64x128xf32, #tpu.memory_space<vmem>>, vector<64x128xf32>
    %35 = arith.addf %34, %33 : vector<64x128xf32>
    %c0_45 = arith.constant 0 : index
    %c0_46 = arith.constant 0 : index
    %36 = vector.load %arg7[%c0_45, %c0_46] : memref<64x128xf32, #tpu.memory_space<vmem>>, vector<64x128xf32>
    tpu.vector_store %arg7[%c0_45, %c0_46], %35 {strides = array<i32>} : memref<64x128xf32, #tpu.memory_space<vmem>>, vector<64x128xf32>,
    %c4 = arith.constant 4 : index
    %c0_47 = arith.constant 0 : index
    %c0_48 = arith.constant 0 : index
    %37 = vector.load %arg4[%c4, %c0_47, %c0_48] : memref<8x8x128xf32, #tpu.memory_space<vmem>>, vector<1x8x128xf32>
    %38 = vector.shape_cast %37 : vector<1x8x128xf32> to vector<8x128xf32>
    %c0_49 = arith.constant 0 : index
    %c1_50 = arith.constant 1 : index
    %c0_51 = arith.constant 0 : index
    %c0_52 = arith.constant 0 : index
    %c0_53 = arith.constant 0 : index
    %39 = vector.load %arg2[%c0_49, %c1_50, %c0_51, %c0_52, %c0_53] : memref<1x8x2x9x8xf32, #tpu.memory_space<vmem>>, vector<1x7x1x8x8xf32>
    %40 = vector.shape_cast %39 : vector<1x7x1x8x8xf32> to vector<7x8x8xf32>
    %41 = vector.shape_cast %40 : vector<7x8x8xf32> to vector<56x8xf32>
    %c0_54 = arith.constant 0 : index
    %c0_55 = arith.constant 0 : index
    %42 = vector.load %arg7[%c0_54, %c0_55] : memref<64x128xf32, #tpu.memory_space<vmem>>, vector<56x128xf32>
    %cst_56 = arith.constant dense<0.000000e+00> : vector<56x128xf32>
    %43 = tpu.matmul %41, %38, %cst_56 {dimension_numbers = #tpu.dot_dimension_numbers<[1], [0], [0], [1], [0, 0, 1, 1], [], []>} : vector<56x8xf32>, vector<8x128xf32>, vector<56x128xf32> -> vector<56x128xf32>
    %44 = arith.addf %42, %43 : vector<56x128xf32>
    %c0_57 = arith.constant 0 : index
    %c0_58 = arith.constant 0 : index
    %45 = vector.load %arg7[%c0_57, %c0_58] : memref<64x128xf32, #tpu.memory_space<vmem>>, vector<56x128xf32>
    tpu.vector_store %arg7[%c0_57, %c0_58], %44 {strides = array<i32>} : memref<64x128xf32, #tpu.memory_space<vmem>>, vector<56x128xf32>,
    %c0_59 = arith.constant 0 : index
    %c0_60 = arith.constant 0 : index
    %c0_61 = arith.constant 0 : index
    %c0_62 = arith.constant 0 : index
    %c0_63 = arith.constant 0 : index
    %46 = vector.load %arg3[%c0_59, %c0_60, %c0_61, %c0_62, %c0_63] : memref<1x1x2x9x8xf32, #tpu.memory_space<vmem>>, vector<1x1x1x8x8xf32>
    %47 = vector.shape_cast %46 : vector<1x1x1x8x8xf32> to vector<8x8xf32>
    %c56 = arith.constant 56 : index
    %c0_64 = arith.constant 0 : index
    %48 = vector.load %arg7[%c56, %c0_64] : memref<64x128xf32, #tpu.memory_space<vmem>>, vector<8x128xf32>
    %cst_65 = arith.constant dense<0.000000e+00> : vector<8x128xf32>
    %49 = tpu.matmul %47, %38, %cst_65 {dimension_numbers = #tpu.dot_dimension_numbers<[1], [0], [0], [1], [0, 0, 1, 1], [], []>} : vector<8x8xf32>, vector<8x128xf32>, vector<8x128xf32> -> vector<8x128xf32>
    %50 = arith.addf %48, %49 : vector<8x128xf32>
    %c56_66 = arith.constant 56 : index
    %c0_67 = arith.constant 0 : index
    %51 = vector.load %arg7[%c56_66, %c0_67] : memref<64x128xf32, #tpu.memory_space<vmem>>, vector<8x128xf32>
    tpu.vector_store %arg7[%c56_66, %c0_67], %50 {strides = array<i32>} : memref<64x128xf32, #tpu.memory_space<vmem>>, vector<8x128xf32>,
    %c5 = arith.constant 5 : index
    %c0_68 = arith.constant 0 : index
    %c0_69 = arith.constant 0 : index
    %52 = vector.load %arg4[%c5, %c0_68, %c0_69] : memref<8x8x128xf32, #tpu.memory_space<vmem>>, vector<1x8x128xf32>
    %53 = vector.shape_cast %52 : vector<1x8x128xf32> to vector<8x128xf32>
    %c0_70 = arith.constant 0 : index
    %c1_71 = arith.constant 1 : index
    %c0_72 = arith.constant 0 : index
    %c1_73 = arith.constant 1 : index
    %c0_74 = arith.constant 0 : index
    %54 = vector.load %arg2[%c0_70, %c1_71, %c0_72, %c1_73, %c0_74] : memref<1x8x2x9x8xf32, #tpu.memory_space<vmem>>, vector<1x7x1x8x8xf32>
    %55 = vector.shape_cast %54 : vector<1x7x1x8x8xf32> to vector<7x8x8xf32>
    %56 = vector.shape_cast %55 : vector<7x8x8xf32> to vector<56x8xf32>
    %c0_75 = arith.constant 0 : index
    %c0_76 = arith.constant 0 : index
    %57 = vector.load %arg7[%c0_75, %c0_76] : memref<64x128xf32, #tpu.memory_space<vmem>>, vector<56x128xf32>
    %cst_77 = arith.constant dense<0.000000e+00> : vector<56x128xf32>
    %58 = tpu.matmul %56, %53, %cst_77 {dimension_numbers = #tpu.dot_dimension_numbers<[1], [0], [0], [1], [0, 0, 1, 1], [], []>} : vector<56x8xf32>, vector<8x128xf32>, vector<56x128xf32> -> vector<56x128xf32>
    %59 = arith.addf %57, %58 : vector<56x128xf32>
    %c0_78 = arith.constant 0 : index
    %c0_79 = arith.constant 0 : index
    %60 = vector.load %arg7[%c0_78, %c0_79] : memref<64x128xf32, #tpu.memory_space<vmem>>, vector<56x128xf32>
    tpu.vector_store %arg7[%c0_78, %c0_79], %59 {strides = array<i32>} : memref<64x128xf32, #tpu.memory_space<vmem>>, vector<56x128xf32>,
    %c0_80 = arith.constant 0 : index
    %c0_81 = arith.constant 0 : index
    %c0_82 = arith.constant 0 : index
    %c1_83 = arith.constant 1 : index
    %c0_84 = arith.constant 0 : index
    %61 = vector.load %arg3[%c0_80, %c0_81, %c0_82, %c1_83, %c0_84] : memref<1x1x2x9x8xf32, #tpu.memory_space<vmem>>, vector<1x1x1x8x8xf32>
    %62 = vector.shape_cast %61 : vector<1x1x1x8x8xf32> to vector<8x8xf32>
    %c56_85 = arith.constant 56 : index
    %c0_86 = arith.constant 0 : index
    %63 = vector.load %arg7[%c56_85, %c0_86] : memref<64x128xf32, #tpu.memory_space<vmem>>, vector<8x128xf32>
    %cst_87 = arith.constant dense<0.000000e+00> : vector<8x128xf32>
    %64 = tpu.matmul %62, %53, %cst_87 {dimension_numbers = #tpu.dot_dimension_numbers<[1], [0], [0], [1], [0, 0, 1, 1], [], []>} : vector<8x8xf32>, vector<8x128xf32>, vector<8x128xf32> -> vector<8x128xf32>
    %65 = arith.addf %63, %64 : vector<8x128xf32>
    %c56_88 = arith.constant 56 : index
    %c0_89 = arith.constant 0 : index
    %66 = vector.load %arg7[%c56_88, %c0_89] : memref<64x128xf32, #tpu.memory_space<vmem>>, vector<8x128xf32>
    tpu.vector_store %arg7[%c56_88, %c0_89], %65 {strides = array<i32>} : memref<64x128xf32, #tpu.memory_space<vmem>>, vector<8x128xf32>,
    %c6 = arith.constant 6 : index
    %c0_90 = arith.constant 0 : index
    %c0_91 = arith.constant 0 : index
    %67 = vector.load %arg4[%c6, %c0_90, %c0_91] : memref<8x8x128xf32, #tpu.memory_space<vmem>>, vector<1x8x128xf32>
    %68 = vector.shape_cast %67 : vector<1x8x128xf32> to vector<8x128xf32>
    %c0_92 = arith.constant 0 : index
    %c1_93 = arith.constant 1 : index
    %c1_94 = arith.constant 1 : index
    %c0_95 = arith.constant 0 : index
    %c0_96 = arith.constant 0 : index
    %69 = vector.load %arg2[%c0_92, %c1_93, %c1_94, %c0_95, %c0_96] : memref<1x8x2x9x8xf32, #tpu.memory_space<vmem>>, vector<1x7x1x8x8xf32>
    %70 = vector.shape_cast %69 : vector<1x7x1x8x8xf32> to vector<7x8x8xf32>
    %71 = vector.shape_cast %70 : vector<7x8x8xf32> to vector<56x8xf32>
    %c0_97 = arith.constant 0 : index
    %c0_98 = arith.constant 0 : index
    %72 = vector.load %arg7[%c0_97, %c0_98] : memref<64x128xf32, #tpu.memory_space<vmem>>, vector<56x128xf32>
    %cst_99 = arith.constant dense<0.000000e+00> : vector<56x128xf32>
    %73 = tpu.matmul %71, %68, %cst_99 {dimension_numbers = #tpu.dot_dimension_numbers<[1], [0], [0], [1], [0, 0, 1, 1], [], []>} : vector<56x8xf32>, vector<8x128xf32>, vector<56x128xf32> -> vector<56x128xf32>
    %74 = arith.addf %72, %73 : vector<56x128xf32>
    %c0_100 = arith.constant 0 : index
    %c0_101 = arith.constant 0 : index
    %75 = vector.load %arg7[%c0_100, %c0_101] : memref<64x128xf32, #tpu.memory_space<vmem>>, vector<56x128xf32>
    tpu.vector_store %arg7[%c0_100, %c0_101], %74 {strides = array<i32>} : memref<64x128xf32, #tpu.memory_space<vmem>>, vector<56x128xf32>,
    %c0_102 = arith.constant 0 : index
    %c0_103 = arith.constant 0 : index
    %c1_104 = arith.constant 1 : index
    %c0_105 = arith.constant 0 : index
    %c0_106 = arith.constant 0 : index
    %76 = vector.load %arg3[%c0_102, %c0_103, %c1_104, %c0_105, %c0_106] : memref<1x1x2x9x8xf32, #tpu.memory_space<vmem>>, vector<1x1x1x8x8xf32>
    %77 = vector.shape_cast %76 : vector<1x1x1x8x8xf32> to vector<8x8xf32>
    %c56_107 = arith.constant 56 : index
    %c0_108 = arith.constant 0 : index
    %78 = vector.load %arg7[%c56_107, %c0_108] : memref<64x128xf32, #tpu.memory_space<vmem>>, vector<8x128xf32>
    %cst_109 = arith.constant dense<0.000000e+00> : vector<8x128xf32>
    %79 = tpu.matmul %77, %68, %cst_109 {dimension_numbers = #tpu.dot_dimension_numbers<[1], [0], [0], [1], [0, 0, 1, 1], [], []>} : vector<8x8xf32>, vector<8x128xf32>, vector<8x128xf32> -> vector<8x128xf32>
    %80 = arith.addf %78, %79 : vector<8x128xf32>
    %c56_110 = arith.constant 56 : index
    %c0_111 = arith.constant 0 : index
    %81 = vector.load %arg7[%c56_110, %c0_111] : memref<64x128xf32, #tpu.memory_space<vmem>>, vector<8x128xf32>
    tpu.vector_store %arg7[%c56_110, %c0_111], %80 {strides = array<i32>} : memref<64x128xf32, #tpu.memory_space<vmem>>, vector<8x128xf32>,
    %c7 = arith.constant 7 : index
    %c0_112 = arith.constant 0 : index
    %c0_113 = arith.constant 0 : index
    %82 = vector.load %arg4[%c7, %c0_112, %c0_113] : memref<8x8x128xf32, #tpu.memory_space<vmem>>, vector<1x8x128xf32>
    %83 = vector.shape_cast %82 : vector<1x8x128xf32> to vector<8x128xf32>
    %c0_114 = arith.constant 0 : index
    %c1_115 = arith.constant 1 : index
    %c1_116 = arith.constant 1 : index
    %c1_117 = arith.constant 1 : index
    %c0_118 = arith.constant 0 : index
    %84 = vector.load %arg2[%c0_114, %c1_115, %c1_116, %c1_117, %c0_118] : memref<1x8x2x9x8xf32, #tpu.memory_space<vmem>>, vector<1x7x1x8x8xf32>
    %85 = vector.shape_cast %84 : vector<1x7x1x8x8xf32> to vector<7x8x8xf32>
    %86 = vector.shape_cast %85 : vector<7x8x8xf32> to vector<56x8xf32>
    %c0_119 = arith.constant 0 : index
    %c0_120 = arith.constant 0 : index
    %87 = vector.load %arg7[%c0_119, %c0_120] : memref<64x128xf32, #tpu.memory_space<vmem>>, vector<56x128xf32>
    %cst_121 = arith.constant dense<0.000000e+00> : vector<56x128xf32>
    %88 = tpu.matmul %86, %83, %cst_121 {dimension_numbers = #tpu.dot_dimension_numbers<[1], [0], [0], [1], [0, 0, 1, 1], [], []>} : vector<56x8xf32>, vector<8x128xf32>, vector<56x128xf32> -> vector<56x128xf32>
    %89 = arith.addf %87, %88 : vector<56x128xf32>
    %c0_122 = arith.constant 0 : index
    %c0_123 = arith.constant 0 : index
    %90 = vector.load %arg7[%c0_122, %c0_123] : memref<64x128xf32, #tpu.memory_space<vmem>>, vector<56x128xf32>
    tpu.vector_store %arg7[%c0_122, %c0_123], %89 {strides = array<i32>} : memref<64x128xf32, #tpu.memory_space<vmem>>, vector<56x128xf32>,
    %c0_124 = arith.constant 0 : index
    %c0_125 = arith.constant 0 : index
    %c1_126 = arith.constant 1 : index
    %c1_127 = arith.constant 1 : index
    %c0_128 = arith.constant 0 : index
    %91 = vector.load %arg3[%c0_124, %c0_125, %c1_126, %c1_127, %c0_128] : memref<1x1x2x9x8xf32, #tpu.memory_space<vmem>>, vector<1x1x1x8x8xf32>
    %92 = vector.shape_cast %91 : vector<1x1x1x8x8xf32> to vector<8x8xf32>
    %c56_129 = arith.constant 56 : index
    %c0_130 = arith.constant 0 : index
    %93 = vector.load %arg7[%c56_129, %c0_130] : memref<64x128xf32, #tpu.memory_space<vmem>>, vector<8x128xf32>
    %cst_131 = arith.constant dense<0.000000e+00> : vector<8x128xf32>
    %94 = tpu.matmul %92, %83, %cst_131 {dimension_numbers = #tpu.dot_dimension_numbers<[1], [0], [0], [1], [0, 0, 1, 1], [], []>} : vector<8x8xf32>, vector<8x128xf32>, vector<8x128xf32> -> vector<8x128xf32>
    %95 = arith.addf %93, %94 : vector<8x128xf32>
    %c56_132 = arith.constant 56 : index
    %c0_133 = arith.constant 0 : index
    %96 = vector.load %arg7[%c56_132, %c0_133] : memref<64x128xf32, #tpu.memory_space<vmem>>, vector<8x128xf32>
    tpu.vector_store %arg7[%c56_132, %c0_133], %95 {strides = array<i32>} : memref<64x128xf32, #tpu.memory_space<vmem>>, vector<8x128xf32>,
    %c0_134 = arith.constant 0 : index
    %c0_135 = arith.constant 0 : index
    %97 = vector.load %arg7[%c0_134, %c0_135] : memref<64x128xf32, #tpu.memory_space<vmem>>, vector<64x128xf32>
    %98 = tpu.transpose %97, [1, 0] : vector<64x128xf32> -> vector<128x64xf32>
    %99 = vector.extract_strided_slice %98 {offsets = [0, 0], sizes = [8, 64], strides = [1, 1]} : vector<128x64xf32> to vector<8x64xf32>
    %c0_136 = arith.constant 0 : index
    %c0_137 = arith.constant 0 : index
    %c0_138 = arith.constant 0 : index
    %c0_139 = arith.constant 0 : index
    %100 = vector.load %arg6[%c0_136, %c0_137, %c0_138, %c0_139] : memref<1x1x8x64xf32, #tpu.memory_space<vmem>>, vector<1x1x8x64xf32>
    %101 = vector.shape_cast %100 : vector<1x1x8x64xf32> to vector<8x64xf32>
    %102 = vector.shape_cast %99 : vector<8x64xf32> to vector<1x1x8x64xf32>
    tpu.vector_store %arg6[%c0_136, %c0_137, %c0_138, %c0_139], %102 {strides = array<i32>} : memref<1x1x8x64xf32, #tpu.memory_space<vmem>>, vector<1x1x8x64xf32>,
    return
  }
  func.func @transform_0(%arg0: i32, %arg1: i32) -> (i32, i32, i32, i32, i32) {
    %c0_i32 = arith.constant 0 : i32
    %c0_i32_0 = arith.constant 0 : i32
    %c0_i32_1 = arith.constant 0 : i32
    %c0_i32_2 = arith.constant 0 : i32
    return %arg0, %arg1, %c0_i32, %c0_i32_0, %c0_i32_1 : i32, i32, i32, i32, i32
  }
  func.func @transform_1(%arg0: i32, %arg1: i32) -> (i32, i32, i32, i32, i32) {
    %c8_i32 = arith.constant 8 : i32
    %0 = arith.muli %arg1, %c8_i32 : i32
    %c8_i32_0 = arith.constant 8 : i32
    %1 = arith.addi %0, %c8_i32_0 : i32
    %c0_i32 = arith.constant 0 : i32
    %c0_i32_1 = arith.constant 0 : i32
    %c0_i32_2 = arith.constant 0 : i32
    %c0_i32_3 = arith.constant 0 : i32
    return %arg0, %1, %c0_i32, %c0_i32_1, %c0_i32_2 : i32, i32, i32, i32, i32
  }
  func.func @transform_2(%arg0: i32, %arg1: i32) -> (i32, i32, i32) {
    %c0_i32 = arith.constant 0 : i32
    %c0_i32_0 = arith.constant 0 : i32
    %c0_i32_1 = arith.constant 0 : i32
    %c0_i32_2 = arith.constant 0 : i32
    return %c0_i32, %c0_i32_0, %c0_i32_1 : i32, i32, i32
  }
  func.func @transform_3(%arg0: i32, %arg1: i32) -> (i32, i32) {
    %c0_i32 = arith.constant 0 : i32
    %c0_i32_0 = arith.constant 0 : i32
    %c0_i32_1 = arith.constant 0 : i32
    return %c0_i32, %c0_i32_0 : i32, i32
  }
  func.func @transform_4(%arg0: i32, %arg1: i32) -> (i32, i32, i32, i32) {
    %c0_i32 = arith.constant 0 : i32
    %c0_i32_0 = arith.constant 0 : i32
    %c0_i32_1 = arith.constant 0 : i32
    return %arg0, %arg1, %c0_i32, %c0_i32_0 : i32, i32, i32, i32
  }
}

module attributes {stable_mosaic.version = 11 : i64} {
  func.func @kernel(%arg0: i32, %arg1: i32, %arg2: memref<1x8x2x9x8xf32, #tpu.memory_space<vmem>>, %arg3: memref<1x1x2x9x8xf32, #tpu.memory_space<vmem>>, %arg4: memref<8x8x128xf32, #tpu.memory_space<vmem>>, %arg5: memref<1x128xf32, #tpu.memory_space<vmem>>, %arg6: memref<1x1x8x64xf32, #tpu.memory_space<vmem>>, %arg7: memref<64x128xf32, #tpu.memory_space<vmem>>) attributes {dimension_semantics = [#tpu.dimension_semantics<parallel>, #tpu.dimension_semantics<parallel>], iteration_bounds = array<i64: 2, 1>, scalar_prefetch = 0 : i64, scratch_operands = 1 : i64, tpu.core_type = #tpu.core_type<tc>, window_params = [{transform_indices = @transform_0, window_bounds = array<i64: 1, 8, 2, 9, 8>}, {transform_indices = @transform_1, window_bounds = array<i64: 1, 1, 2, 9, 8>}, {pipeline_mode = #tpu.pipeline_mode<synchronous>, transform_indices = @transform_2, window_bounds = array<i64: 8, 8, 128>}, {pipeline_mode = #tpu.pipeline_mode<synchronous>, transform_indices = @transform_3, window_bounds = array<i64: 1, 128>}, {transform_indices = @transform_4, window_bounds = array<i64: 1, 1, 8, 64>}]} {
    %c0 = arith.constant 0 : index
    %c0_0 = arith.constant 0 : index
    %c0_1 = arith.constant 0 : index
    %0 = vector.load %arg4[%c0, %c0_0, %c0_1] : memref<8x8x128xf32, #tpu.memory_space<vmem>>, vector<1x8x128xf32>
    %1 = vector.shape_cast %0 : vector<1x8x128xf32> to vector<8x128xf32>
    %c0_2 = arith.constant 0 : index
    %c0_3 = arith.constant 0 : index
    %c0_4 = arith.constant 0 : index
    %c0_5 = arith.constant 0 : index
    %c0_6 = arith.constant 0 : index
    %2 = vector.load %arg2[%c0_2, %c0_3, %c0_4, %c0_5, %c0_6] : memref<1x8x2x9x8xf32, #tpu.memory_space<vmem>>, vector<1x8x1x8x8xf32>
    %3 = vector.shape_cast %2 : vector<1x8x1x8x8xf32> to vector<8x8x8xf32>
    %4 = vector.shape_cast %3 : vector<8x8x8xf32> to vector<64x8xf32>
    %cst = arith.constant dense<0.000000e+00> : vector<64x128xf32>
    %5 = tpu.matmul %4, %1, %cst {dimension_numbers = #tpu.dot_dimension_numbers<[1], [0], [0], [1], [0, 0, 1, 1], [], []>} : vector<64x8xf32>, vector<8x128xf32>, vector<64x128xf32> -> vector<64x128xf32>
    %c0_7 = arith.constant 0 : index
    %c0_8 = arith.constant 0 : index
    %6 = vector.load %arg5[%c0_7, %c0_8] : memref<1x128xf32, #tpu.memory_space<vmem>>, vector<1x128xf32>
    %7 = vector.broadcast %6 : vector<1x128xf32> to vector<64x128xf32>
    %8 = arith.addf %5, %7 : vector<64x128xf32>
    %c0_9 = arith.constant 0 : index
    %c0_10 = arith.constant 0 : index
    %9 = vector.load %arg7[%c0_9, %c0_10] : memref<64x128xf32, #tpu.memory_space<vmem>>, vector<64x128xf32>
    tpu.vector_store %arg7[%c0_9, %c0_10], %8 {strides = array<i32>} : memref<64x128xf32, #tpu.memory_space<vmem>>, vector<64x128xf32>,
    %c1 = arith.constant 1 : index
    %c0_11 = arith.constant 0 : index
    %c0_12 = arith.constant 0 : index
    %10 = vector.load %arg4[%c1, %c0_11, %c0_12] : memref<8x8x128xf32, #tpu.memory_space<vmem>>, vector<1x8x128xf32>
    %11 = vector.shape_cast %10 : vector<1x8x128xf32> to vector<8x128xf32>
    %c0_13 = arith.constant 0 : index
    %c0_14 = arith.constant 0 : index
    %c0_15 = arith.constant 0 : index
    %c1_16 = arith.constant 1 : index
    %c0_17 = arith.constant 0 : index
    %12 = vector.load %arg2[%c0_13, %c0_14, %c0_15, %c1_16, %c0_17] : memref<1x8x2x9x8xf32, #tpu.memory_space<vmem>>, vector<1x8x1x8x8xf32>
    %13 = vector.shape_cast %12 : vector<1x8x1x8x8xf32> to vector<8x8x8xf32>
    %14 = vector.shape_cast %13 : vector<8x8x8xf32> to vector<64x8xf32>
    %cst_18 = arith.constant dense<0.000000e+00> : vector<64x128xf32>
    %15 = tpu.matmul %14, %11, %cst_18 {dimension_numbers = #tpu.dot_dimension_numbers<[1], [0], [0], [1], [0, 0, 1, 1], [], []>} : vector<64x8xf32>, vector<8x128xf32>, vector<64x128xf32> -> vector<64x128xf32>
    %c0_19 = arith.constant 0 : index
    %c0_20 = arith.constant 0 : index
    %16 = vector.load %arg7[%c0_19, %c0_20] : memref<64x128xf32, #tpu.memory_space<vmem>>, vector<64x128xf32>
    %17 = arith.addf %16, %15 : vector<64x128xf32>
    %c0_21 = arith.constant 0 : index
    %c0_22 = arith.constant 0 : index
    %18 = vector.load %arg7[%c0_21, %c0_22] : memref<64x128xf32, #tpu.memory_space<vmem>>, vector<64x128xf32>
    tpu.vector_store %arg7[%c0_21, %c0_22], %17 {strides = array<i32>} : memref<64x128xf32, #tpu.memory_space<vmem>>, vector<64x128xf32>,
    %c2 = arith.constant 2 : index
    %c0_23 = arith.constant 0 : index
    %c0_24 = arith.constant 0 : index
    %19 = vector.load %arg4[%c2, %c0_23, %c0_24] : memref<8x8x128xf32, #tpu.memory_space<vmem>>, vector<1x8x128xf32>
    %20 = vector.shape_cast %19 : vector<1x8x128xf32> to vector<8x128xf32>
    %c0_25 = arith.constant 0 : index
    %c0_26 = arith.constant 0 : index
    %c1_27 = arith.constant 1 : index
    %c0_28 = arith.constant 0 : index
    %c0_29 = arith.constant 0 : index
    %21 = vector.load %arg2[%c0_25, %c0_26, %c1_27, %c0_28, %c0_29] : memref<1x8x2x9x8xf32, #tpu.memory_space<vmem>>, vector<1x8x1x8x8xf32>
    %22 = vector.shape_cast %21 : vector<1x8x1x8x8xf32> to vector<8x8x8xf32>
    %23 = vector.shape_cast %22 : vector<8x8x8xf32> to vector<64x8xf32>
    %cst_30 = arith.constant dense<0.000000e+00> : vector<64x128xf32>
    %24 = tpu.matmul %23, %20, %cst_30 {dimension_numbers = #tpu.dot_dimension_numbers<[1], [0], [0], [1], [0, 0, 1, 1], [], []>} : vector<64x8xf32>, vector<8x128xf32>, vector<64x128xf32> -> vector<64x128xf32>
    %c0_31 = arith.constant 0 : index
    %c0_32 = arith.constant 0 : index
    %25 = vector.load %arg7[%c0_31, %c0_32] : memref<64x128xf32, #tpu.memory_space<vmem>>, vector<64x128xf32>
    %26 = arith.addf %25, %24 : vector<64x128xf32>
    %c0_33 = arith.constant 0 : index
    %c0_34 = arith.constant 0 : index
    %27 = vector.load %arg7[%c0_33, %c0_34] : memref<64x128xf32, #tpu.memory_space<vmem>>, vector<64x128xf32>
    tpu.vector_store %arg7[%c0_33, %c0_34], %26 {strides = array<i32>} : memref<64x128xf32, #tpu.memory_space<vmem>>, vector<64x128xf32>,
    %c3 = arith.constant 3 : index
    %c0_35 = arith.constant 0 : index
    %c0_36 = arith.constant 0 : index
    %28 = vector.load %arg4[%c3, %c0_35, %c0_36] : memref<8x8x128xf32, #tpu.memory_space<vmem>>, vector<1x8x128xf32>
    %29 = vector.shape_cast %28 : vector<1x8x128xf32> to vector<8x128xf32>
    %c0_37 = arith.constant 0 : index
    %c0_38 = arith.constant 0 : index
    %c1_39 = arith.constant 1 : index
    %c1_40 = arith.constant 1 : index
    %c0_41 = arith.constant 0 : index
    %30 = vector.load %arg2[%c0_37, %c0_38, %c1_39, %c1_40, %c0_41] : memref<1x8x2x9x8xf32, #tpu.memory_space<vmem>>, vector<1x8x1x8x8xf32>
    %31 = vector.shape_cast %30 : vector<1x8x1x8x8xf32> to vector<8x8x8xf32>
    %32 = vector.shape_cast %31 : vector<8x8x8xf32> to vector<64x8xf32>
    %cst_42 = arith.constant dense<0.000000e+00> : vector<64x128xf32>
    %33 = tpu.matmul %32, %29, %cst_42 {dimension_numbers = #tpu.dot_dimension_numbers<[1], [0], [0], [1], [0, 0, 1, 1], [], []>} : vector<64x8xf32>, vector<8x128xf32>, vector<64x128xf32> -> vector<64x128xf32>
    %c0_43 = arith.constant 0 : index
    %c0_44 = arith.constant 0 : index
    %34 = vector.load %arg7[%c0_43, %c0_44] : memref<64x128xf32, #tpu.memory_space<vmem>>, vector<64x128xf32>
    %35 = arith.addf %34, %33 : vector<64x128xf32>
    %c0_45 = arith.constant 0 : index
    %c0_46 = arith.constant 0 : index
    %36 = vector.load %arg7[%c0_45, %c0_46] : memref<64x128xf32, #tpu.memory_space<vmem>>, vector<64x128xf32>
    tpu.vector_store %arg7[%c0_45, %c0_46], %35 {strides = array<i32>} : memref<64x128xf32, #tpu.memory_space<vmem>>, vector<64x128xf32>,
    %c4 = arith.constant 4 : index
    %c0_47 = arith.constant 0 : index
    %c0_48 = arith.constant 0 : index
    %37 = vector.load %arg4[%c4, %c0_47, %c0_48] : memref<8x8x128xf32, #tpu.memory_space<vmem>>, vector<1x8x128xf32>
    %38 = vector.shape_cast %37 : vector<1x8x128xf32> to vector<8x128xf32>
    %c0_49 = arith.constant 0 : index
    %c1_50 = arith.constant 1 : index
    %c0_51 = arith.constant 0 : index
    %c0_52 = arith.constant 0 : index
    %c0_53 = arith.constant 0 : index
    %39 = vector.load %arg2[%c0_49, %c1_50, %c0_51, %c0_52, %c0_53] : memref<1x8x2x9x8xf32, #tpu.memory_space<vmem>>, vector<1x7x1x8x8xf32>
    %40 = vector.shape_cast %39 : vector<1x7x1x8x8xf32> to vector<7x8x8xf32>
    %41 = vector.shape_cast %40 : vector<7x8x8xf32> to vector<56x8xf32>
    %c0_54 = arith.constant 0 : index
    %c0_55 = arith.constant 0 : index
    %42 = vector.load %arg7[%c0_54, %c0_55] : memref<64x128xf32, #tpu.memory_space<vmem>>, vector<56x128xf32>
    %cst_56 = arith.constant dense<0.000000e+00> : vector<56x128xf32>
    %43 = tpu.matmul %41, %38, %cst_56 {dimension_numbers = #tpu.dot_dimension_numbers<[1], [0], [0], [1], [0, 0, 1, 1], [], []>} : vector<56x8xf32>, vector<8x128xf32>, vector<56x128xf32> -> vector<56x128xf32>
    %44 = arith.addf %42, %43 : vector<56x128xf32>
    %c0_57 = arith.constant 0 : index
    %c0_58 = arith.constant 0 : index
    %45 = vector.load %arg7[%c0_57, %c0_58] : memref<64x128xf32, #tpu.memory_space<vmem>>, vector<56x128xf32>
    tpu.vector_store %arg7[%c0_57, %c0_58], %44 {strides = array<i32>} : memref<64x128xf32, #tpu.memory_space<vmem>>, vector<56x128xf32>,
    %c0_59 = arith.constant 0 : index
    %c0_60 = arith.constant 0 : index
    %c0_61 = arith.constant 0 : index
    %c0_62 = arith.constant 0 : index
    %c0_63 = arith.constant 0 : index
    %46 = vector.load %arg3[%c0_59, %c0_60, %c0_61, %c0_62, %c0_63] : memref<1x1x2x9x8xf32, #tpu.memory_space<vmem>>, vector<1x1x1x8x8xf32>
    %47 = vector.shape_cast %46 : vector<1x1x1x8x8xf32> to vector<8x8xf32>
    %c56 = arith.constant 56 : index
    %c0_64 = arith.constant 0 : index
    %48 = vector.load %arg7[%c56, %c0_64] : memref<64x128xf32, #tpu.memory_space<vmem>>, vector<8x128xf32>
    %cst_65 = arith.constant dense<0.000000e+00> : vector<8x128xf32>
    %49 = tpu.matmul %47, %38, %cst_65 {dimension_numbers = #tpu.dot_dimension_numbers<[1], [0], [0], [1], [0, 0, 1, 1], [], []>} : vector<8x8xf32>, vector<8x128xf32>, vector<8x128xf32> -> vector<8x128xf32>
    %50 = arith.addf %48, %49 : vector<8x128xf32>
    %c56_66 = arith.constant 56 : index
    %c0_67 = arith.constant 0 : index
    %51 = vector.load %arg7[%c56_66, %c0_67] : memref<64x128xf32, #tpu.memory_space<vmem>>, vector<8x128xf32>
    tpu.vector_store %arg7[%c56_66, %c0_67], %50 {strides = array<i32>} : memref<64x128xf32, #tpu.memory_space<vmem>>, vector<8x128xf32>,
    %c5 = arith.constant 5 : index
    %c0_68 = arith.constant 0 : index
    %c0_69 = arith.constant 0 : index
    %52 = vector.load %arg4[%c5, %c0_68, %c0_69] : memref<8x8x128xf32, #tpu.memory_space<vmem>>, vector<1x8x128xf32>
    %53 = vector.shape_cast %52 : vector<1x8x128xf32> to vector<8x128xf32>
    %c0_70 = arith.constant 0 : index
    %c1_71 = arith.constant 1 : index
    %c0_72 = arith.constant 0 : index
    %c1_73 = arith.constant 1 : index
    %c0_74 = arith.constant 0 : index
    %54 = vector.load %arg2[%c0_70, %c1_71, %c0_72, %c1_73, %c0_74] : memref<1x8x2x9x8xf32, #tpu.memory_space<vmem>>, vector<1x7x1x8x8xf32>
    %55 = vector.shape_cast %54 : vector<1x7x1x8x8xf32> to vector<7x8x8xf32>
    %56 = vector.shape_cast %55 : vector<7x8x8xf32> to vector<56x8xf32>
    %c0_75 = arith.constant 0 : index
    %c0_76 = arith.constant 0 : index
    %57 = vector.load %arg7[%c0_75, %c0_76] : memref<64x128xf32, #tpu.memory_space<vmem>>, vector<56x128xf32>
    %cst_77 = arith.constant dense<0.000000e+00> : vector<56x128xf32>
    %58 = tpu.matmul %56, %53, %cst_77 {dimension_numbers = #tpu.dot_dimension_numbers<[1], [0], [0], [1], [0, 0, 1, 1], [], []>} : vector<56x8xf32>, vector<8x128xf32>, vector<56x128xf32> -> vector<56x128xf32>
    %59 = arith.addf %57, %58 : vector<56x128xf32>
    %c0_78 = arith.constant 0 : index
    %c0_79 = arith.constant 0 : index
    %60 = vector.load %arg7[%c0_78, %c0_79] : memref<64x128xf32, #tpu.memory_space<vmem>>, vector<56x128xf32>
    tpu.vector_store %arg7[%c0_78, %c0_79], %59 {strides = array<i32>} : memref<64x128xf32, #tpu.memory_space<vmem>>, vector<56x128xf32>,
    %c0_80 = arith.constant 0 : index
    %c0_81 = arith.constant 0 : index
    %c0_82 = arith.constant 0 : index
    %c1_83 = arith.constant 1 : index
    %c0_84 = arith.constant 0 : index
    %61 = vector.load %arg3[%c0_80, %c0_81, %c0_82, %c1_83, %c0_84] : memref<1x1x2x9x8xf32, #tpu.memory_space<vmem>>, vector<1x1x1x8x8xf32>
    %62 = vector.shape_cast %61 : vector<1x1x1x8x8xf32> to vector<8x8xf32>
    %c56_85 = arith.constant 56 : index
    %c0_86 = arith.constant 0 : index
    %63 = vector.load %arg7[%c56_85, %c0_86] : memref<64x128xf32, #tpu.memory_space<vmem>>, vector<8x128xf32>
    %cst_87 = arith.constant dense<0.000000e+00> : vector<8x128xf32>
    %64 = tpu.matmul %62, %53, %cst_87 {dimension_numbers = #tpu.dot_dimension_numbers<[1], [0], [0], [1], [0, 0, 1, 1], [], []>} : vector<8x8xf32>, vector<8x128xf32>, vector<8x128xf32> -> vector<8x128xf32>
    %65 = arith.addf %63, %64 : vector<8x128xf32>
    %c56_88 = arith.constant 56 : index
    %c0_89 = arith.constant 0 : index
    %66 = vector.load %arg7[%c56_88, %c0_89] : memref<64x128xf32, #tpu.memory_space<vmem>>, vector<8x128xf32>
    tpu.vector_store %arg7[%c56_88, %c0_89], %65 {strides = array<i32>} : memref<64x128xf32, #tpu.memory_space<vmem>>, vector<8x128xf32>,
    %c6 = arith.constant 6 : index
    %c0_90 = arith.constant 0 : index
    %c0_91 = arith.constant 0 : index
    %67 = vector.load %arg4[%c6, %c0_90, %c0_91] : memref<8x8x128xf32, #tpu.memory_space<vmem>>, vector<1x8x128xf32>
    %68 = vector.shape_cast %67 : vector<1x8x128xf32> to vector<8x128xf32>
    %c0_92 = arith.constant 0 : index
    %c1_93 = arith.constant 1 : index
    %c1_94 = arith.constant 1 : index
    %c0_95 = arith.constant 0 : index
    %c0_96 = arith.constant 0 : index
    %69 = vector.load %arg2[%c0_92, %c1_93, %c1_94, %c0_95, %c0_96] : memref<1x8x2x9x8xf32, #tpu.memory_space<vmem>>, vector<1x7x1x8x8xf32>
    %70 = vector.shape_cast %69 : vector<1x7x1x8x8xf32> to vector<7x8x8xf32>
    %71 = vector.shape_cast %70 : vector<7x8x8xf32> to vector<56x8xf32>
    %c0_97 = arith.constant 0 : index
    %c0_98 = arith.constant 0 : index
    %72 = vector.load %arg7[%c0_97, %c0_98] : memref<64x128xf32, #tpu.memory_space<vmem>>, vector<56x128xf32>
    %cst_99 = arith.constant dense<0.000000e+00> : vector<56x128xf32>
    %73 = tpu.matmul %71, %68, %cst_99 {dimension_numbers = #tpu.dot_dimension_numbers<[1], [0], [0], [1], [0, 0, 1, 1], [], []>} : vector<56x8xf32>, vector<8x128xf32>, vector<56x128xf32> -> vector<56x128xf32>
    %74 = arith.addf %72, %73 : vector<56x128xf32>
    %c0_100 = arith.constant 0 : index
    %c0_101 = arith.constant 0 : index
    %75 = vector.load %arg7[%c0_100, %c0_101] : memref<64x128xf32, #tpu.memory_space<vmem>>, vector<56x128xf32>
    tpu.vector_store %arg7[%c0_100, %c0_101], %74 {strides = array<i32>} : memref<64x128xf32, #tpu.memory_space<vmem>>, vector<56x128xf32>,
    %c0_102 = arith.constant 0 : index
    %c0_103 = arith.constant 0 : index
    %c1_104 = arith.constant 1 : index
    %c0_105 = arith.constant 0 : index
    %c0_106 = arith.constant 0 : index
    %76 = vector.load %arg3[%c0_102, %c0_103, %c1_104, %c0_105, %c0_106] : memref<1x1x2x9x8xf32, #tpu.memory_space<vmem>>, vector<1x1x1x8x8xf32>
    %77 = vector.shape_cast %76 : vector<1x1x1x8x8xf32> to vector<8x8xf32>
    %c56_107 = arith.constant 56 : index
    %c0_108 = arith.constant 0 : index
    %78 = vector.load %arg7[%c56_107, %c0_108] : memref<64x128xf32, #tpu.memory_space<vmem>>, vector<8x128xf32>
    %cst_109 = arith.constant dense<0.000000e+00> : vector<8x128xf32>
    %79 = tpu.matmul %77, %68, %cst_109 {dimension_numbers = #tpu.dot_dimension_numbers<[1], [0], [0], [1], [0, 0, 1, 1], [], []>} : vector<8x8xf32>, vector<8x128xf32>, vector<8x128xf32> -> vector<8x128xf32>
    %80 = arith.addf %78, %79 : vector<8x128xf32>
    %c56_110 = arith.constant 56 : index
    %c0_111 = arith.constant 0 : index
    %81 = vector.load %arg7[%c56_110, %c0_111] : memref<64x128xf32, #tpu.memory_space<vmem>>, vector<8x128xf32>
    tpu.vector_store %arg7[%c56_110, %c0_111], %80 {strides = array<i32>} : memref<64x128xf32, #tpu.memory_space<vmem>>, vector<8x128xf32>,
    %c7 = arith.constant 7 : index
    %c0_112 = arith.constant 0 : index
    %c0_113 = arith.constant 0 : index
    %82 = vector.load %arg4[%c7, %c0_112, %c0_113] : memref<8x8x128xf32, #tpu.memory_space<vmem>>, vector<1x8x128xf32>
    %83 = vector.shape_cast %82 : vector<1x8x128xf32> to vector<8x128xf32>
    %c0_114 = arith.constant 0 : index
    %c1_115 = arith.constant 1 : index
    %c1_116 = arith.constant 1 : index
    %c1_117 = arith.constant 1 : index
    %c0_118 = arith.constant 0 : index
    %84 = vector.load %arg2[%c0_114, %c1_115, %c1_116, %c1_117, %c0_118] : memref<1x8x2x9x8xf32, #tpu.memory_space<vmem>>, vector<1x7x1x8x8xf32>
    %85 = vector.shape_cast %84 : vector<1x7x1x8x8xf32> to vector<7x8x8xf32>
    %86 = vector.shape_cast %85 : vector<7x8x8xf32> to vector<56x8xf32>
    %c0_119 = arith.constant 0 : index
    %c0_120 = arith.constant 0 : index
    %87 = vector.load %arg7[%c0_119, %c0_120] : memref<64x128xf32, #tpu.memory_space<vmem>>, vector<56x128xf32>
    %cst_121 = arith.constant dense<0.000000e+00> : vector<56x128xf32>
    %88 = tpu.matmul %86, %83, %cst_121 {dimension_numbers = #tpu.dot_dimension_numbers<[1], [0], [0], [1], [0, 0, 1, 1], [], []>} : vector<56x8xf32>, vector<8x128xf32>, vector<56x128xf32> -> vector<56x128xf32>
    %89 = arith.addf %87, %88 : vector<56x128xf32>
    %c0_122 = arith.constant 0 : index
    %c0_123 = arith.constant 0 : index
    %90 = vector.load %arg7[%c0_122, %c0_123] : memref<64x128xf32, #tpu.memory_space<vmem>>, vector<56x128xf32>
    tpu.vector_store %arg7[%c0_122, %c0_123], %89 {strides = array<i32>} : memref<64x128xf32, #tpu.memory_space<vmem>>, vector<56x128xf32>,
    %c0_124 = arith.constant 0 : index
    %c0_125 = arith.constant 0 : index
    %c1_126 = arith.constant 1 : index
    %c1_127 = arith.constant 1 : index
    %c0_128 = arith.constant 0 : index
    %91 = vector.load %arg3[%c0_124, %c0_125, %c1_126, %c1_127, %c0_128] : memref<1x1x2x9x8xf32, #tpu.memory_space<vmem>>, vector<1x1x1x8x8xf32>
    %92 = vector.shape_cast %91 : vector<1x1x1x8x8xf32> to vector<8x8xf32>
    %c56_129 = arith.constant 56 : index
    %c0_130 = arith.constant 0 : index
    %93 = vector.load %arg7[%c56_129, %c0_130] : memref<64x128xf32, #tpu.memory_space<vmem>>, vector<8x128xf32>
    %cst_131 = arith.constant dense<0.000000e+00> : vector<8x128xf32>
    %94 = tpu.matmul %92, %83, %cst_131 {dimension_numbers = #tpu.dot_dimension_numbers<[1], [0], [0], [1], [0, 0, 1, 1], [], []>} : vector<8x8xf32>, vector<8x128xf32>, vector<8x128xf32> -> vector<8x128xf32>
    %95 = arith.addf %93, %94 : vector<8x128xf32>
    %c56_132 = arith.constant 56 : index
    %c0_133 = arith.constant 0 : index
    %96 = vector.load %arg7[%c56_132, %c0_133] : memref<64x128xf32, #tpu.memory_space<vmem>>, vector<8x128xf32>
    tpu.vector_store %arg7[%c56_132, %c0_133], %95 {strides = array<i32>} : memref<64x128xf32, #tpu.memory_space<vmem>>, vector<8x128xf32>,
    %c0_134 = arith.constant 0 : index
    %c0_135 = arith.constant 0 : index
    %97 = vector.load %arg7[%c0_134, %c0_135] : memref<64x128xf32, #tpu.memory_space<vmem>>, vector<64x128xf32>
    %98 = tpu.transpose %97, [1, 0] : vector<64x128xf32> -> vector<128x64xf32>
    %99 = vector.extract_strided_slice %98 {offsets = [0, 0], sizes = [8, 64], strides = [1, 1]} : vector<128x64xf32> to vector<8x64xf32>
    %c0_136 = arith.constant 0 : index
    %c0_137 = arith.constant 0 : index
    %c0_138 = arith.constant 0 : index
    %c0_139 = arith.constant 0 : index
    %100 = vector.load %arg6[%c0_136, %c0_137, %c0_138, %c0_139] : memref<1x1x8x64xf32, #tpu.memory_space<vmem>>, vector<1x1x8x64xf32>
    %101 = vector.shape_cast %100 : vector<1x1x8x64xf32> to vector<8x64xf32>
    %102 = vector.shape_cast %99 : vector<8x64xf32> to vector<1x1x8x64xf32>
    tpu.vector_store %arg6[%c0_136, %c0_137, %c0_138, %c0_139], %102 {strides = array<i32>} : memref<1x1x8x64xf32, #tpu.memory_space<vmem>>, vector<1x1x8x64xf32>,
    return
  }
  func.func @transform_0(%arg0: i32, %arg1: i32) -> (i32, i32, i32, i32, i32) {
    %c0_i32 = arith.constant 0 : i32
    %c0_i32_0 = arith.constant 0 : i32
    %c0_i32_1 = arith.constant 0 : i32
    %c0_i32_2 = arith.constant 0 : i32
    return %arg0, %arg1, %c0_i32, %c0_i32_0, %c0_i32_1 : i32, i32, i32, i32, i32
  }
  func.func @transform_1(%arg0: i32, %arg1: i32) -> (i32, i32, i32, i32, i32) {
    %c8_i32 = arith.constant 8 : i32
    %0 = arith.muli %arg1, %c8_i32 : i32
    %c8_i32_0 = arith.constant 8 : i32
    %1 = arith.addi %0, %c8_i32_0 : i32
    %c0_i32 = arith.constant 0 : i32
    %c0_i32_1 = arith.constant 0 : i32
    %c0_i32_2 = arith.constant 0 : i32
    %c0_i32_3 = arith.constant 0 : i32
    return %arg0, %1, %c0_i32, %c0_i32_1, %c0_i32_2 : i32, i32, i32, i32, i32
  }
  func.func @transform_2(%arg0: i32, %arg1: i32) -> (i32, i32, i32) {
    %c0_i32 = arith.constant 0 : i32
    %c0_i32_0 = arith.constant 0 : i32
    %c0_i32_1 = arith.constant 0 : i32
    %c0_i32_2 = arith.constant 0 : i32
    return %c0_i32, %c0_i32_0, %c0_i32_1 : i32, i32, i32
  }
  func.func @transform_3(%arg0: i32, %arg1: i32) -> (i32, i32) {
    %c0_i32 = arith.constant 0 : i32
    %c0_i32_0 = arith.constant 0 : i32
    %c0_i32_1 = arith.constant 0 : i32
    return %c0_i32, %c0_i32_0 : i32, i32
  }
  func.func @transform_4(%arg0: i32, %arg1: i32) -> (i32, i32, i32, i32) {
    %c0_i32 = arith.constant 0 : i32
    %c0_i32_0 = arith.constant 0 : i32
    %c0_i32_1 = arith.constant 0 : i32
    return %arg0, %arg1, %c0_i32, %c0_i32_0 : i32, i32, i32, i32
  }
}

</mosaic_0001>

<llo_original>
// kernel: tpu_custom_call.1
$region0: #{tpu_custom_call.1}
  #allocation0 [shape = 'u32[]', space=smem, size = 0x4, offset = 0x4, fixed_abs, tag = 'smem constant byte address 0x4 - core index']
  #allocation1 [shape = 'u32[144,128]{1,0:T(1,128)}', space=vmem, size = 0x12000, scoped, tag = 'internal scratch']
  #allocation2 [shape = 'f32[64,128]{1,0:T(8,128)}', space=vmem, size = 0x8000, scoped, tag = 'scratch operand']
  %s0 = inlined_call_operand.vmem [shape: f32[2,9,2,9,8], index: 0, kind: input, shape index: {}]
  %s1 = inlined_call_operand.vmem [shape: f32[2,9,2,9,8], index: 1, kind: input, shape index: {}]
  %s2 = inlined_call_operand.vmem [shape: f32[8,8,128], index: 2, kind: input, shape index: {}]
  %s3 = inlined_call_operand.vmem [shape: f32[1,128], index: 3, kind: input, shape index: {}]
  %s4 = inlined_call_operand.hbm [shape: f32[2,1,8,64], index: 4, kind: output, shape index: {}]
  %s5 = sld [smem:[#allocation0]]
  $region49: #{tpu_custom_call.1} parent=0
    _
  %s7 = ssub.s32 1, %s5
  %s8 = scalar_select 0, %s7, %s5
  $region1: #{tpu_custom_call.1} parent=0
    #allocation3 [shape = 'u8[8192]{0}', space=vmem, size = 0x2000, scoped, tag = 'output window, operand 0']
    #allocation4 [shape = 's32[2]{0}', space=sflag, size = 0x8, scoped, tag = 'scoped memory for tpu_custom_call.1']
    %9 = vsyncpa [#allocation4], 0
    %s10 = scalar_lea.sflag [#allocation4], 1
    %11 = vsyncpa %s10, 0
    loop: start=0, step=1, limit=4
    $region2: #{tpu_custom_call.1} parent=1 // loop_pre_header
      _
    $region3: #{tpu_custom_call.1} parent=1 // loop_header
      %s13 = sphi 0, %s17
      %p14 = scmp.ge.s32.totalorder %s13, 4
      %s20 = sphi 0, %s32
      %s21 = sphi 0, %s28
      %s22 = sphi 0, %s20
      %s23 = sphi 0, %s21
      %s24 = sphi 0, %s22
      %s25 = sphi 0, %s23
      %s37 = sphi 0, %s39
      %s40 = sphi 0, %s37
      %s41 = sphi 0, %s40
      %s57 = sphi 0, %s41
      %s69 = sphi 0, %s71
      %s72 = sphi 0, %s69
      %s73 = sphi 0, %s72
      %s89 = sphi 0, %s73
      %s93 = sphi 0, %s93
      %s95 = sphi 0, %s93
      %s96 = sphi 0, %s95
      %s110 = sphi 0, %s96
      %s114 = sphi 0, %s114
      %s116 = sphi 0, %s114
      %s117 = sphi 0, %s116
      %s131 = sphi 0, %s117
      %s139 = sphi 0, %s141
      %s142 = sphi 0, %s139
      %s143 = sphi 0, %s142
      %s159 = sphi 0, %s143
    $region4: #{tpu_custom_call.1} parent=1 // loop_header_branch
      %16 = sbr.rel (%p14) target = $region8
    $region5: #{tpu_custom_call.1} parent=1 // loop_body
      %s18 = ssub.s32 %s13, 1
      %s19 = ssub.s32 %s13, 2
      %s26 = sadd.s32 1, %s21
      %p27 = scmp.ge.s32.totalorder %s26, 1
      %s28 = scalar_select %p27, 0, %s26
      %s29 = sadd.s32 1, %s20
      %s30 = scalar_select %p27, %s29, %s20
      %p31 = scmp.ge.s32.totalorder %s30, 2
      %s32 = scalar_select %p31, 0, %s30
      %s33 = ssub.s32 %s20, %s32
      %s34 = ssub.s32 %s21, %s28
      %s35 = sor.u32 %s33, %s34
      %p36 = scmp.eq.s32.totalorder %s35, 0
      %s38 = sadd.s32 %s37, 1
      %s39 = scalar_select %p36, %s37, %s38
      %p42 = pneg %p36
      %p43 = scmp.eq.s32.totalorder %s13, 1
      %p44 = por %p42, %p43
      %p45 = scmp.ne.s32.totalorder %s37, %s40
      %p46 = scmp.eq.s32.totalorder %s13, 0
      %p47 = por %p45, %p46
      %p48 = scmp.ne.s32.totalorder %s37, %s40
      %p49 = scmp.eq.s32.totalorder %s18, 1
      %p50 = por %p48, %p49
      %p51 = scmp.ne.s32.totalorder %s40, %s41
      %p52 = scmp.eq.s32.totalorder %s18, 0
      %p53 = por %p51, %p52
      %p54 = scmp.ne.s32.totalorder %s40, %s41
      %p55 = scmp.eq.s32.totalorder %s19, 1
      %p56 = por %p54, %p55
      %p58 = scmp.ne.s32.totalorder %s41, %s57
      %p59 = scmp.eq.s32.totalorder %s19, 0
      %p60 = por %p58, %p59
      %s61 = smul.u32 %s21, 8
      %s62 = sadd.s32 %s61, 8
      %s63 = smul.u32 %s28, 8
      %s64 = sadd.s32 %s63, 8
      %s65 = ssub.s32 %s20, %s32
      %s66 = ssub.s32 %s62, %s64
      %s67 = sor.u32 %s65, %s66
      %p68 = scmp.eq.s32.totalorder %s67, 0
      %s70 = sadd.s32 %s69, 1
      %s71 = scalar_select %p68, %s69, %s70
      %p74 = pneg %p68
      %p75 = scmp.eq.s32.totalorder %s13, 1
      %p76 = por %p74, %p75
      %p77 = scmp.ne.s32.totalorder %s69, %s72
      %p78 = scmp.eq.s32.totalorder %s13, 0
      %p79 = por %p77, %p78
      %p80 = scmp.ne.s32.totalorder %s69, %s72
      %p81 = scmp.eq.s32.totalorder %s18, 1
      %p82 = por %p80, %p81
      %p83 = scmp.ne.s32.totalorder %s72, %s73
      %p84 = scmp.eq.s32.totalorder %s18, 0
      %p85 = por %p83, %p84
      %p86 = scmp.ne.s32.totalorder %s72, %s73
      %p87 = scmp.eq.s32.totalorder %s19, 1
      %p88 = por %p86, %p87
      %p90 = scmp.ne.s32.totalorder %s73, %s89
      %p91 = scmp.eq.s32.totalorder %s19, 0
      %p92 = por %p90, %p91
      %s94 = sadd.s32 %s93, 1
      %p97 = scmp.eq.s32.totalorder %s13, 1
      %p98 = scmp.ne.s32.totalorder %s93, %s95
      %p99 = scmp.eq.s32.totalorder %s13, 0
      %p100 = por %p98, %p99
      %p101 = scmp.ne.s32.totalorder %s93, %s95
      %p102 = scmp.eq.s32.totalorder %s18, 1
      %p103 = por %p101, %p102
      %p104 = scmp.ne.s32.totalorder %s95, %s96
      %p105 = scmp.eq.s32.totalorder %s18, 0
      %p106 = por %p104, %p105
      %p107 = scmp.ne.s32.totalorder %s95, %s96
      %p108 = scmp.eq.s32.totalorder %s19, 1
      %p109 = por %p107, %p108
      %p111 = scmp.ne.s32.totalorder %s96, %s110
      %p112 = scmp.eq.s32.totalorder %s19, 0
      %p113 = por %p111, %p112
      %s115 = sadd.s32 %s114, 1
      %p118 = scmp.eq.s32.totalorder %s13, 1
      %p119 = scmp.ne.s32.totalorder %s114, %s116
      %p120 = scmp.eq.s32.totalorder %s13, 0
      %p121 = por %p119, %p120
      %p122 = scmp.ne.s32.totalorder %s114, %s116
      %p123 = scmp.eq.s32.totalorder %s18, 1
      %p124 = por %p122, %p123
      %p125 = scmp.ne.s32.totalorder %s116, %s117
      %p126 = scmp.eq.s32.totalorder %s18, 0
      %p127 = por %p125, %p126
      %p128 = scmp.ne.s32.totalorder %s116, %s117
      %p129 = scmp.eq.s32.totalorder %s19, 1
      %p130 = por %p128, %p129
      %p132 = scmp.ne.s32.totalorder %s117, %s131
      %p133 = scmp.eq.s32.totalorder %s19, 0
      %p134 = por %p132, %p133
      %s135 = ssub.s32 %s20, %s32
      %s136 = ssub.s32 %s21, %s28
      %s137 = sor.u32 %s135, %s136
      %p138 = scmp.eq.s32.totalorder %s137, 0
      %s140 = sadd.s32 %s139, 1
      %s141 = scalar_select %p138, %s139, %s140
      %p144 = pneg %p138
      %p145 = scmp.eq.s32.totalorder %s13, 1
      %p146 = por %p144, %p145
      %p147 = scmp.ne.s32.totalorder %s139, %s142
      %p148 = scmp.eq.s32.totalorder %s13, 0
      %p149 = por %p147, %p148
      %p150 = scmp.ne.s32.totalorder %s139, %s142
      %p151 = scmp.eq.s32.totalorder %s18, 1
      %p152 = por %p150, %p151
      %p153 = scmp.ne.s32.totalorder %s142, %s143
      %p154 = scmp.eq.s32.totalorder %s18, 0
      %p155 = por %p153, %p154
      %p156 = scmp.ne.s32.totalorder %s142, %s143
      %p157 = scmp.eq.s32.totalorder %s19, 1
      %p158 = por %p156, %p157
      %p160 = scmp.ne.s32.totalorder %s143, %s159
      %p161 = scmp.eq.s32.totalorder %s19, 0
      %p162 = por %p160, %p161
      %p163 = scmp.le.s32.totalorder 1, %s13
      %p164 = scmp.lt.s32.totalorder %s13, 3
      %p165 = pnand %p163, %p164
      %p166 = pneg %p165
      // Predicated region
      $region9: #{tpu_custom_call.1} parent=5 // pred_check
        _
      $region10: #{tpu_custom_call.1} parent=5 // pred_check_branch
        %168 = sbr.rel (%p165) target = $region12
      $region11: #{tpu_custom_call.1} parent=5 // pred_region
        %s169 = ssub.s32 %s13, 1
        // Predicated region
        $region13: #{tpu_custom_call.1} parent=11 // pred_check
          %p170 = pneg %p106
        $region14: #{tpu_custom_call.1} parent=11 // pred_check_branch
          %172 = sbr.rel (%p170) target = $region16
        $region15: #{tpu_custom_call.1} parent=11 // pred_region
          _
        $region16: #{tpu_custom_call.1} parent=11 // pred_fallthru
          _
        // Predicated region
        $region17: #{tpu_custom_call.1} parent=11 // pred_check
          %p173 = pneg %p127
        $region18: #{tpu_custom_call.1} parent=11 // pred_check_branch
          %175 = sbr.rel (%p173) target = $region20
        $region19: #{tpu_custom_call.1} parent=11 // pred_region
          _
        $region20: #{tpu_custom_call.1} parent=11 // pred_fallthru
          _
      $region12: #{tpu_custom_call.1} parent=5 // pred_fallthru
        _
      %p176 = scmp.lt.s32.totalorder %s13, 2
      // Predicated region
      $region21: #{tpu_custom_call.1} parent=5 // pred_check
        %p177 = pneg %p176
      $region22: #{tpu_custom_call.1} parent=5 // pred_check_branch
        %179 = sbr.rel (%p177) target = $region24
      $region23: #{tpu_custom_call.1} parent=5 // pred_region
        // Predicated region
        $region25: #{tpu_custom_call.1} parent=23 // pred_check
          %p180 = pneg %p47
        $region26: #{tpu_custom_call.1} parent=23 // pred_check_branch
          %182 = sbr.rel (%p180) target = $region28
        $region27: #{tpu_custom_call.1} parent=23 // pred_region
          %s183 = smul.u32 8, %s21
          %s184 = ssub.s32 9, %s183
          %p185 = scmp.lt.s32.totalorder %s184, 8
          %s186 = scalar_select %p185, %s184, 8
          %s187 = smul.u32 128, %s186
          %s188 = smul.u32 %s187, 2
          %s189 = smul.u32 %s188, 2
          %p190 = scmp.lt.s32.totalorder %s20, 1
          %s191 = scalar_select %p190, %s20, 1
          %p192 = scmp.lt.s32.totalorder %s183, 8
          %s193 = scalar_select %p192, %s183, 8
          %s194 = smul.addr %s193, 4
          %s195 = smul.addr %s191, 36
          %s196 = sadd.s32 %s194, %s195
          %s197 = smul.addr %s196, 8
          %s198 = scalar_lea.vmem %s0, %s197
          %s199 = smul.u32 8, %s21
          %s200 = ssub.s32 9, %s199
          %p201 = scmp.lt.s32.totalorder %s200, 8
          %s202 = scalar_select %p201, %s200, 8
          %s203 = smul.u32 128, %s202
          %s204 = smul.u32 %s203, 2
          %s205 = smul.u32 %s204, 2
        $region28: #{tpu_custom_call.1} parent=23 // pred_fallthru
          _
        // Predicated region
        $region29: #{tpu_custom_call.1} parent=23 // pred_check
          %p206 = pneg %p79
        $region30: #{tpu_custom_call.1} parent=23 // pred_check_branch
          %208 = sbr.rel (%p206) target = $region32
        $region31: #{tpu_custom_call.1} parent=23 // pred_region
          %s209 = smul.u32 %s21, 8
          %s210 = sadd.s32 %s209, 8
          %p211 = scmp.lt.s32.totalorder %s20, 1
          %s212 = scalar_select %p211, %s20, 1
          %p213 = scmp.lt.s32.totalorder %s210, 8
          %s214 = scalar_select %p213, %s210, 8
          %s215 = smul.addr %s214, 4
          %s216 = smul.addr %s212, 36
          %s217 = sadd.s32 %s215, %s216
          %s218 = smul.addr %s217, 8
          %s219 = scalar_lea.vmem %s1, %s218
          %s220 = smul.u32 %s21, 8
          %s221 = sadd.s32 %s220, 8
        $region32: #{tpu_custom_call.1} parent=23 // pred_fallthru
          _
      $region24: #{tpu_custom_call.1} parent=5 // pred_fallthru
        _
      %p222 = scmp.le.s32.totalorder 1, %s13
      %p223 = scmp.lt.s32.totalorder %s13, 3
      %p224 = pnand %p222, %p223
      %p225 = pneg %p224
      // Predicated region
      $region33: #{tpu_custom_call.1} parent=5 // pred_check
        _
      $region34: #{tpu_custom_call.1} parent=5 // pred_check_branch
        %227 = sbr.rel (%p224) target = $region36
      $region35: #{tpu_custom_call.1} parent=5 // pred_region
        %s228 = ssub.s32 %s13, 1
        %s229 = smul.u32 8, %s23
        %s230 = ssub.s32 9, %s229
        %p231 = scmp.lt.s32.totalorder %s230, 8
        %s232 = scalar_select %p231, %s230, 8
        %s233 = smul.u32 128, %s232
        %s234 = smul.u32 %s233, 2
        %s235 = smul.u32 %s234, 2
        %p236 = scmp.lt.s32.totalorder %s22, 1
        %s237 = scalar_select %p236, %s22, 1
        %p238 = scmp.lt.s32.totalorder %s229, 8
        %s239 = scalar_select %p238, %s229, 8
        %s240 = smul.addr %s239, 4
        %s241 = smul.addr %s237, 36
        %s242 = sadd.s32 %s240, %s241
        %s243 = smul.addr %s242, 8
        %s244 = scalar_lea.vmem %s0, %s243
        %p245 = pneg %p53
        %p246 = pneg %p50
        %s247 = smul.u32 %s23, 8
        %s248 = sadd.s32 %s247, 8
        %p249 = scmp.lt.s32.totalorder %s22, 1
        %s250 = scalar_select %p249, %s22, 1
        %p251 = scmp.lt.s32.totalorder %s248, 8
        %s252 = scalar_select %p251, %s248, 8
        %s253 = smul.addr %s252, 4
        %s254 = smul.addr %s250, 36
        %s255 = sadd.s32 %s253, %s254
        %s256 = smul.addr %s255, 8
        %s257 = scalar_lea.vmem %s1, %s256
        %p258 = pneg %p85
        %p259 = pneg %p82
        %p260 = pneg %p106
        %p261 = pneg %p103
        %p262 = pneg %p127
        %p263 = pneg %p124
        %p264 = pneg %p155
        %p265 = pneg %p152
        %s266 = sand.u32 %s142, 1
        %s267 = scalar_lea.sflag [#allocation4], %s266
        %s268 = sand.u32 %s142, 1
        %s269 = smul.addr %s268, 8
        %s270 = scalar_lea.vmem [#allocation3], %s269
        %s271 = smul.u32 8, %s23
        %s272 = ssub.s32 9, %s271
        %p273 = scmp.lt.s32.totalorder %s272, 8
        %s274 = scalar_select %p273, %s272, 8
        %s275 = smul.u32 128, %s274
        %s276 = smul.u32 %s275, 2
        %s277 = smul.u32 %s276, 2
        %p278 = scmp.lt.s32.totalorder %s22, 1
        %s279 = scalar_select %p278, %s22, 1
        %p280 = scmp.lt.s32.totalorder %s271, 8
        %s281 = scalar_select %p280, %s271, 8
        %s282 = smul.addr %s281, 4
        %s283 = smul.addr %s279, 36
        %s284 = sadd.s32 %s282, %s283
        %s285 = smul.addr %s284, 8
        %s286 = scalar_lea.vmem %s0, %s285
        %s287 = smul.u32 8, %s23
        %s288 = ssub.s32 9, %s287
        %p289 = scmp.lt.s32.totalorder %s288, 8
        %s290 = scalar_select %p289, %s288, 8
        %s291 = smul.u32 128, %s290
        %s292 = smul.u32 %s291, 2
        %s293 = smul.u32 %s292, 2
        %s294 = smul.u32 %s23, 8
        %s295 = sadd.s32 %s294, 8
        %p296 = scmp.lt.s32.totalorder %s22, 1
        %s297 = scalar_select %p296, %s22, 1
        %p298 = scmp.lt.s32.totalorder %s295, 8
        %s299 = scalar_select %p298, %s295, 8
        %s300 = smul.addr %s299, 4
        %s301 = smul.addr %s297, 36
        %s302 = sadd.s32 %s300, %s301
        %s303 = smul.addr %s302, 8
        %s304 = scalar_lea.vmem %s1, %s303
        %s305 = smul.u32 %s23, 8
        %s306 = sadd.s32 %s305, 8
        %v307 = vld [vmem:[%s2] sm:$0xff]
        %v308 = vld [vmem:[%s286] sm:$0xff]
        %v309 = vld [vmem:[%s286 + $0x20] sm:$0xff]
        %v310 = vld [vmem:[%s286 + $0x40] sm:$0xff]
        %v311 = vld [vmem:[%s286 + $0x60] sm:$0xff]
        %v312 = vld [vmem:[%s286 + $0x80] sm:$0xff]
        %v313 = vld [vmem:[%s286 + $0xa0] sm:$0xff]
        %v314 = vld [vmem:[%s286 + $0xc0] sm:$0xff]
        %v315 = vld [vmem:[%s286 + $0xe0] sm:$0xff]
        %v316 = vld [vmem:[%s3] sm:$0x1]
        %v318 = vlaneseq
        %v319 = vshrl.u32 %v318, 7
        %v320 = vsub.s32 0, %v319
        %v321 = vrot.slane %v316, %v320
        %vm323 = vcmask 64512
        %v325 = vsel %vm323, %v308, 0
        %v328 = vsel %vm323, %v309, 0
        %v331 = vsel %vm323, %v310, 0
        %v334 = vsel %vm323, %v311, 0
        %v337 = vsel %vm323, %v312, 0
        %v340 = vsel %vm323, %v313, 0
        %v343 = vsel %vm323, %v314, 0
        %v346 = vsel %vm323, %v315, 0
        %348 = vmatprep.subr.mxu0 0.0
        %349 = vmatpush1.msra.mxu0 0.0
        %350 = vmatprep.subr.mxu0 0.0
        %351 = vmatpush1.msra.mxu0 0.0
        %352 = vmatprep.subr.mxu0 0.0
        %353 = vmatpush1.msra.mxu0 0.0
        %354 = vmatprep.subr.mxu0 0.0
        %355 = vmatpush1.msra.mxu0 0.0
        %356 = vmatprep.subr.mxu0 0.0
        %357 = vmatpush1.msra.mxu0 0.0
        %358 = vmatprep.subr.mxu0 0.0
        %359 = vmatpush1.msra.mxu0 0.0
        %360 = vmatprep.subr.mxu0 0.0
        %361 = vmatpush1.msra.mxu0 0.0
        %362 = vmatprep.subr.mxu0 0.0
        %363 = vmatpush1.msra.mxu0 0.0
        %364 = vmatprep.subr.mxu0 0.0
        %365 = vmatpush1.msra.mxu0 0.0
        %366 = vmatprep.subr.mxu0 0.0
        %367 = vmatpush1.msra.mxu0 0.0
        %368 = vmatprep.subr.mxu0 0.0
        %369 = vmatpush1.msra.mxu0 0.0
        %370 = vmatprep.subr.mxu0 0.0
        %371 = vmatpush1.msra.mxu0 0.0
        %372 = vmatprep.subr.mxu0 0.0
        %373 = vmatpush1.msra.mxu0 0.0
        %374 = vmatprep.subr.mxu0 0.0
        %375 = vmatpush1.msra.mxu0 0.0
        %376 = vmatprep.subr.mxu0 0.0
        %377 = vmatpush1.msra.mxu0 0.0
        %378 = vmatprep.subr.mxu0 0.0
        %379 = vmatpush1.msra.mxu0 %v307
        %380 = vmatprep.subr.mxu0 0.0
        %381 = vmatpush2.msra.mxu0 0.0
        %382 = vmatprep.subr.mxu0 0.0
        %383 = vmatpush2.msra.mxu0 0.0
        %384 = vmatprep.subr.mxu0 0.0
        %385 = vmatpush2.msra.mxu0 0.0
        %386 = vmatprep.subr.mxu0 0.0
        %387 = vmatpush2.msra.mxu0 0.0
        %388 = vmatprep.subr.mxu0 0.0
        %389 = vmatpush2.msra.mxu0 0.0
        %390 = vmatprep.subr.mxu0 0.0
        %391 = vmatpush2.msra.mxu0 0.0
        %392 = vmatprep.subr.mxu0 0.0
        %393 = vmatpush2.msra.mxu0 0.0
        %394 = vmatprep.subr.mxu0 0.0
        %395 = vmatpush2.msra.mxu0 0.0
        %396 = vmatprep.subr.mxu0 0.0
        %397 = vmatpush2.msra.mxu0 0.0
        %398 = vmatprep.subr.mxu0 0.0
        %399 = vmatpush2.msra.mxu0 0.0
        %400 = vmatprep.subr.mxu0 0.0
        %401 = vmatpush2.msra.mxu0 0.0
        %402 = vmatprep.subr.mxu0 0.0
        %403 = vmatpush2.msra.mxu0 0.0
        %404 = vmatprep.subr.mxu0 0.0
        %405 = vmatpush2.msra.mxu0 0.0
        %406 = vmatprep.subr.mxu0 0.0
        %407 = vmatpush2.msra.mxu0 0.0
        %408 = vmatprep.subr.mxu0 0.0
        %409 = vmatpush2.msra.mxu0 0.0
        %410 = vmatprep.subr.mxu0 0.0
        %411 = vmatpush2.msra.mxu0 0.0
        %412 = vmatprep.mubr.f32.mxu0 0.0
        %413 = vmatmul.mubr.f32.gmra.mxu0 %v325
        %v414 = vpop.f32.mrf.mxu0
        %v415 = vadd.f32 %v321, %v414
        %v416 = vpop.f32.mrf.mxu0
        %417 = vmatprep.mubr.f32.mxu0 0.0
        %418 = vmatmul.mubr.f32.gmra.mxu0 %v328
        %v419 = vpop.f32.mrf.mxu0
        %v420 = vadd.f32 %v321, %v419
        %v421 = vpop.f32.mrf.mxu0
        %422 = vmatprep.mubr.f32.mxu0 0.0
        %423 = vmatmul.mubr.f32.gmra.mxu0 %v331
        %v424 = vpop.f32.mrf.mxu0
        %v425 = vadd.f32 %v321, %v424
        %v426 = vpop.f32.mrf.mxu0
        %427 = vmatprep.mubr.f32.mxu0 0.0
        %428 = vmatmul.mubr.f32.gmra.mxu0 %v334
        %v429 = vpop.f32.mrf.mxu0
        %v430 = vadd.f32 %v321, %v429
        %v431 = vpop.f32.mrf.mxu0
        %432 = vmatprep.mubr.f32.mxu0 0.0
        %433 = vmatmul.mubr.f32.gmra.mxu0 %v337
        %v434 = vpop.f32.mrf.mxu0
        %v435 = vadd.f32 %v321, %v434
        %v436 = vpop.f32.mrf.mxu0
        %437 = vmatprep.mubr.f32.mxu0 0.0
        %438 = vmatmul.mubr.f32.gmra.mxu0 %v340
        %v439 = vpop.f32.mrf.mxu0
        %v440 = vadd.f32 %v321, %v439
        %v441 = vpop.f32.mrf.mxu0
        %442 = vmatprep.mubr.f32.mxu0 0.0
        %443 = vmatmul.mubr.f32.gmra.mxu0 %v343
        %v444 = vpop.f32.mrf.mxu0
        %v445 = vadd.f32 %v321, %v444
        %v446 = vpop.f32.mrf.mxu0
        %447 = vmatprep.mubr.f32.mxu0 0.0
        %448 = vmatmul.mubr.f32.gmra.mxu0 %v346
        %v449 = vpop.f32.mrf.mxu0
        %v450 = vadd.f32 %v321, %v449
        %v451 = vpop.f32.mrf.mxu0
        %452 = vdwg.mxu0
        %453 = vst [vmem:[#allocation2] sm:$0xff] %v415
        %454 = vst [vmem:[#allocation2 + $0x8] sm:$0xff] %v420
        %455 = vst [vmem:[#allocation2 + $0x10] sm:$0xff] %v425
        %456 = vst [vmem:[#allocation2 + $0x18] sm:$0xff] %v430
        %457 = vst [vmem:[#allocation2 + $0x20] sm:$0xff] %v435
        %458 = vst [vmem:[#allocation2 + $0x28] sm:$0xff] %v440
        %459 = vst [vmem:[#allocation2 + $0x30] sm:$0xff] %v445
        %460 = vst [vmem:[#allocation2 + $0x38] sm:$0xff] %v450
        %s461 = scalar_lea.vmem %s2, 8
        %v462 = vld [vmem:[%s461] sm:$0xff]
        %v463 = vld [vmem:[%s286 + $0x1] sm:$0xff]
        %v464 = vld [vmem:[%s286 + $0x21] sm:$0xff]
        %v465 = vld [vmem:[%s286 + $0x41] sm:$0xff]
        %v466 = vld [vmem:[%s286 + $0x61] sm:$0xff]
        %v467 = vld [vmem:[%s286 + $0x81] sm:$0xff]
        %v468 = vld [vmem:[%s286 + $0xa1] sm:$0xff]
        %v469 = vld [vmem:[%s286 + $0xc1] sm:$0xff]
        %v470 = vld [vmem:[%s286 + $0xe1] sm:$0xff]
        %v472 = vsel %vm323, %v463, 0
        %v475 = vsel %vm323, %v464, 0
        %v478 = vsel %vm323, %v465, 0
        %v481 = vsel %vm323, %v466, 0
        %v484 = vsel %vm323, %v467, 0
        %v487 = vsel %vm323, %v468, 0
        %v490 = vsel %vm323, %v469, 0
        %v493 = vsel %vm323, %v470, 0
        %495 = vmatprep.subr.mxu0 0.0
        %496 = vmatpush1.msra.mxu0 0.0
        %497 = vmatprep.subr.mxu0 0.0
        %498 = vmatpush1.msra.mxu0 0.0
        %499 = vmatprep.subr.mxu0 0.0
        %500 = vmatpush1.msra.mxu0 0.0
        %501 = vmatprep.subr.mxu0 0.0
        %502 = vmatpush1.msra.mxu0 0.0
        %503 = vmatprep.subr.mxu0 0.0
        %504 = vmatpush1.msra.mxu0 0.0
        %505 = vmatprep.subr.mxu0 0.0
        %506 = vmatpush1.msra.mxu0 0.0
        %507 = vmatprep.subr.mxu0 0.0
        %508 = vmatpush1.msra.mxu0 0.0
        %509 = vmatprep.subr.mxu0 0.0
        %510 = vmatpush1.msra.mxu0 0.0
        %511 = vmatprep.subr.mxu0 0.0
        %512 = vmatpush1.msra.mxu0 0.0
        %513 = vmatprep.subr.mxu0 0.0
        %514 = vmatpush1.msra.mxu0 0.0
        %515 = vmatprep.subr.mxu0 0.0
        %516 = vmatpush1.msra.mxu0 0.0
        %517 = vmatprep.subr.mxu0 0.0
        %518 = vmatpush1.msra.mxu0 0.0
        %519 = vmatprep.subr.mxu0 0.0
        %520 = vmatpush1.msra.mxu0 0.0
        %521 = vmatprep.subr.mxu0 0.0
        %522 = vmatpush1.msra.mxu0 0.0
        %523 = vmatprep.subr.mxu0 0.0
        %524 = vmatpush1.msra.mxu0 0.0
        %525 = vmatprep.subr.mxu0 0.0
        %526 = vmatpush1.msra.mxu0 %v462
        %527 = vmatprep.subr.mxu0 0.0
        %528 = vmatpush2.msra.mxu0 0.0
        %529 = vmatprep.subr.mxu0 0.0
        %530 = vmatpush2.msra.mxu0 0.0
        %531 = vmatprep.subr.mxu0 0.0
        %532 = vmatpush2.msra.mxu0 0.0
        %533 = vmatprep.subr.mxu0 0.0
        %534 = vmatpush2.msra.mxu0 0.0
        %535 = vmatprep.subr.mxu0 0.0
        %536 = vmatpush2.msra.mxu0 0.0
        %537 = vmatprep.subr.mxu0 0.0
        %538 = vmatpush2.msra.mxu0 0.0
        %539 = vmatprep.subr.mxu0 0.0
        %540 = vmatpush2.msra.mxu0 0.0
        %541 = vmatprep.subr.mxu0 0.0
        %542 = vmatpush2.msra.mxu0 0.0
        %543 = vmatprep.subr.mxu0 0.0
        %544 = vmatpush2.msra.mxu0 0.0
        %545 = vmatprep.subr.mxu0 0.0
        %546 = vmatpush2.msra.mxu0 0.0
        %547 = vmatprep.subr.mxu0 0.0
        %548 = vmatpush2.msra.mxu0 0.0
        %549 = vmatprep.subr.mxu0 0.0
        %550 = vmatpush2.msra.mxu0 0.0
        %551 = vmatprep.subr.mxu0 0.0
        %552 = vmatpush2.msra.mxu0 0.0
        %553 = vmatprep.subr.mxu0 0.0
        %554 = vmatpush2.msra.mxu0 0.0
        %555 = vmatprep.subr.mxu0 0.0
        %556 = vmatpush2.msra.mxu0 0.0
        %557 = vmatprep.subr.mxu0 0.0
        %558 = vmatpush2.msra.mxu0 0.0
        %559 = vmatprep.mubr.f32.mxu0 0.0
        %560 = vmatmul.mubr.f32.gmra.mxu0 %v472
        %v561 = vpop.f32.mrf.mxu0
        %v562 = vadd.f32 0.0, %v561
        %v563 = vpop.f32.mrf.mxu0
        %564 = vmatprep.mubr.f32.mxu0 0.0
        %565 = vmatmul.mubr.f32.gmra.mxu0 %v475
        %v566 = vpop.f32.mrf.mxu0
        %v567 = vadd.f32 0.0, %v566
        %v568 = vpop.f32.mrf.mxu0
        %569 = vmatprep.mubr.f32.mxu0 0.0
        %570 = vmatmul.mubr.f32.gmra.mxu0 %v478
        %v571 = vpop.f32.mrf.mxu0
        %v572 = vadd.f32 0.0, %v571
        %v573 = vpop.f32.mrf.mxu0
        %574 = vmatprep.mubr.f32.mxu0 0.0
        %575 = vmatmul.mubr.f32.gmra.mxu0 %v481
        %v576 = vpop.f32.mrf.mxu0
        %v577 = vadd.f32 0.0, %v576
        %v578 = vpop.f32.mrf.mxu0
        %579 = vmatprep.mubr.f32.mxu0 0.0
        %580 = vmatmul.mubr.f32.gmra.mxu0 %v484
        %v581 = vpop.f32.mrf.mxu0
        %v582 = vadd.f32 0.0, %v581
        %v583 = vpop.f32.mrf.mxu0
        %584 = vmatprep.mubr.f32.mxu0 0.0
        %585 = vmatmul.mubr.f32.gmra.mxu0 %v487
        %v586 = vpop.f32.mrf.mxu0
        %v587 = vadd.f32 0.0, %v586
        %v588 = vpop.f32.mrf.mxu0
        %589 = vmatprep.mubr.f32.mxu0 0.0
        %590 = vmatmul.mubr.f32.gmra.mxu0 %v490
        %v591 = vpop.f32.mrf.mxu0
        %v592 = vadd.f32 0.0, %v591
        %v593 = vpop.f32.mrf.mxu0
        %594 = vmatprep.mubr.f32.mxu0 0.0
        %595 = vmatmul.mubr.f32.gmra.mxu0 %v493
        %v596 = vpop.f32.mrf.mxu0
        %v597 = vadd.f32 0.0, %v596
        %v598 = vpop.f32.mrf.mxu0
        %599 = vdwg.mxu0
        %v600 = vld [vmem:[#allocation2] sm:$0xff]
        %v601 = vld [vmem:[#allocation2 + $0x8] sm:$0xff]
        %v602 = vld [vmem:[#allocation2 + $0x10] sm:$0xff]
        %v603 = vld [vmem:[#allocation2 + $0x18] sm:$0xff]
        %v604 = vld [vmem:[#allocation2 + $0x20] sm:$0xff]
        %v605 = vld [vmem:[#allocation2 + $0x28] sm:$0xff]
        %v606 = vld [vmem:[#allocation2 + $0x30] sm:$0xff]
        %v607 = vld [vmem:[#allocation2 + $0x38] sm:$0xff]
        %v608 = vadd.f32 %v600, %v562
        %v609 = vadd.f32 %v601, %v567
        %v610 = vadd.f32 %v602, %v572
        %v611 = vadd.f32 %v603, %v577
        %v612 = vadd.f32 %v604, %v582
        %v613 = vadd.f32 %v605, %v587
        %v614 = vadd.f32 %v606, %v592
        %v615 = vadd.f32 %v607, %v597
        %616 = vst [vmem:[#allocation2] sm:$0xff] %v608
        %617 = vst [vmem:[#allocation2 + $0x8] sm:$0xff] %v609
        %618 = vst [vmem:[#allocation2 + $0x10] sm:$0xff] %v610
        %619 = vst [vmem:[#allocation2 + $0x18] sm:$0xff] %v611
        %620 = vst [vmem:[#allocation2 + $0x20] sm:$0xff] %v612
        %621 = vst [vmem:[#allocation2 + $0x28] sm:$0xff] %v613
        %622 = vst [vmem:[#allocation2 + $0x30] sm:$0xff] %v614
        %623 = vst [vmem:[#allocation2 + $0x38] sm:$0xff] %v615
        %s624 = scalar_lea.vmem %s2, 16
        %v625 = vld [vmem:[%s624] sm:$0xff]
        %s626 = scalar_lea.vmem %s286, 16
        %v627 = vld [vmem:[%s626] sm:$0xff]
        %v628 = vld [vmem:[%s626 + $0x20] sm:$0xff]
        %v629 = vld [vmem:[%s626 + $0x40] sm:$0xff]
        %v630 = vld [vmem:[%s626 + $0x60] sm:$0xff]
        %v631 = vld [vmem:[%s626 + $0x80] sm:$0xff]
        %v632 = vld [vmem:[%s626 + $0xa0] sm:$0xff]
        %v633 = vld [vmem:[%s626 + $0xc0] sm:$0xff]
        %v634 = vld [vmem:[%s626 + $0xe0] sm:$0xff]
        %v636 = vsel %vm323, %v627, 0
        %v639 = vsel %vm323, %v628, 0
        %v642 = vsel %vm323, %v629, 0
        %v645 = vsel %vm323, %v630, 0
        %v648 = vsel %vm323, %v631, 0
        %v651 = vsel %vm323, %v632, 0
        %v654 = vsel %vm323, %v633, 0
        %v657 = vsel %vm323, %v634, 0
        %659 = vmatprep.subr.mxu0 0.0
        %660 = vmatpush1.msra.mxu0 0.0
        %661 = vmatprep.subr.mxu0 0.0
        %662 = vmatpush1.msra.mxu0 0.0
        %663 = vmatprep.subr.mxu0 0.0
        %664 = vmatpush1.msra.mxu0 0.0
        %665 = vmatprep.subr.mxu0 0.0
        %666 = vmatpush1.msra.mxu0 0.0
        %667 = vmatprep.subr.mxu0 0.0
        %668 = vmatpush1.msra.mxu0 0.0
        %669 = vmatprep.subr.mxu0 0.0
        %670 = vmatpush1.msra.mxu0 0.0
        %671 = vmatprep.subr.mxu0 0.0
        %672 = vmatpush1.msra.mxu0 0.0
        %673 = vmatprep.subr.mxu0 0.0
        %674 = vmatpush1.msra.mxu0 0.0
        %675 = vmatprep.subr.mxu0 0.0
        %676 = vmatpush1.msra.mxu0 0.0
        %677 = vmatprep.subr.mxu0 0.0
        %678 = vmatpush1.msra.mxu0 0.0
        %679 = vmatprep.subr.mxu0 0.0
        %680 = vmatpush1.msra.mxu0 0.0
        %681 = vmatprep.subr.mxu0 0.0
        %682 = vmatpush1.msra.mxu0 0.0
        %683 = vmatprep.subr.mxu0 0.0
        %684 = vmatpush1.msra.mxu0 0.0
        %685 = vmatprep.subr.mxu0 0.0
        %686 = vmatpush1.msra.mxu0 0.0
        %687 = vmatprep.subr.mxu0 0.0
        %688 = vmatpush1.msra.mxu0 0.0
        %689 = vmatprep.subr.mxu0 0.0
        %690 = vmatpush1.msra.mxu0 %v625
        %691 = vmatprep.subr.mxu0 0.0
        %692 = vmatpush2.msra.mxu0 0.0
        %693 = vmatprep.subr.mxu0 0.0
        %694 = vmatpush2.msra.mxu0 0.0
        %695 = vmatprep.subr.mxu0 0.0
        %696 = vmatpush2.msra.mxu0 0.0
        %697 = vmatprep.subr.mxu0 0.0
        %698 = vmatpush2.msra.mxu0 0.0
        %699 = vmatprep.subr.mxu0 0.0
        %700 = vmatpush2.msra.mxu0 0.0
        %701 = vmatprep.subr.mxu0 0.0
        %702 = vmatpush2.msra.mxu0 0.0
        %703 = vmatprep.subr.mxu0 0.0
        %704 = vmatpush2.msra.mxu0 0.0
        %705 = vmatprep.subr.mxu0 0.0
        %706 = vmatpush2.msra.mxu0 0.0
        %707 = vmatprep.subr.mxu0 0.0
        %708 = vmatpush2.msra.mxu0 0.0
        %709 = vmatprep.subr.mxu0 0.0
        %710 = vmatpush2.msra.mxu0 0.0
        %711 = vmatprep.subr.mxu0 0.0
        %712 = vmatpush2.msra.mxu0 0.0
        %713 = vmatprep.subr.mxu0 0.0
        %714 = vmatpush2.msra.mxu0 0.0
        %715 = vmatprep.subr.mxu0 0.0
        %716 = vmatpush2.msra.mxu0 0.0
        %717 = vmatprep.subr.mxu0 0.0
        %718 = vmatpush2.msra.mxu0 0.0
        %719 = vmatprep.subr.mxu0 0.0
        %720 = vmatpush2.msra.mxu0 0.0
        %721 = vmatprep.subr.mxu0 0.0
        %722 = vmatpush2.msra.mxu0 0.0
        %723 = vmatprep.mubr.f32.mxu0 0.0
        %724 = vmatmul.mubr.f32.gmra.mxu0 %v636
        %v725 = vpop.f32.mrf.mxu0
        %v726 = vadd.f32 0.0, %v725
        %v727 = vpop.f32.mrf.mxu0
        %728 = vmatprep.mubr.f32.mxu0 0.0
        %729 = vmatmul.mubr.f32.gmra.mxu0 %v639
        %v730 = vpop.f32.mrf.mxu0
        %v731 = vadd.f32 0.0, %v730
        %v732 = vpop.f32.mrf.mxu0
        %733 = vmatprep.mubr.f32.mxu0 0.0
        %734 = vmatmul.mubr.f32.gmra.mxu0 %v642
        %v735 = vpop.f32.mrf.mxu0
        %v736 = vadd.f32 0.0, %v735
        %v737 = vpop.f32.mrf.mxu0
        %738 = vmatprep.mubr.f32.mxu0 0.0
        %739 = vmatmul.mubr.f32.gmra.mxu0 %v645
        %v740 = vpop.f32.mrf.mxu0
        %v741 = vadd.f32 0.0, %v740
        %v742 = vpop.f32.mrf.mxu0
        %743 = vmatprep.mubr.f32.mxu0 0.0
        %744 = vmatmul.mubr.f32.gmra.mxu0 %v648
        %v745 = vpop.f32.mrf.mxu0
        %v746 = vadd.f32 0.0, %v745
        %v747 = vpop.f32.mrf.mxu0
        %748 = vmatprep.mubr.f32.mxu0 0.0
        %749 = vmatmul.mubr.f32.gmra.mxu0 %v651
        %v750 = vpop.f32.mrf.mxu0
        %v751 = vadd.f32 0.0, %v750
        %v752 = vpop.f32.mrf.mxu0
        %753 = vmatprep.mubr.f32.mxu0 0.0
        %754 = vmatmul.mubr.f32.gmra.mxu0 %v654
        %v755 = vpop.f32.mrf.mxu0
        %v756 = vadd.f32 0.0, %v755
        %v757 = vpop.f32.mrf.mxu0
        %758 = vmatprep.mubr.f32.mxu0 0.0
        %759 = vmatmul.mubr.f32.gmra.mxu0 %v657
        %v760 = vpop.f32.mrf.mxu0
        %v761 = vadd.f32 0.0, %v760
        %v762 = vpop.f32.mrf.mxu0
        %763 = vdwg.mxu0
        %v764 = vld [vmem:[#allocation2] sm:$0xff]
        %v765 = vld [vmem:[#allocation2 + $0x8] sm:$0xff]
        %v766 = vld [vmem:[#allocation2 + $0x10] sm:$0xff]
        %v767 = vld [vmem:[#allocation2 + $0x18] sm:$0xff]
        %v768 = vld [vmem:[#allocation2 + $0x20] sm:$0xff]
        %v769 = vld [vmem:[#allocation2 + $0x28] sm:$0xff]
        %v770 = vld [vmem:[#allocation2 + $0x30] sm:$0xff]
        %v771 = vld [vmem:[#allocation2 + $0x38] sm:$0xff]
        %v772 = vadd.f32 %v764, %v726
        %v773 = vadd.f32 %v765, %v731
        %v774 = vadd.f32 %v766, %v736
        %v775 = vadd.f32 %v767, %v741
        %v776 = vadd.f32 %v768, %v746
        %v777 = vadd.f32 %v769, %v751
        %v778 = vadd.f32 %v770, %v756
        %v779 = vadd.f32 %v771, %v761
        %780 = vst [vmem:[#allocation2] sm:$0xff] %v772
        %781 = vst [vmem:[#allocation2 + $0x8] sm:$0xff] %v773
        %782 = vst [vmem:[#allocation2 + $0x10] sm:$0xff] %v774
        %783 = vst [vmem:[#allocation2 + $0x18] sm:$0xff] %v775
        %784 = vst [vmem:[#allocation2 + $0x20] sm:$0xff] %v776
        %785 = vst [vmem:[#allocation2 + $0x28] sm:$0xff] %v777
        %786 = vst [vmem:[#allocation2 + $0x30] sm:$0xff] %v778
        %787 = vst [vmem:[#allocation2 + $0x38] sm:$0xff] %v779
        %s788 = scalar_lea.vmem %s2, 24
        %v789 = vld [vmem:[%s788] sm:$0xff]
        %v790 = vld [vmem:[%s626 + $0x1] sm:$0xff]
        %v791 = vld [vmem:[%s626 + $0x21] sm:$0xff]
        %v792 = vld [vmem:[%s626 + $0x41] sm:$0xff]
        %v793 = vld [vmem:[%s626 + $0x61] sm:$0xff]
        %v794 = vld [vmem:[%s626 + $0x81] sm:$0xff]
        %v795 = vld [vmem:[%s626 + $0xa1] sm:$0xff]
        %v796 = vld [vmem:[%s626 + $0xc1] sm:$0xff]
        %v797 = vld [vmem:[%s626 + $0xe1] sm:$0xff]
        %v799 = vsel %vm323, %v790, 0
        %v802 = vsel %vm323, %v791, 0
        %v805 = vsel %vm323, %v792, 0
        %v808 = vsel %vm323, %v793, 0
        %v811 = vsel %vm323, %v794, 0
        %v814 = vsel %vm323, %v795, 0
        %v817 = vsel %vm323, %v796, 0
        %v820 = vsel %vm323, %v797, 0
        %822 = vmatprep.subr.mxu0 0.0
        %823 = vmatpush1.msra.mxu0 0.0
        %824 = vmatprep.subr.mxu0 0.0
        %825 = vmatpush1.msra.mxu0 0.0
        %826 = vmatprep.subr.mxu0 0.0
        %827 = vmatpush1.msra.mxu0 0.0
        %828 = vmatprep.subr.mxu0 0.0
        %829 = vmatpush1.msra.mxu0 0.0
        %830 = vmatprep.subr.mxu0 0.0
        %831 = vmatpush1.msra.mxu0 0.0
        %832 = vmatprep.subr.mxu0 0.0
        %833 = vmatpush1.msra.mxu0 0.0
        %834 = vmatprep.subr.mxu0 0.0
        %835 = vmatpush1.msra.mxu0 0.0
        %836 = vmatprep.subr.mxu0 0.0
        %837 = vmatpush1.msra.mxu0 0.0
        %838 = vmatprep.subr.mxu0 0.0
        %839 = vmatpush1.msra.mxu0 0.0
        %840 = vmatprep.subr.mxu0 0.0
        %841 = vmatpush1.msra.mxu0 0.0
        %842 = vmatprep.subr.mxu0 0.0
        %843 = vmatpush1.msra.mxu0 0.0
        %844 = vmatprep.subr.mxu0 0.0
        %845 = vmatpush1.msra.mxu0 0.0
        %846 = vmatprep.subr.mxu0 0.0
        %847 = vmatpush1.msra.mxu0 0.0
        %848 = vmatprep.subr.mxu0 0.0
        %849 = vmatpush1.msra.mxu0 0.0
        %850 = vmatprep.subr.mxu0 0.0
        %851 = vmatpush1.msra.mxu0 0.0
        %852 = vmatprep.subr.mxu0 0.0
        %853 = vmatpush1.msra.mxu0 %v789
        %854 = vmatprep.subr.mxu0 0.0
        %855 = vmatpush2.msra.mxu0 0.0
        %856 = vmatprep.subr.mxu0 0.0
        %857 = vmatpush2.msra.mxu0 0.0
        %858 = vmatprep.subr.mxu0 0.0
        %859 = vmatpush2.msra.mxu0 0.0
        %860 = vmatprep.subr.mxu0 0.0
        %861 = vmatpush2.msra.mxu0 0.0
        %862 = vmatprep.subr.mxu0 0.0
        %863 = vmatpush2.msra.mxu0 0.0
        %864 = vmatprep.subr.mxu0 0.0
        %865 = vmatpush2.msra.mxu0 0.0
        %866 = vmatprep.subr.mxu0 0.0
        %867 = vmatpush2.msra.mxu0 0.0
        %868 = vmatprep.subr.mxu0 0.0
        %869 = vmatpush2.msra.mxu0 0.0
        %870 = vmatprep.subr.mxu0 0.0
        %871 = vmatpush2.msra.mxu0 0.0
        %872 = vmatprep.subr.mxu0 0.0
        %873 = vmatpush2.msra.mxu0 0.0
        %874 = vmatprep.subr.mxu0 0.0
        %875 = vmatpush2.msra.mxu0 0.0
        %876 = vmatprep.subr.mxu0 0.0
        %877 = vmatpush2.msra.mxu0 0.0
        %878 = vmatprep.subr.mxu0 0.0
        %879 = vmatpush2.msra.mxu0 0.0
        %880 = vmatprep.subr.mxu0 0.0
        %881 = vmatpush2.msra.mxu0 0.0
        %882 = vmatprep.subr.mxu0 0.0
        %883 = vmatpush2.msra.mxu0 0.0
        %884 = vmatprep.subr.mxu0 0.0
        %885 = vmatpush2.msra.mxu0 0.0
        %886 = vmatprep.mubr.f32.mxu0 0.0
        %887 = vmatmul.mubr.f32.gmra.mxu0 %v799
        %v888 = vpop.f32.mrf.mxu0
        %v889 = vadd.f32 0.0, %v888
        %v890 = vpop.f32.mrf.mxu0
        %891 = vmatprep.mubr.f32.mxu0 0.0
        %892 = vmatmul.mubr.f32.gmra.mxu0 %v802
        %v893 = vpop.f32.mrf.mxu0
        %v894 = vadd.f32 0.0, %v893
        %v895 = vpop.f32.mrf.mxu0
        %896 = vmatprep.mubr.f32.mxu0 0.0
        %897 = vmatmul.mubr.f32.gmra.mxu0 %v805
        %v898 = vpop.f32.mrf.mxu0
        %v899 = vadd.f32 0.0, %v898
        %v900 = vpop.f32.mrf.mxu0
        %901 = vmatprep.mubr.f32.mxu0 0.0
        %902 = vmatmul.mubr.f32.gmra.mxu0 %v808
        %v903 = vpop.f32.mrf.mxu0
        %v904 = vadd.f32 0.0, %v903
        %v905 = vpop.f32.mrf.mxu0
        %906 = vmatprep.mubr.f32.mxu0 0.0
        %907 = vmatmul.mubr.f32.gmra.mxu0 %v811
        %v908 = vpop.f32.mrf.mxu0
        %v909 = vadd.f32 0.0, %v908
        %v910 = vpop.f32.mrf.mxu0
        %911 = vmatprep.mubr.f32.mxu0 0.0
        %912 = vmatmul.mubr.f32.gmra.mxu0 %v814
        %v913 = vpop.f32.mrf.mxu0
        %v914 = vadd.f32 0.0, %v913
        %v915 = vpop.f32.mrf.mxu0
        %916 = vmatprep.mubr.f32.mxu0 0.0
        %917 = vmatmul.mubr.f32.gmra.mxu0 %v817
        %v918 = vpop.f32.mrf.mxu0
        %v919 = vadd.f32 0.0, %v918
        %v920 = vpop.f32.mrf.mxu0
        %921 = vmatprep.mubr.f32.mxu0 0.0
        %922 = vmatmul.mubr.f32.gmra.mxu0 %v820
        %v923 = vpop.f32.mrf.mxu0
        %v924 = vadd.f32 0.0, %v923
        %v925 = vpop.f32.mrf.mxu0
        %926 = vdwg.mxu0
        %v927 = vld [vmem:[#allocation2] sm:$0xff]
        %v928 = vld [vmem:[#allocation2 + $0x8] sm:$0xff]
        %v929 = vld [vmem:[#allocation2 + $0x10] sm:$0xff]
        %v930 = vld [vmem:[#allocation2 + $0x18] sm:$0xff]
        %v931 = vld [vmem:[#allocation2 + $0x20] sm:$0xff]
        %v932 = vld [vmem:[#allocation2 + $0x28] sm:$0xff]
        %v933 = vld [vmem:[#allocation2 + $0x30] sm:$0xff]
        %v934 = vld [vmem:[#allocation2 + $0x38] sm:$0xff]
        %v935 = vadd.f32 %v927, %v889
        %v936 = vadd.f32 %v928, %v894
        %v937 = vadd.f32 %v929, %v899
        %v938 = vadd.f32 %v930, %v904
        %v939 = vadd.f32 %v931, %v909
        %v940 = vadd.f32 %v932, %v914
        %v941 = vadd.f32 %v933, %v919
        %v942 = vadd.f32 %v934, %v924
        %943 = vst [vmem:[#allocation2] sm:$0xff] %v935
        %944 = vst [vmem:[#allocation2 + $0x8] sm:$0xff] %v936
        %945 = vst [vmem:[#allocation2 + $0x10] sm:$0xff] %v937
        %946 = vst [vmem:[#allocation2 + $0x18] sm:$0xff] %v938
        %947 = vst [vmem:[#allocation2 + $0x20] sm:$0xff] %v939
        %948 = vst [vmem:[#allocation2 + $0x28] sm:$0xff] %v940
        %949 = vst [vmem:[#allocation2 + $0x30] sm:$0xff] %v941
        %950 = vst [vmem:[#allocation2 + $0x38] sm:$0xff] %v942
        %s951 = scalar_lea.vmem %s2, 32
        %v952 = vld [vmem:[%s951] sm:$0xff]
        %s953 = scalar_lea.vmem %s286, 32
        %v954 = vld [vmem:[%s953] sm:$0xff]
        %v955 = vld [vmem:[%s953 + $0x20] sm:$0xff]
        %v956 = vld [vmem:[%s953 + $0x40] sm:$0xff]
        %v957 = vld [vmem:[%s953 + $0x60] sm:$0xff]
        %v958 = vld [vmem:[%s953 + $0x80] sm:$0xff]
        %v959 = vld [vmem:[%s953 + $0xa0] sm:$0xff]
        %v960 = vld [vmem:[%s953 + $0xc0] sm:$0xff]
        %v961 = vld [vmem:[#allocation2] sm:$0xff]
        %v962 = vld [vmem:[#allocation2 + $0x8] sm:$0xff]
        %v963 = vld [vmem:[#allocation2 + $0x10] sm:$0xff]
        %v964 = vld [vmem:[#allocation2 + $0x18] sm:$0xff]
        %v965 = vld [vmem:[#allocation2 + $0x20] sm:$0xff]
        %v966 = vld [vmem:[#allocation2 + $0x28] sm:$0xff]
        %v967 = vld [vmem:[#allocation2 + $0x30] sm:$0xff]
        %v969 = vsel %vm323, %v954, 0
        %v972 = vsel %vm323, %v955, 0
        %v975 = vsel %vm323, %v956, 0
        %v978 = vsel %vm323, %v957, 0
        %v981 = vsel %vm323, %v958, 0
        %v984 = vsel %vm323, %v959, 0
        %v987 = vsel %vm323, %v960, 0
        %989 = vmatprep.subr.mxu0 0.0
        %990 = vmatpush1.msra.mxu0 0.0
        %991 = vmatprep.subr.mxu0 0.0
        %992 = vmatpush1.msra.mxu0 0.0
        %993 = vmatprep.subr.mxu0 0.0
        %994 = vmatpush1.msra.mxu0 0.0
        %995 = vmatprep.subr.mxu0 0.0
        %996 = vmatpush1.msra.mxu0 0.0
        %997 = vmatprep.subr.mxu0 0.0
        %998 = vmatpush1.msra.mxu0 0.0
        %999 = vmatprep.subr.mxu0 0.0
        %1000 = vmatpush1.msra.mxu0 0.0
        %1001 = vmatprep.subr.mxu0 0.0
        %1002 = vmatpush1.msra.mxu0 0.0
        %1003 = vmatprep.subr.mxu0 0.0
        %1004 = vmatpush1.msra.mxu0 0.0
        %1005 = vmatprep.subr.mxu0 0.0
        %1006 = vmatpush1.msra.mxu0 0.0
        %1007 = vmatprep.subr.mxu0 0.0
        %1008 = vmatpush1.msra.mxu0 0.0
        %1009 = vmatprep.subr.mxu0 0.0
        %1010 = vmatpush1.msra.mxu0 0.0
        %1011 = vmatprep.subr.mxu0 0.0
        %1012 = vmatpush1.msra.mxu0 0.0
        %1013 = vmatprep.subr.mxu0 0.0
        %1014 = vmatpush1.msra.mxu0 0.0
        %1015 = vmatprep.subr.mxu0 0.0
        %1016 = vmatpush1.msra.mxu0 0.0
        %1017 = vmatprep.subr.mxu0 0.0
        %1018 = vmatpush1.msra.mxu0 0.0
        %1019 = vmatprep.subr.mxu0 0.0
        %1020 = vmatpush1.msra.mxu0 %v952
        %1021 = vmatprep.subr.mxu0 0.0
        %1022 = vmatpush2.msra.mxu0 0.0
        %1023 = vmatprep.subr.mxu0 0.0
        %1024 = vmatpush2.msra.mxu0 0.0
        %1025 = vmatprep.subr.mxu0 0.0
        %1026 = vmatpush2.msra.mxu0 0.0
        %1027 = vmatprep.subr.mxu0 0.0
        %1028 = vmatpush2.msra.mxu0 0.0
        %1029 = vmatprep.subr.mxu0 0.0
        %1030 = vmatpush2.msra.mxu0 0.0
        %1031 = vmatprep.subr.mxu0 0.0
        %1032 = vmatpush2.msra.mxu0 0.0
        %1033 = vmatprep.subr.mxu0 0.0
        %1034 = vmatpush2.msra.mxu0 0.0
        %1035 = vmatprep.subr.mxu0 0.0
        %1036 = vmatpush2.msra.mxu0 0.0
        %1037 = vmatprep.subr.mxu0 0.0
        %1038 = vmatpush2.msra.mxu0 0.0
        %1039 = vmatprep.subr.mxu0 0.0
        %1040 = vmatpush2.msra.mxu0 0.0
        %1041 = vmatprep.subr.mxu0 0.0
        %1042 = vmatpush2.msra.mxu0 0.0
        %1043 = vmatprep.subr.mxu0 0.0
        %1044 = vmatpush2.msra.mxu0 0.0
        %1045 = vmatprep.subr.mxu0 0.0
        %1046 = vmatpush2.msra.mxu0 0.0
        %1047 = vmatprep.subr.mxu0 0.0
        %1048 = vmatpush2.msra.mxu0 0.0
        %1049 = vmatprep.subr.mxu0 0.0
        %1050 = vmatpush2.msra.mxu0 0.0
        %1051 = vmatprep.subr.mxu0 0.0
        %1052 = vmatpush2.msra.mxu0 0.0
        %1053 = vmatprep.mubr.f32.mxu0 0.0
        %1054 = vmatmul.mubr.f32.gmra.mxu0 %v969
        %v1055 = vpop.f32.mrf.mxu0
        %v1056 = vadd.f32 0.0, %v1055
        %v1057 = vpop.f32.mrf.mxu0
        %1058 = vmatprep.mubr.f32.mxu0 0.0
        %1059 = vmatmul.mubr.f32.gmra.mxu0 %v972
        %v1060 = vpop.f32.mrf.mxu0
        %v1061 = vadd.f32 0.0, %v1060
        %v1062 = vpop.f32.mrf.mxu0
        %1063 = vmatprep.mubr.f32.mxu0 0.0
        %1064 = vmatmul.mubr.f32.gmra.mxu0 %v975
        %v1065 = vpop.f32.mrf.mxu0
        %v1066 = vadd.f32 0.0, %v1065
        %v1067 = vpop.f32.mrf.mxu0
        %1068 = vmatprep.mubr.f32.mxu0 0.0
        %1069 = vmatmul.mubr.f32.gmra.mxu0 %v978
        %v1070 = vpop.f32.mrf.mxu0
        %v1071 = vadd.f32 0.0, %v1070
        %v1072 = vpop.f32.mrf.mxu0
        %1073 = vmatprep.mubr.f32.mxu0 0.0
        %1074 = vmatmul.mubr.f32.gmra.mxu0 %v981
        %v1075 = vpop.f32.mrf.mxu0
        %v1076 = vadd.f32 0.0, %v1075
        %v1077 = vpop.f32.mrf.mxu0
        %1078 = vmatprep.mubr.f32.mxu0 0.0
        %1079 = vmatmul.mubr.f32.gmra.mxu0 %v984
        %v1080 = vpop.f32.mrf.mxu0
        %v1081 = vadd.f32 0.0, %v1080
        %v1082 = vpop.f32.mrf.mxu0
        %1083 = vmatprep.mubr.f32.mxu0 0.0
        %1084 = vmatmul.mubr.f32.gmra.mxu0 %v987
        %v1085 = vpop.f32.mrf.mxu0
        %v1086 = vadd.f32 0.0, %v1085
        %v1087 = vpop.f32.mrf.mxu0
        %1088 = vdwg.mxu0
        %v1089 = vadd.f32 %v961, %v1056
        %v1090 = vadd.f32 %v962, %v1061
        %v1091 = vadd.f32 %v963, %v1066
        %v1092 = vadd.f32 %v964, %v1071
        %v1093 = vadd.f32 %v965, %v1076
        %v1094 = vadd.f32 %v966, %v1081
        %v1095 = vadd.f32 %v967, %v1086
        %1096 = vst [vmem:[#allocation2] sm:$0xff] %v1089
        %1097 = vst [vmem:[#allocation2 + $0x8] sm:$0xff] %v1090
        %1098 = vst [vmem:[#allocation2 + $0x10] sm:$0xff] %v1091
        %1099 = vst [vmem:[#allocation2 + $0x18] sm:$0xff] %v1092
        %1100 = vst [vmem:[#allocation2 + $0x20] sm:$0xff] %v1093
        %1101 = vst [vmem:[#allocation2 + $0x28] sm:$0xff] %v1094
        %1102 = vst [vmem:[#allocation2 + $0x30] sm:$0xff] %v1095
        %v1103 = vld [vmem:[%s304] sm:$0xff]
        %v1104 = vld [vmem:[#allocation2 + $0x38] sm:$0xff]
        %v1106 = vsel %vm323, %v1103, 0
        %1108 = vmatprep.subr.mxu0 0.0
        %1109 = vmatpush1.msra.mxu0 0.0
        %1110 = vmatprep.subr.mxu0 0.0
        %1111 = vmatpush1.msra.mxu0 0.0
        %1112 = vmatprep.subr.mxu0 0.0
        %1113 = vmatpush1.msra.mxu0 0.0
        %1114 = vmatprep.subr.mxu0 0.0
        %1115 = vmatpush1.msra.mxu0 0.0
        %1116 = vmatprep.subr.mxu0 0.0
        %1117 = vmatpush1.msra.mxu0 0.0
        %1118 = vmatprep.subr.mxu0 0.0
        %1119 = vmatpush1.msra.mxu0 0.0
        %1120 = vmatprep.subr.mxu0 0.0
        %1121 = vmatpush1.msra.mxu0 0.0
        %1122 = vmatprep.subr.mxu0 0.0
        %1123 = vmatpush1.msra.mxu0 0.0
        %1124 = vmatprep.subr.mxu0 0.0
        %1125 = vmatpush1.msra.mxu0 0.0
        %1126 = vmatprep.subr.mxu0 0.0
        %1127 = vmatpush1.msra.mxu0 0.0
        %1128 = vmatprep.subr.mxu0 0.0
        %1129 = vmatpush1.msra.mxu0 0.0
        %1130 = vmatprep.subr.mxu0 0.0
        %1131 = vmatpush1.msra.mxu0 0.0
        %1132 = vmatprep.subr.mxu0 0.0
        %1133 = vmatpush1.msra.mxu0 0.0
        %1134 = vmatprep.subr.mxu0 0.0
        %1135 = vmatpush1.msra.mxu0 0.0
        %1136 = vmatprep.subr.mxu0 0.0
        %1137 = vmatpush1.msra.mxu0 0.0
        %1138 = vmatprep.subr.mxu0 0.0
        %1139 = vmatpush1.msra.mxu0 %v952
        %1140 = vmatprep.subr.mxu0 0.0
        %1141 = vmatpush2.msra.mxu0 0.0
        %1142 = vmatprep.subr.mxu0 0.0
        %1143 = vmatpush2.msra.mxu0 0.0
        %1144 = vmatprep.subr.mxu0 0.0
        %1145 = vmatpush2.msra.mxu0 0.0
        %1146 = vmatprep.subr.mxu0 0.0
        %1147 = vmatpush2.msra.mxu0 0.0
        %1148 = vmatprep.subr.mxu0 0.0
        %1149 = vmatpush2.msra.mxu0 0.0
        %1150 = vmatprep.subr.mxu0 0.0
        %1151 = vmatpush2.msra.mxu0 0.0
        %1152 = vmatprep.subr.mxu0 0.0
        %1153 = vmatpush2.msra.mxu0 0.0
        %1154 = vmatprep.subr.mxu0 0.0
        %1155 = vmatpush2.msra.mxu0 0.0
        %1156 = vmatprep.subr.mxu0 0.0
        %1157 = vmatpush2.msra.mxu0 0.0
        %1158 = vmatprep.subr.mxu0 0.0
        %1159 = vmatpush2.msra.mxu0 0.0
        %1160 = vmatprep.subr.mxu0 0.0
        %1161 = vmatpush2.msra.mxu0 0.0
        %1162 = vmatprep.subr.mxu0 0.0
        %1163 = vmatpush2.msra.mxu0 0.0
        %1164 = vmatprep.subr.mxu0 0.0
        %1165 = vmatpush2.msra.mxu0 0.0
        %1166 = vmatprep.subr.mxu0 0.0
        %1167 = vmatpush2.msra.mxu0 0.0
        %1168 = vmatprep.subr.mxu0 0.0
        %1169 = vmatpush2.msra.mxu0 0.0
        %1170 = vmatprep.subr.mxu0 0.0
        %1171 = vmatpush2.msra.mxu0 0.0
        %1172 = vmatprep.mubr.f32.mxu0 0.0
        %1173 = vmatmul.mubr.f32.gmra.mxu0 %v1106
        %v1174 = vpop.f32.mrf.mxu0
        %v1175 = vadd.f32 0.0, %v1174
        %v1176 = vpop.f32.mrf.mxu0
        %1177 = vdwg.mxu0
        %v1178 = vadd.f32 %v1104, %v1175
        %1179 = vst [vmem:[#allocation2 + $0x38] sm:$0xff] %v1178
        %s1180 = scalar_lea.vmem %s2, 40
        %v1181 = vld [vmem:[%s1180] sm:$0xff]
        %v1182 = vld [vmem:[%s953 + $0x1] sm:$0xff]
        %v1183 = vld [vmem:[%s953 + $0x21] sm:$0xff]
        %v1184 = vld [vmem:[%s953 + $0x41] sm:$0xff]
        %v1185 = vld [vmem:[%s953 + $0x61] sm:$0xff]
        %v1186 = vld [vmem:[%s953 + $0x81] sm:$0xff]
        %v1187 = vld [vmem:[%s953 + $0xa1] sm:$0xff]
        %v1188 = vld [vmem:[%s953 + $0xc1] sm:$0xff]
        %v1189 = vld [vmem:[#allocation2] sm:$0xff]
        %v1190 = vld [vmem:[#allocation2 + $0x8] sm:$0xff]
        %v1191 = vld [vmem:[#allocation2 + $0x10] sm:$0xff]
        %v1192 = vld [vmem:[#allocation2 + $0x18] sm:$0xff]
        %v1193 = vld [vmem:[#allocation2 + $0x20] sm:$0xff]
        %v1194 = vld [vmem:[#allocation2 + $0x28] sm:$0xff]
        %v1195 = vld [vmem:[#allocation2 + $0x30] sm:$0xff]
        %v1197 = vsel %vm323, %v1182, 0
        %v1200 = vsel %vm323, %v1183, 0
        %v1203 = vsel %vm323, %v1184, 0
        %v1206 = vsel %vm323, %v1185, 0
        %v1209 = vsel %vm323, %v1186, 0
        %v1212 = vsel %vm323, %v1187, 0
        %v1215 = vsel %vm323, %v1188, 0
        %1217 = vmatprep.subr.mxu0 0.0
        %1218 = vmatpush1.msra.mxu0 0.0
        %1219 = vmatprep.subr.mxu0 0.0
        %1220 = vmatpush1.msra.mxu0 0.0
        %1221 = vmatprep.subr.mxu0 0.0
        %1222 = vmatpush1.msra.mxu0 0.0
        %1223 = vmatprep.subr.mxu0 0.0
        %1224 = vmatpush1.msra.mxu0 0.0
        %1225 = vmatprep.subr.mxu0 0.0
        %1226 = vmatpush1.msra.mxu0 0.0
        %1227 = vmatprep.subr.mxu0 0.0
        %1228 = vmatpush1.msra.mxu0 0.0
        %1229 = vmatprep.subr.mxu0 0.0
        %1230 = vmatpush1.msra.mxu0 0.0
        %1231 = vmatprep.subr.mxu0 0.0
        %1232 = vmatpush1.msra.mxu0 0.0
        %1233 = vmatprep.subr.mxu0 0.0
        %1234 = vmatpush1.msra.mxu0 0.0
        %1235 = vmatprep.subr.mxu0 0.0
        %1236 = vmatpush1.msra.mxu0 0.0
        %1237 = vmatprep.subr.mxu0 0.0
        %1238 = vmatpush1.msra.mxu0 0.0
        %1239 = vmatprep.subr.mxu0 0.0
        %1240 = vmatpush1.msra.mxu0 0.0
        %1241 = vmatprep.subr.mxu0 0.0
        %1242 = vmatpush1.msra.mxu0 0.0
        %1243 = vmatprep.subr.mxu0 0.0
        %1244 = vmatpush1.msra.mxu0 0.0
        %1245 = vmatprep.subr.mxu0 0.0
        %1246 = vmatpush1.msra.mxu0 0.0
        %1247 = vmatprep.subr.mxu0 0.0
        %1248 = vmatpush1.msra.mxu0 %v1181
        %1249 = vmatprep.subr.mxu0 0.0
        %1250 = vmatpush2.msra.mxu0 0.0
        %1251 = vmatprep.subr.mxu0 0.0
        %1252 = vmatpush2.msra.mxu0 0.0
        %1253 = vmatprep.subr.mxu0 0.0
        %1254 = vmatpush2.msra.mxu0 0.0
        %1255 = vmatprep.subr.mxu0 0.0
        %1256 = vmatpush2.msra.mxu0 0.0
        %1257 = vmatprep.subr.mxu0 0.0
        %1258 = vmatpush2.msra.mxu0 0.0
        %1259 = vmatprep.subr.mxu0 0.0
        %1260 = vmatpush2.msra.mxu0 0.0
        %1261 = vmatprep.subr.mxu0 0.0
        %1262 = vmatpush2.msra.mxu0 0.0
        %1263 = vmatprep.subr.mxu0 0.0
        %1264 = vmatpush2.msra.mxu0 0.0
        %1265 = vmatprep.subr.mxu0 0.0
        %1266 = vmatpush2.msra.mxu0 0.0
        %1267 = vmatprep.subr.mxu0 0.0
        %1268 = vmatpush2.msra.mxu0 0.0
        %1269 = vmatprep.subr.mxu0 0.0
        %1270 = vmatpush2.msra.mxu0 0.0
        %1271 = vmatprep.subr.mxu0 0.0
        %1272 = vmatpush2.msra.mxu0 0.0
        %1273 = vmatprep.subr.mxu0 0.0
        %1274 = vmatpush2.msra.mxu0 0.0
        %1275 = vmatprep.subr.mxu0 0.0
        %1276 = vmatpush2.msra.mxu0 0.0
        %1277 = vmatprep.subr.mxu0 0.0
        %1278 = vmatpush2.msra.mxu0 0.0
        %1279 = vmatprep.subr.mxu0 0.0
        %1280 = vmatpush2.msra.mxu0 0.0
        %1281 = vmatprep.mubr.f32.mxu0 0.0
        %1282 = vmatmul.mubr.f32.gmra.mxu0 %v1197
        %v1283 = vpop.f32.mrf.mxu0
        %v1284 = vadd.f32 0.0, %v1283
        %v1285 = vpop.f32.mrf.mxu0
        %1286 = vmatprep.mubr.f32.mxu0 0.0
        %1287 = vmatmul.mubr.f32.gmra.mxu0 %v1200
        %v1288 = vpop.f32.mrf.mxu0
        %v1289 = vadd.f32 0.0, %v1288
        %v1290 = vpop.f32.mrf.mxu0
        %1291 = vmatprep.mubr.f32.mxu0 0.0
        %1292 = vmatmul.mubr.f32.gmra.mxu0 %v1203
        %v1293 = vpop.f32.mrf.mxu0
        %v1294 = vadd.f32 0.0, %v1293
        %v1295 = vpop.f32.mrf.mxu0
        %1296 = vmatprep.mubr.f32.mxu0 0.0
        %1297 = vmatmul.mubr.f32.gmra.mxu0 %v1206
        %v1298 = vpop.f32.mrf.mxu0
        %v1299 = vadd.f32 0.0, %v1298
        %v1300 = vpop.f32.mrf.mxu0
        %1301 = vmatprep.mubr.f32.mxu0 0.0
        %1302 = vmatmul.mubr.f32.gmra.mxu0 %v1209
        %v1303 = vpop.f32.mrf.mxu0
        %v1304 = vadd.f32 0.0, %v1303
        %v1305 = vpop.f32.mrf.mxu0
        %1306 = vmatprep.mubr.f32.mxu0 0.0
        %1307 = vmatmul.mubr.f32.gmra.mxu0 %v1212
        %v1308 = vpop.f32.mrf.mxu0
        %v1309 = vadd.f32 0.0, %v1308
        %v1310 = vpop.f32.mrf.mxu0
        %1311 = vmatprep.mubr.f32.mxu0 0.0
        %1312 = vmatmul.mubr.f32.gmra.mxu0 %v1215
        %v1313 = vpop.f32.mrf.mxu0
        %v1314 = vadd.f32 0.0, %v1313
        %v1315 = vpop.f32.mrf.mxu0
        %1316 = vdwg.mxu0
        %v1317 = vadd.f32 %v1189, %v1284
        %v1318 = vadd.f32 %v1190, %v1289
        %v1319 = vadd.f32 %v1191, %v1294
        %v1320 = vadd.f32 %v1192, %v1299
        %v1321 = vadd.f32 %v1193, %v1304
        %v1322 = vadd.f32 %v1194, %v1309
        %v1323 = vadd.f32 %v1195, %v1314
        %1324 = vst [vmem:[#allocation2] sm:$0xff] %v1317
        %1325 = vst [vmem:[#allocation2 + $0x8] sm:$0xff] %v1318
        %1326 = vst [vmem:[#allocation2 + $0x10] sm:$0xff] %v1319
        %1327 = vst [vmem:[#allocation2 + $0x18] sm:$0xff] %v1320
        %1328 = vst [vmem:[#allocation2 + $0x20] sm:$0xff] %v1321
        %1329 = vst [vmem:[#allocation2 + $0x28] sm:$0xff] %v1322
        %1330 = vst [vmem:[#allocation2 + $0x30] sm:$0xff] %v1323
        %v1331 = vld [vmem:[%s304 + $0x1] sm:$0xff]
        %v1332 = vld [vmem:[#allocation2 + $0x38] sm:$0xff]
        %v1334 = vsel %vm323, %v1331, 0
        %1336 = vmatprep.subr.mxu0 0.0
        %1337 = vmatpush1.msra.mxu0 0.0
        %1338 = vmatprep.subr.mxu0 0.0
        %1339 = vmatpush1.msra.mxu0 0.0
        %1340 = vmatprep.subr.mxu0 0.0
        %1341 = vmatpush1.msra.mxu0 0.0
        %1342 = vmatprep.subr.mxu0 0.0
        %1343 = vmatpush1.msra.mxu0 0.0
        %1344 = vmatprep.subr.mxu0 0.0
        %1345 = vmatpush1.msra.mxu0 0.0
        %1346 = vmatprep.subr.mxu0 0.0
        %1347 = vmatpush1.msra.mxu0 0.0
        %1348 = vmatprep.subr.mxu0 0.0
        %1349 = vmatpush1.msra.mxu0 0.0
        %1350 = vmatprep.subr.mxu0 0.0
        %1351 = vmatpush1.msra.mxu0 0.0
        %1352 = vmatprep.subr.mxu0 0.0
        %1353 = vmatpush1.msra.mxu0 0.0
        %1354 = vmatprep.subr.mxu0 0.0
        %1355 = vmatpush1.msra.mxu0 0.0
        %1356 = vmatprep.subr.mxu0 0.0
        %1357 = vmatpush1.msra.mxu0 0.0
        %1358 = vmatprep.subr.mxu0 0.0
        %1359 = vmatpush1.msra.mxu0 0.0
        %1360 = vmatprep.subr.mxu0 0.0
        %1361 = vmatpush1.msra.mxu0 0.0
        %1362 = vmatprep.subr.mxu0 0.0
        %1363 = vmatpush1.msra.mxu0 0.0
        %1364 = vmatprep.subr.mxu0 0.0
        %1365 = vmatpush1.msra.mxu0 0.0
        %1366 = vmatprep.subr.mxu0 0.0
        %1367 = vmatpush1.msra.mxu0 %v1181
        %1368 = vmatprep.subr.mxu0 0.0
        %1369 = vmatpush2.msra.mxu0 0.0
        %1370 = vmatprep.subr.mxu0 0.0
        %1371 = vmatpush2.msra.mxu0 0.0
        %1372 = vmatprep.subr.mxu0 0.0
        %1373 = vmatpush2.msra.mxu0 0.0
        %1374 = vmatprep.subr.mxu0 0.0
        %1375 = vmatpush2.msra.mxu0 0.0
        %1376 = vmatprep.subr.mxu0 0.0
        %1377 = vmatpush2.msra.mxu0 0.0
        %1378 = vmatprep.subr.mxu0 0.0
        %1379 = vmatpush2.msra.mxu0 0.0
        %1380 = vmatprep.subr.mxu0 0.0
        %1381 = vmatpush2.msra.mxu0 0.0
        %1382 = vmatprep.subr.mxu0 0.0
        %1383 = vmatpush2.msra.mxu0 0.0
        %1384 = vmatprep.subr.mxu0 0.0
        %1385 = vmatpush2.msra.mxu0 0.0
        %1386 = vmatprep.subr.mxu0 0.0
        %1387 = vmatpush2.msra.mxu0 0.0
        %1388 = vmatprep.subr.mxu0 0.0
        %1389 = vmatpush2.msra.mxu0 0.0
        %1390 = vmatprep.subr.mxu0 0.0
        %1391 = vmatpush2.msra.mxu0 0.0
        %1392 = vmatprep.subr.mxu0 0.0
        %1393 = vmatpush2.msra.mxu0 0.0
        %1394 = vmatprep.subr.mxu0 0.0
        %1395 = vmatpush2.msra.mxu0 0.0
        %1396 = vmatprep.subr.mxu0 0.0
        %1397 = vmatpush2.msra.mxu0 0.0
        %1398 = vmatprep.subr.mxu0 0.0
        %1399 = vmatpush2.msra.mxu0 0.0
        %1400 = vmatprep.mubr.f32.mxu0 0.0
        %1401 = vmatmul.mubr.f32.gmra.mxu0 %v1334
        %v1402 = vpop.f32.mrf.mxu0
        %v1403 = vadd.f32 0.0, %v1402
        %v1404 = vpop.f32.mrf.mxu0
        %1405 = vdwg.mxu0
        %v1406 = vadd.f32 %v1332, %v1403
        %1407 = vst [vmem:[#allocation2 + $0x38] sm:$0xff] %v1406
        %s1408 = scalar_lea.vmem %s2, 48
        %v1409 = vld [vmem:[%s1408] sm:$0xff]
        %s1410 = scalar_lea.vmem %s286, 48
        %v1411 = vld [vmem:[%s1410] sm:$0xff]
        %v1412 = vld [vmem:[%s1410 + $0x20] sm:$0xff]
        %v1413 = vld [vmem:[%s1410 + $0x40] sm:$0xff]
        %v1414 = vld [vmem:[%s1410 + $0x60] sm:$0xff]
        %v1415 = vld [vmem:[%s1410 + $0x80] sm:$0xff]
        %v1416 = vld [vmem:[%s1410 + $0xa0] sm:$0xff]
        %v1417 = vld [vmem:[%s1410 + $0xc0] sm:$0xff]
        %v1418 = vld [vmem:[#allocation2] sm:$0xff]
        %v1419 = vld [vmem:[#allocation2 + $0x8] sm:$0xff]
        %v1420 = vld [vmem:[#allocation2 + $0x10] sm:$0xff]
        %v1421 = vld [vmem:[#allocation2 + $0x18] sm:$0xff]
        %v1422 = vld [vmem:[#allocation2 + $0x20] sm:$0xff]
        %v1423 = vld [vmem:[#allocation2 + $0x28] sm:$0xff]
        %v1424 = vld [vmem:[#allocation2 + $0x30] sm:$0xff]
        %v1426 = vsel %vm323, %v1411, 0
        %v1429 = vsel %vm323, %v1412, 0
        %v1432 = vsel %vm323, %v1413, 0
        %v1435 = vsel %vm323, %v1414, 0
        %v1438 = vsel %vm323, %v1415, 0
        %v1441 = vsel %vm323, %v1416, 0
        %v1444 = vsel %vm323, %v1417, 0
        %1446 = vmatprep.subr.mxu0 0.0
        %1447 = vmatpush1.msra.mxu0 0.0
        %1448 = vmatprep.subr.mxu0 0.0
        %1449 = vmatpush1.msra.mxu0 0.0
        %1450 = vmatprep.subr.mxu0 0.0
        %1451 = vmatpush1.msra.mxu0 0.0
        %1452 = vmatprep.subr.mxu0 0.0
        %1453 = vmatpush1.msra.mxu0 0.0
        %1454 = vmatprep.subr.mxu0 0.0
        %1455 = vmatpush1.msra.mxu0 0.0
        %1456 = vmatprep.subr.mxu0 0.0
        %1457 = vmatpush1.msra.mxu0 0.0
        %1458 = vmatprep.subr.mxu0 0.0
        %1459 = vmatpush1.msra.mxu0 0.0
        %1460 = vmatprep.subr.mxu0 0.0
        %1461 = vmatpush1.msra.mxu0 0.0
        %1462 = vmatprep.subr.mxu0 0.0
        %1463 = vmatpush1.msra.mxu0 0.0
        %1464 = vmatprep.subr.mxu0 0.0
        %1465 = vmatpush1.msra.mxu0 0.0
        %1466 = vmatprep.subr.mxu0 0.0
        %1467 = vmatpush1.msra.mxu0 0.0
        %1468 = vmatprep.subr.mxu0 0.0
        %1469 = vmatpush1.msra.mxu0 0.0
        %1470 = vmatprep.subr.mxu0 0.0
        %1471 = vmatpush1.msra.mxu0 0.0
        %1472 = vmatprep.subr.mxu0 0.0
        %1473 = vmatpush1.msra.mxu0 0.0
        %1474 = vmatprep.subr.mxu0 0.0
        %1475 = vmatpush1.msra.mxu0 0.0
        %1476 = vmatprep.subr.mxu0 0.0
        %1477 = vmatpush1.msra.mxu0 %v1409
        %1478 = vmatprep.subr.mxu0 0.0
        %1479 = vmatpush2.msra.mxu0 0.0
        %1480 = vmatprep.subr.mxu0 0.0
        %1481 = vmatpush2.msra.mxu0 0.0
        %1482 = vmatprep.subr.mxu0 0.0
        %1483 = vmatpush2.msra.mxu0 0.0
        %1484 = vmatprep.subr.mxu0 0.0
        %1485 = vmatpush2.msra.mxu0 0.0
        %1486 = vmatprep.subr.mxu0 0.0
        %1487 = vmatpush2.msra.mxu0 0.0
        %1488 = vmatprep.subr.mxu0 0.0
        %1489 = vmatpush2.msra.mxu0 0.0
        %1490 = vmatprep.subr.mxu0 0.0
        %1491 = vmatpush2.msra.mxu0 0.0
        %1492 = vmatprep.subr.mxu0 0.0
        %1493 = vmatpush2.msra.mxu0 0.0
        %1494 = vmatprep.subr.mxu0 0.0
        %1495 = vmatpush2.msra.mxu0 0.0
        %1496 = vmatprep.subr.mxu0 0.0
        %1497 = vmatpush2.msra.mxu0 0.0
        %1498 = vmatprep.subr.mxu0 0.0
        %1499 = vmatpush2.msra.mxu0 0.0
        %1500 = vmatprep.subr.mxu0 0.0
        %1501 = vmatpush2.msra.mxu0 0.0
        %1502 = vmatprep.subr.mxu0 0.0
        %1503 = vmatpush2.msra.mxu0 0.0
        %1504 = vmatprep.subr.mxu0 0.0
        %1505 = vmatpush2.msra.mxu0 0.0
        %1506 = vmatprep.subr.mxu0 0.0
        %1507 = vmatpush2.msra.mxu0 0.0
        %1508 = vmatprep.subr.mxu0 0.0
        %1509 = vmatpush2.msra.mxu0 0.0
        %1510 = vmatprep.mubr.f32.mxu0 0.0
        %1511 = vmatmul.mubr.f32.gmra.mxu0 %v1426
        %v1512 = vpop.f32.mrf.mxu0
        %v1513 = vadd.f32 0.0, %v1512
        %v1514 = vpop.f32.mrf.mxu0
        %1515 = vmatprep.mubr.f32.mxu0 0.0
        %1516 = vmatmul.mubr.f32.gmra.mxu0 %v1429
        %v1517 = vpop.f32.mrf.mxu0
        %v1518 = vadd.f32 0.0, %v1517
        %v1519 = vpop.f32.mrf.mxu0
        %1520 = vmatprep.mubr.f32.mxu0 0.0
        %1521 = vmatmul.mubr.f32.gmra.mxu0 %v1432
        %v1522 = vpop.f32.mrf.mxu0
        %v1523 = vadd.f32 0.0, %v1522
        %v1524 = vpop.f32.mrf.mxu0
        %1525 = vmatprep.mubr.f32.mxu0 0.0
        %1526 = vmatmul.mubr.f32.gmra.mxu0 %v1435
        %v1527 = vpop.f32.mrf.mxu0
        %v1528 = vadd.f32 0.0, %v1527
        %v1529 = vpop.f32.mrf.mxu0
        %1530 = vmatprep.mubr.f32.mxu0 0.0
        %1531 = vmatmul.mubr.f32.gmra.mxu0 %v1438
        %v1532 = vpop.f32.mrf.mxu0
        %v1533 = vadd.f32 0.0, %v1532
        %v1534 = vpop.f32.mrf.mxu0
        %1535 = vmatprep.mubr.f32.mxu0 0.0
        %1536 = vmatmul.mubr.f32.gmra.mxu0 %v1441
        %v1537 = vpop.f32.mrf.mxu0
        %v1538 = vadd.f32 0.0, %v1537
        %v1539 = vpop.f32.mrf.mxu0
        %1540 = vmatprep.mubr.f32.mxu0 0.0
        %1541 = vmatmul.mubr.f32.gmra.mxu0 %v1444
        %v1542 = vpop.f32.mrf.mxu0
        %v1543 = vadd.f32 0.0, %v1542
        %v1544 = vpop.f32.mrf.mxu0
        %1545 = vdwg.mxu0
        %v1546 = vadd.f32 %v1418, %v1513
        %v1547 = vadd.f32 %v1419, %v1518
        %v1548 = vadd.f32 %v1420, %v1523
        %v1549 = vadd.f32 %v1421, %v1528
        %v1550 = vadd.f32 %v1422, %v1533
        %v1551 = vadd.f32 %v1423, %v1538
        %v1552 = vadd.f32 %v1424, %v1543
        %1553 = vst [vmem:[#allocation2] sm:$0xff] %v1546
        %1554 = vst [vmem:[#allocation2 + $0x8] sm:$0xff] %v1547
        %1555 = vst [vmem:[#allocation2 + $0x10] sm:$0xff] %v1548
        %1556 = vst [vmem:[#allocation2 + $0x18] sm:$0xff] %v1549
        %1557 = vst [vmem:[#allocation2 + $0x20] sm:$0xff] %v1550
        %1558 = vst [vmem:[#allocation2 + $0x28] sm:$0xff] %v1551
        %1559 = vst [vmem:[#allocation2 + $0x30] sm:$0xff] %v1552
        %s1560 = scalar_lea.vmem %s304, 16
        %v1561 = vld [vmem:[%s1560] sm:$0xff]
        %v1562 = vld [vmem:[#allocation2 + $0x38] sm:$0xff]
        %v1564 = vsel %vm323, %v1561, 0
        %1566 = vmatprep.subr.mxu0 0.0
        %1567 = vmatpush1.msra.mxu0 0.0
        %1568 = vmatprep.subr.mxu0 0.0
        %1569 = vmatpush1.msra.mxu0 0.0
        %1570 = vmatprep.subr.mxu0 0.0
        %1571 = vmatpush1.msra.mxu0 0.0
        %1572 = vmatprep.subr.mxu0 0.0
        %1573 = vmatpush1.msra.mxu0 0.0
        %1574 = vmatprep.subr.mxu0 0.0
        %1575 = vmatpush1.msra.mxu0 0.0
        %1576 = vmatprep.subr.mxu0 0.0
        %1577 = vmatpush1.msra.mxu0 0.0
        %1578 = vmatprep.subr.mxu0 0.0
        %1579 = vmatpush1.msra.mxu0 0.0
        %1580 = vmatprep.subr.mxu0 0.0
        %1581 = vmatpush1.msra.mxu0 0.0
        %1582 = vmatprep.subr.mxu0 0.0
        %1583 = vmatpush1.msra.mxu0 0.0
        %1584 = vmatprep.subr.mxu0 0.0
        %1585 = vmatpush1.msra.mxu0 0.0
        %1586 = vmatprep.subr.mxu0 0.0
        %1587 = vmatpush1.msra.mxu0 0.0
        %1588 = vmatprep.subr.mxu0 0.0
        %1589 = vmatpush1.msra.mxu0 0.0
        %1590 = vmatprep.subr.mxu0 0.0
        %1591 = vmatpush1.msra.mxu0 0.0
        %1592 = vmatprep.subr.mxu0 0.0
        %1593 = vmatpush1.msra.mxu0 0.0
        %1594 = vmatprep.subr.mxu0 0.0
        %1595 = vmatpush1.msra.mxu0 0.0
        %1596 = vmatprep.subr.mxu0 0.0
        %1597 = vmatpush1.msra.mxu0 %v1409
        %1598 = vmatprep.subr.mxu0 0.0
        %1599 = vmatpush2.msra.mxu0 0.0
        %1600 = vmatprep.subr.mxu0 0.0
        %1601 = vmatpush2.msra.mxu0 0.0
        %1602 = vmatprep.subr.mxu0 0.0
        %1603 = vmatpush2.msra.mxu0 0.0
        %1604 = vmatprep.subr.mxu0 0.0
        %1605 = vmatpush2.msra.mxu0 0.0
        %1606 = vmatprep.subr.mxu0 0.0
        %1607 = vmatpush2.msra.mxu0 0.0
        %1608 = vmatprep.subr.mxu0 0.0
        %1609 = vmatpush2.msra.mxu0 0.0
        %1610 = vmatprep.subr.mxu0 0.0
        %1611 = vmatpush2.msra.mxu0 0.0
        %1612 = vmatprep.subr.mxu0 0.0
        %1613 = vmatpush2.msra.mxu0 0.0
        %1614 = vmatprep.subr.mxu0 0.0
        %1615 = vmatpush2.msra.mxu0 0.0
        %1616 = vmatprep.subr.mxu0 0.0
        %1617 = vmatpush2.msra.mxu0 0.0
        %1618 = vmatprep.subr.mxu0 0.0
        %1619 = vmatpush2.msra.mxu0 0.0
        %1620 = vmatprep.subr.mxu0 0.0
        %1621 = vmatpush2.msra.mxu0 0.0
        %1622 = vmatprep.subr.mxu0 0.0
        %1623 = vmatpush2.msra.mxu0 0.0
        %1624 = vmatprep.subr.mxu0 0.0
        %1625 = vmatpush2.msra.mxu0 0.0
        %1626 = vmatprep.subr.mxu0 0.0
        %1627 = vmatpush2.msra.mxu0 0.0
        %1628 = vmatprep.subr.mxu0 0.0
        %1629 = vmatpush2.msra.mxu0 0.0
        %1630 = vmatprep.mubr.f32.mxu0 0.0
        %1631 = vmatmul.mubr.f32.gmra.mxu0 %v1564
        %v1632 = vpop.f32.mrf.mxu0
        %v1633 = vadd.f32 0.0, %v1632
        %v1634 = vpop.f32.mrf.mxu0
        %1635 = vdwg.mxu0
        %v1636 = vadd.f32 %v1562, %v1633
        %1637 = vst [vmem:[#allocation2 + $0x38] sm:$0xff] %v1636
        %s1638 = scalar_lea.vmem %s2, 56
        %v1639 = vld [vmem:[%s1638] sm:$0xff]
        %v1640 = vld [vmem:[%s1410 + $0x1] sm:$0xff]
        %v1641 = vld [vmem:[%s1410 + $0x21] sm:$0xff]
        %v1642 = vld [vmem:[%s1410 + $0x41] sm:$0xff]
        %v1643 = vld [vmem:[%s1410 + $0x61] sm:$0xff]
        %v1644 = vld [vmem:[%s1410 + $0x81] sm:$0xff]
        %v1645 = vld [vmem:[%s1410 + $0xa1] sm:$0xff]
        %v1646 = vld [vmem:[%s1410 + $0xc1] sm:$0xff]
        %v1647 = vld [vmem:[#allocation2] sm:$0xff]
        %v1648 = vld [vmem:[#allocation2 + $0x8] sm:$0xff]
        %v1649 = vld [vmem:[#allocation2 + $0x10] sm:$0xff]
        %v1650 = vld [vmem:[#allocation2 + $0x18] sm:$0xff]
        %v1651 = vld [vmem:[#allocation2 + $0x20] sm:$0xff]
        %v1652 = vld [vmem:[#allocation2 + $0x28] sm:$0xff]
        %v1653 = vld [vmem:[#allocation2 + $0x30] sm:$0xff]
        %v1655 = vsel %vm323, %v1640, 0
        %v1658 = vsel %vm323, %v1641, 0
        %v1661 = vsel %vm323, %v1642, 0
        %v1664 = vsel %vm323, %v1643, 0
        %v1667 = vsel %vm323, %v1644, 0
        %v1670 = vsel %vm323, %v1645, 0
        %v1673 = vsel %vm323, %v1646, 0
        %1675 = vmatprep.subr.mxu0 0.0
        %1676 = vmatpush1.msra.mxu0 0.0
        %1677 = vmatprep.subr.mxu0 0.0
        %1678 = vmatpush1.msra.mxu0 0.0
        %1679 = vmatprep.subr.mxu0 0.0
        %1680 = vmatpush1.msra.mxu0 0.0
        %1681 = vmatprep.subr.mxu0 0.0
        %1682 = vmatpush1.msra.mxu0 0.0
        %1683 = vmatprep.subr.mxu0 0.0
        %1684 = vmatpush1.msra.mxu0 0.0
        %1685 = vmatprep.subr.mxu0 0.0
        %1686 = vmatpush1.msra.mxu0 0.0
        %1687 = vmatprep.subr.mxu0 0.0
        %1688 = vmatpush1.msra.mxu0 0.0
        %1689 = vmatprep.subr.mxu0 0.0
        %1690 = vmatpush1.msra.mxu0 0.0
        %1691 = vmatprep.subr.mxu0 0.0
        %1692 = vmatpush1.msra.mxu0 0.0
        %1693 = vmatprep.subr.mxu0 0.0
        %1694 = vmatpush1.msra.mxu0 0.0
        %1695 = vmatprep.subr.mxu0 0.0
        %1696 = vmatpush1.msra.mxu0 0.0
        %1697 = vmatprep.subr.mxu0 0.0
        %1698 = vmatpush1.msra.mxu0 0.0
        %1699 = vmatprep.subr.mxu0 0.0
        %1700 = vmatpush1.msra.mxu0 0.0
        %1701 = vmatprep.subr.mxu0 0.0
        %1702 = vmatpush1.msra.mxu0 0.0
        %1703 = vmatprep.subr.mxu0 0.0
        %1704 = vmatpush1.msra.mxu0 0.0
        %1705 = vmatprep.subr.mxu0 0.0
        %1706 = vmatpush1.msra.mxu0 %v1639
        %1707 = vmatprep.subr.mxu0 0.0
        %1708 = vmatpush2.msra.mxu0 0.0
        %1709 = vmatprep.subr.mxu0 0.0
        %1710 = vmatpush2.msra.mxu0 0.0
        %1711 = vmatprep.subr.mxu0 0.0
        %1712 = vmatpush2.msra.mxu0 0.0
        %1713 = vmatprep.subr.mxu0 0.0
        %1714 = vmatpush2.msra.mxu0 0.0
        %1715 = vmatprep.subr.mxu0 0.0
        %1716 = vmatpush2.msra.mxu0 0.0
        %1717 = vmatprep.subr.mxu0 0.0
        %1718 = vmatpush2.msra.mxu0 0.0
        %1719 = vmatprep.subr.mxu0 0.0
        %1720 = vmatpush2.msra.mxu0 0.0
        %1721 = vmatprep.subr.mxu0 0.0
        %1722 = vmatpush2.msra.mxu0 0.0
        %1723 = vmatprep.subr.mxu0 0.0
        %1724 = vmatpush2.msra.mxu0 0.0
        %1725 = vmatprep.subr.mxu0 0.0
        %1726 = vmatpush2.msra.mxu0 0.0
        %1727 = vmatprep.subr.mxu0 0.0
        %1728 = vmatpush2.msra.mxu0 0.0
        %1729 = vmatprep.subr.mxu0 0.0
        %1730 = vmatpush2.msra.mxu0 0.0
        %1731 = vmatprep.subr.mxu0 0.0
        %1732 = vmatpush2.msra.mxu0 0.0
        %1733 = vmatprep.subr.mxu0 0.0
        %1734 = vmatpush2.msra.mxu0 0.0
        %1735 = vmatprep.subr.mxu0 0.0
        %1736 = vmatpush2.msra.mxu0 0.0
        %1737 = vmatprep.subr.mxu0 0.0
        %1738 = vmatpush2.msra.mxu0 0.0
        %1739 = vmatprep.mubr.f32.mxu0 0.0
        %1740 = vmatmul.mubr.f32.gmra.mxu0 %v1655
        %v1741 = vpop.f32.mrf.mxu0
        %v1742 = vadd.f32 0.0, %v1741
        %v1743 = vpop.f32.mrf.mxu0
        %1744 = vmatprep.mubr.f32.mxu0 0.0
        %1745 = vmatmul.mubr.f32.gmra.mxu0 %v1658
        %v1746 = vpop.f32.mrf.mxu0
        %v1747 = vadd.f32 0.0, %v1746
        %v1748 = vpop.f32.mrf.mxu0
        %1749 = vmatprep.mubr.f32.mxu0 0.0
        %1750 = vmatmul.mubr.f32.gmra.mxu0 %v1661
        %v1751 = vpop.f32.mrf.mxu0
        %v1752 = vadd.f32 0.0, %v1751
        %v1753 = vpop.f32.mrf.mxu0
        %1754 = vmatprep.mubr.f32.mxu0 0.0
        %1755 = vmatmul.mubr.f32.gmra.mxu0 %v1664
        %v1756 = vpop.f32.mrf.mxu0
        %v1757 = vadd.f32 0.0, %v1756
        %v1758 = vpop.f32.mrf.mxu0
        %1759 = vmatprep.mubr.f32.mxu0 0.0
        %1760 = vmatmul.mubr.f32.gmra.mxu0 %v1667
        %v1761 = vpop.f32.mrf.mxu0
        %v1762 = vadd.f32 0.0, %v1761
        %v1763 = vpop.f32.mrf.mxu0
        %1764 = vmatprep.mubr.f32.mxu0 0.0
        %1765 = vmatmul.mubr.f32.gmra.mxu0 %v1670
        %v1766 = vpop.f32.mrf.mxu0
        %v1767 = vadd.f32 0.0, %v1766
        %v1768 = vpop.f32.mrf.mxu0
        %1769 = vmatprep.mubr.f32.mxu0 0.0
        %1770 = vmatmul.mubr.f32.gmra.mxu0 %v1673
        %v1771 = vpop.f32.mrf.mxu0
        %v1772 = vadd.f32 0.0, %v1771
        %v1773 = vpop.f32.mrf.mxu0
        %1774 = vdwg.mxu0
        %v1775 = vadd.f32 %v1647, %v1742
        %v1776 = vadd.f32 %v1648, %v1747
        %v1777 = vadd.f32 %v1649, %v1752
        %v1778 = vadd.f32 %v1650, %v1757
        %v1779 = vadd.f32 %v1651, %v1762
        %v1780 = vadd.f32 %v1652, %v1767
        %v1781 = vadd.f32 %v1653, %v1772
        %1782 = vst [vmem:[#allocation2] sm:$0xff] %v1775
        %1783 = vst [vmem:[#allocation2 + $0x8] sm:$0xff] %v1776
        %1784 = vst [vmem:[#allocation2 + $0x10] sm:$0xff] %v1777
        %1785 = vst [vmem:[#allocation2 + $0x18] sm:$0xff] %v1778
        %1786 = vst [vmem:[#allocation2 + $0x20] sm:$0xff] %v1779
        %1787 = vst [vmem:[#allocation2 + $0x28] sm:$0xff] %v1780
        %1788 = vst [vmem:[#allocation2 + $0x30] sm:$0xff] %v1781
        %v1789 = vld [vmem:[%s1560 + $0x1] sm:$0xff]
        %v1790 = vld [vmem:[#allocation2 + $0x38] sm:$0xff]
        %v1792 = vsel %vm323, %v1789, 0
        %1794 = vmatprep.subr.mxu0 0.0
        %1795 = vmatpush1.msra.mxu0 0.0
        %1796 = vmatprep.subr.mxu0 0.0
        %1797 = vmatpush1.msra.mxu0 0.0
        %1798 = vmatprep.subr.mxu0 0.0
        %1799 = vmatpush1.msra.mxu0 0.0
        %1800 = vmatprep.subr.mxu0 0.0
        %1801 = vmatpush1.msra.mxu0 0.0
        %1802 = vmatprep.subr.mxu0 0.0
        %1803 = vmatpush1.msra.mxu0 0.0
        %1804 = vmatprep.subr.mxu0 0.0
        %1805 = vmatpush1.msra.mxu0 0.0
        %1806 = vmatprep.subr.mxu0 0.0
        %1807 = vmatpush1.msra.mxu0 0.0
        %1808 = vmatprep.subr.mxu0 0.0
        %1809 = vmatpush1.msra.mxu0 0.0
        %1810 = vmatprep.subr.mxu0 0.0
        %1811 = vmatpush1.msra.mxu0 0.0
        %1812 = vmatprep.subr.mxu0 0.0
        %1813 = vmatpush1.msra.mxu0 0.0
        %1814 = vmatprep.subr.mxu0 0.0
        %1815 = vmatpush1.msra.mxu0 0.0
        %1816 = vmatprep.subr.mxu0 0.0
        %1817 = vmatpush1.msra.mxu0 0.0
        %1818 = vmatprep.subr.mxu0 0.0
        %1819 = vmatpush1.msra.mxu0 0.0
        %1820 = vmatprep.subr.mxu0 0.0
        %1821 = vmatpush1.msra.mxu0 0.0
        %1822 = vmatprep.subr.mxu0 0.0
        %1823 = vmatpush1.msra.mxu0 0.0
        %1824 = vmatprep.subr.mxu0 0.0
        %1825 = vmatpush1.msra.mxu0 %v1639
        %1826 = vmatprep.subr.mxu0 0.0
        %1827 = vmatpush2.msra.mxu0 0.0
        %1828 = vmatprep.subr.mxu0 0.0
        %1829 = vmatpush2.msra.mxu0 0.0
        %1830 = vmatprep.subr.mxu0 0.0
        %1831 = vmatpush2.msra.mxu0 0.0
        %1832 = vmatprep.subr.mxu0 0.0
        %1833 = vmatpush2.msra.mxu0 0.0
        %1834 = vmatprep.subr.mxu0 0.0
        %1835 = vmatpush2.msra.mxu0 0.0
        %1836 = vmatprep.subr.mxu0 0.0
        %1837 = vmatpush2.msra.mxu0 0.0
        %1838 = vmatprep.subr.mxu0 0.0
        %1839 = vmatpush2.msra.mxu0 0.0
        %1840 = vmatprep.subr.mxu0 0.0
        %1841 = vmatpush2.msra.mxu0 0.0
        %1842 = vmatprep.subr.mxu0 0.0
        %1843 = vmatpush2.msra.mxu0 0.0
        %1844 = vmatprep.subr.mxu0 0.0
        %1845 = vmatpush2.msra.mxu0 0.0
        %1846 = vmatprep.subr.mxu0 0.0
        %1847 = vmatpush2.msra.mxu0 0.0
        %1848 = vmatprep.subr.mxu0 0.0
        %1849 = vmatpush2.msra.mxu0 0.0
        %1850 = vmatprep.subr.mxu0 0.0
        %1851 = vmatpush2.msra.mxu0 0.0
        %1852 = vmatprep.subr.mxu0 0.0
        %1853 = vmatpush2.msra.mxu0 0.0
        %1854 = vmatprep.subr.mxu0 0.0
        %1855 = vmatpush2.msra.mxu0 0.0
        %1856 = vmatprep.subr.mxu0 0.0
        %1857 = vmatpush2.msra.mxu0 0.0
        %1858 = vmatprep.mubr.f32.mxu0 0.0
        %1859 = vmatmul.mubr.f32.gmra.mxu0 %v1792
        %v1860 = vpop.f32.mrf.mxu0
        %v1861 = vadd.f32 0.0, %v1860
        %v1862 = vpop.f32.mrf.mxu0
        %1863 = vdwg.mxu0
        %v1864 = vadd.f32 %v1790, %v1861
        %1865 = vst [vmem:[#allocation2 + $0x38] sm:$0xff] %v1864
        %v1866 = vld [vmem:[#allocation2] sm:$0xff]
        %v1867 = vld [vmem:[#allocation2 + $0x8] sm:$0xff]
        %v1868 = vld [vmem:[#allocation2 + $0x10] sm:$0xff]
        %v1869 = vld [vmem:[#allocation2 + $0x18] sm:$0xff]
        %v1870 = vld [vmem:[#allocation2 + $0x20] sm:$0xff]
        %v1871 = vld [vmem:[#allocation2 + $0x28] sm:$0xff]
        %v1872 = vld [vmem:[#allocation2 + $0x30] sm:$0xff]
        %v1873 = vld [vmem:[#allocation2 + $0x38] sm:$0xff]
        %1874 = vxpose.xlu0.b32.start [1/16] %v1866, 128
        %1875 = vxpose.xlu0.b32.cont [2/16] %v1867, 128
        %1876 = vxpose.xlu0.b32.cont [3/16] %v1868, 128
        %1877 = vxpose.xlu0.b32.cont [4/16] %v1869, 128
        %1878 = vxpose.xlu0.b32.cont [5/16] %v1870, 128
        %1879 = vxpose.xlu0.b32.cont [6/16] %v1871, 128
        %1880 = vxpose.xlu0.b32.cont [7/16] %v1872, 128
        %1881 = vxpose.xlu0.b32.cont [8/16] %v1873, 128
        %1882 = vxpose.xlu0.b32.cont [9/16] 0.0, 128
        %1883 = vxpose.xlu0.b32.cont [10/16] 0.0, 128
        %1884 = vxpose.xlu0.b32.cont [11/16] 0.0, 128
        %1885 = vxpose.xlu0.b32.cont [12/16] 0.0, 128
        %1886 = vxpose.xlu0.b32.cont [13/16] 0.0, 128
        %1887 = vxpose.xlu0.b32.cont [14/16] 0.0, 128
        %1888 = vxpose.xlu0.b32.cont [15/16] 0.0, 128
        %1889 = vxpose.xlu0.b32.end [16/16] 0.0, 128
        %v1890 = vpop.trf.xlu0
        %v1891 = vpop.trf.xlu0
        %v1892 = vpop.trf.xlu0
        %v1893 = vpop.trf.xlu0
        %v1894 = vpop.trf.xlu0
        %v1895 = vpop.trf.xlu0
        %v1896 = vpop.trf.xlu0
        %v1897 = vpop.trf.xlu0
        %v1898 = vpop.trf.xlu0
        %v1899 = vpop.trf.xlu0
        %v1900 = vpop.trf.xlu0
        %v1901 = vpop.trf.xlu0
        %v1902 = vpop.trf.xlu0
        %v1903 = vpop.trf.xlu0
        %v1904 = vpop.trf.xlu0
        %v1905 = vpop.trf.xlu0
        %vm1906 = vcmask 523264
        %1907 = vst.msk [vmem:[%s270] sm:$0xff] %vm1906, %v1890
        %s1908 = sand.u32 %s142, 1
        %s1909 = scalar_lea.sflag [#allocation4], %s1908
        %s1910 = sand.u32 %s142, 1
        %s1911 = smul.addr %s1910, 8
        %s1912 = scalar_lea.vmem [#allocation3], %s1911
        // Predicated region
        $region37: #{tpu_custom_call.1} parent=35 // pred_check
          %p1913 = pneg %p152
        $region38: #{tpu_custom_call.1} parent=35 // pred_check_branch
          %1915 = sbr.rel (%p1913) target = $region40
        $region39: #{tpu_custom_call.1} parent=35 // pred_region
          %s1917 = ssub.s32 128, 128
          %1918 = vsyncadd %s1909, %s1917
          %s1919 = sadd.s32 %s23, %s22
          %s1920 = smul.addr %s1919, 128
          %s1921 = scalar_lea.hbm %s4, %s1920
          %s1923 = sshll.u32 %s1912, 4
          %s1924 = int_to_ptr.vmem [resolvable:$true] %s1923
          %1926 = dma.vmem_to_hbm [thread:$0]  %s1924, 128, %s1921, %s1909
        $region40: #{tpu_custom_call.1} parent=35 // pred_fallthru
          _
      $region36: #{tpu_custom_call.1} parent=5 // pred_fallthru
        _
      %p1927 = scmp.le.s32.totalorder 2, %s13
      // Predicated region
      $region41: #{tpu_custom_call.1} parent=5 // pred_check
        %p1928 = pneg %p1927
      $region42: #{tpu_custom_call.1} parent=5 // pred_check_branch
        %1930 = sbr.rel (%p1928) target = $region44
      $region43: #{tpu_custom_call.1} parent=5 // pred_region
        %s1931 = ssub.s32 %s13, 2
        // Predicated region
        $region45: #{tpu_custom_call.1} parent=43 // pred_check
          %p1932 = pneg %p158
        $region46: #{tpu_custom_call.1} parent=43 // pred_check_branch
          %1934 = sbr.rel (%p1932) target = $region48
        $region47: #{tpu_custom_call.1} parent=43 // pred_region
          %s1935 = sand.u32 %s143, 1
          %s1936 = scalar_lea.sflag [#allocation4], %s1935
          %s1937 = sand.u32 %s143, 1
          %s1938 = smul.addr %s1937, 8
          %s1939 = scalar_lea.vmem [#allocation3], %s1938
          %1940 = dma.done %s1936, 128
        $region48: #{tpu_custom_call.1} parent=43 // pred_fallthru
          _
      $region44: #{tpu_custom_call.1} parent=5 // pred_fallthru
        _
    $region6: #{tpu_custom_call.1} parent=1 // loop_footer
      %s17 = sadd.s32 1, %s13
    $region7: #{tpu_custom_call.1} parent=1 // loop_footer_branch
      %12 = sbr.rel target = $region3
    $region8: #{tpu_custom_call.1} parent=1 // loop_exit
      _
    %1941 = vsyncpa [#allocation4], 1
    %s1942 = scalar_lea.sflag [#allocation4], 1
    %1943 = vsyncpa %s1942, 1

// kernel: tpu_custom_call.1
$region0: #{tpu_custom_call.1}
  #allocation0 [shape = 'u32[]', space=smem, size = 0x4, offset = 0x4, fixed_abs, tag = 'smem constant byte address 0x4 - core index']
  #allocation1 [shape = 'u32[144,128]{1,0:T(1,128)}', space=vmem, size = 0x12000, scoped, tag = 'internal scratch']
  #allocation2 [shape = 'f32[64,128]{1,0:T(8,128)}', space=vmem, size = 0x8000, scoped, tag = 'scratch operand']
  %s0 = inlined_call_operand.vmem [shape: f32[2,9,2,9,8], index: 0, kind: input, shape index: {}]
  %s1 = inlined_call_operand.vmem [shape: f32[2,9,2,9,8], index: 1, kind: input, shape index: {}]
  %s2 = inlined_call_operand.vmem [shape: f32[8,8,128], index: 2, kind: input, shape index: {}]
  %s3 = inlined_call_operand.vmem [shape: f32[1,128], index: 3, kind: input, shape index: {}]
  %s4 = inlined_call_operand.hbm [shape: f32[2,1,8,64], index: 4, kind: output, shape index: {}]
  %s5 = sld [smem:[#allocation0]]
  $region49: #{tpu_custom_call.1} parent=0
    _
  %s7 = ssub.s32 1, %s5
  %s8 = scalar_select 0, %s7, %s5
  $region1: #{tpu_custom_call.1} parent=0
    #allocation3 [shape = 'u8[8192]{0}', space=vmem, size = 0x2000, scoped, tag = 'output window, operand 0']
    #allocation4 [shape = 's32[2]{0}', space=sflag, size = 0x8, scoped, tag = 'scoped memory for tpu_custom_call.1']
    %9 = vsyncpa [#allocation4], 0
    %s10 = scalar_lea.sflag [#allocation4], 1
    %11 = vsyncpa %s10, 0
    loop: start=0, step=1, limit=4
    $region2: #{tpu_custom_call.1} parent=1 // loop_pre_header
      _
    $region3: #{tpu_custom_call.1} parent=1 // loop_header
      %s13 = sphi 0, %s17
      %p14 = scmp.ge.s32.totalorder %s13, 4
      %s20 = sphi 0, %s32
      %s21 = sphi 0, %s28
      %s22 = sphi 0, %s20
      %s23 = sphi 0, %s21
      %s24 = sphi 0, %s22
      %s25 = sphi 0, %s23
      %s37 = sphi 0, %s39
      %s40 = sphi 0, %s37
      %s41 = sphi 0, %s40
      %s57 = sphi 0, %s41
      %s69 = sphi 0, %s71
      %s72 = sphi 0, %s69
      %s73 = sphi 0, %s72
      %s89 = sphi 0, %s73
      %s93 = sphi 0, %s93
      %s95 = sphi 0, %s93
      %s96 = sphi 0, %s95
      %s110 = sphi 0, %s96
      %s114 = sphi 0, %s114
      %s116 = sphi 0, %s114
      %s117 = sphi 0, %s116
      %s131 = sphi 0, %s117
      %s139 = sphi 0, %s141
      %s142 = sphi 0, %s139
      %s143 = sphi 0, %s142
      %s159 = sphi 0, %s143
    $region4: #{tpu_custom_call.1} parent=1 // loop_header_branch
      %16 = sbr.rel (%p14) target = $region8
    $region5: #{tpu_custom_call.1} parent=1 // loop_body
      %s18 = ssub.s32 %s13, 1
      %s19 = ssub.s32 %s13, 2
      %s26 = sadd.s32 1, %s21
      %p27 = scmp.ge.s32.totalorder %s26, 1
      %s28 = scalar_select %p27, 0, %s26
      %s29 = sadd.s32 1, %s20
      %s30 = scalar_select %p27, %s29, %s20
      %p31 = scmp.ge.s32.totalorder %s30, 2
      %s32 = scalar_select %p31, 0, %s30
      %s33 = ssub.s32 %s20, %s32
      %s34 = ssub.s32 %s21, %s28
      %s35 = sor.u32 %s33, %s34
      %p36 = scmp.eq.s32.totalorder %s35, 0
      %s38 = sadd.s32 %s37, 1
      %s39 = scalar_select %p36, %s37, %s38
      %p42 = pneg %p36
      %p43 = scmp.eq.s32.totalorder %s13, 1
      %p44 = por %p42, %p43
      %p45 = scmp.ne.s32.totalorder %s37, %s40
      %p46 = scmp.eq.s32.totalorder %s13, 0
      %p47 = por %p45, %p46
      %p48 = scmp.ne.s32.totalorder %s37, %s40
      %p49 = scmp.eq.s32.totalorder %s18, 1
      %p50 = por %p48, %p49
      %p51 = scmp.ne.s32.totalorder %s40, %s41
      %p52 = scmp.eq.s32.totalorder %s18, 0
      %p53 = por %p51, %p52
      %p54 = scmp.ne.s32.totalorder %s40, %s41
      %p55 = scmp.eq.s32.totalorder %s19, 1
      %p56 = por %p54, %p55
      %p58 = scmp.ne.s32.totalorder %s41, %s57
      %p59 = scmp.eq.s32.totalorder %s19, 0
      %p60 = por %p58, %p59
      %s61 = smul.u32 %s21, 8
      %s62 = sadd.s32 %s61, 8
      %s63 = smul.u32 %s28, 8
      %s64 = sadd.s32 %s63, 8
      %s65 = ssub.s32 %s20, %s32
      %s66 = ssub.s32 %s62, %s64
      %s67 = sor.u32 %s65, %s66
      %p68 = scmp.eq.s32.totalorder %s67, 0
      %s70 = sadd.s32 %s69, 1
      %s71 = scalar_select %p68, %s69, %s70
      %p74 = pneg %p68
      %p75 = scmp.eq.s32.totalorder %s13, 1
      %p76 = por %p74, %p75
      %p77 = scmp.ne.s32.totalorder %s69, %s72
      %p78 = scmp.eq.s32.totalorder %s13, 0
      %p79 = por %p77, %p78
      %p80 = scmp.ne.s32.totalorder %s69, %s72
      %p81 = scmp.eq.s32.totalorder %s18, 1
      %p82 = por %p80, %p81
      %p83 = scmp.ne.s32.totalorder %s72, %s73
      %p84 = scmp.eq.s32.totalorder %s18, 0
      %p85 = por %p83, %p84
      %p86 = scmp.ne.s32.totalorder %s72, %s73
      %p87 = scmp.eq.s32.totalorder %s19, 1
      %p88 = por %p86, %p87
      %p90 = scmp.ne.s32.totalorder %s73, %s89
      %p91 = scmp.eq.s32.totalorder %s19, 0
      %p92 = por %p90, %p91
      %s94 = sadd.s32 %s93, 1
      %p97 = scmp.eq.s32.totalorder %s13, 1
      %p98 = scmp.ne.s32.totalorder %s93, %s95
      %p99 = scmp.eq.s32.totalorder %s13, 0
      %p100 = por %p98, %p99
      %p101 = scmp.ne.s32.totalorder %s93, %s95
      %p102 = scmp.eq.s32.totalorder %s18, 1
      %p103 = por %p101, %p102
      %p104 = scmp.ne.s32.totalorder %s95, %s96
      %p105 = scmp.eq.s32.totalorder %s18, 0
      %p106 = por %p104, %p105
      %p107 = scmp.ne.s32.totalorder %s95, %s96
      %p108 = scmp.eq.s32.totalorder %s19, 1
      %p109 = por %p107, %p108
      %p111 = scmp.ne.s32.totalorder %s96, %s110
      %p112 = scmp.eq.s32.totalorder %s19, 0
      %p113 = por %p111, %p112
      %s115 = sadd.s32 %s114, 1
      %p118 = scmp.eq.s32.totalorder %s13, 1
      %p119 = scmp.ne.s32.totalorder %s114, %s116
      %p120 = scmp.eq.s32.totalorder %s13, 0
      %p121 = por %p119, %p120
      %p122 = scmp.ne.s32.totalorder %s114, %s116
      %p123 = scmp.eq.s32.totalorder %s18, 1
      %p124 = por %p122, %p123
      %p125 = scmp.ne.s32.totalorder %s116, %s117
      %p126 = scmp.eq.s32.totalorder %s18, 0
      %p127 = por %p125, %p126
      %p128 = scmp.ne.s32.totalorder %s116, %s117
      %p129 = scmp.eq.s32.totalorder %s19, 1
      %p130 = por %p128, %p129
      %p132 = scmp.ne.s32.totalorder %s117, %s131
      %p133 = scmp.eq.s32.totalorder %s19, 0
      %p134 = por %p132, %p133
      %s135 = ssub.s32 %s20, %s32
      %s136 = ssub.s32 %s21, %s28
      %s137 = sor.u32 %s135, %s136
      %p138 = scmp.eq.s32.totalorder %s137, 0
      %s140 = sadd.s32 %s139, 1
      %s141 = scalar_select %p138, %s139, %s140
      %p144 = pneg %p138
      %p145 = scmp.eq.s32.totalorder %s13, 1
      %p146 = por %p144, %p145
      %p147 = scmp.ne.s32.totalorder %s139, %s142
      %p148 = scmp.eq.s32.totalorder %s13, 0
      %p149 = por %p147, %p148
      %p150 = scmp.ne.s32.totalorder %s139, %s142
      %p151 = scmp.eq.s32.totalorder %s18, 1
      %p152 = por %p150, %p151
      %p153 = scmp.ne.s32.totalorder %s142, %s143
      %p154 = scmp.eq.s32.totalorder %s18, 0
      %p155 = por %p153, %p154
      %p156 = scmp.ne.s32.totalorder %s142, %s143
      %p157 = scmp.eq.s32.totalorder %s19, 1
      %p158 = por %p156, %p157
      %p160 = scmp.ne.s32.totalorder %s143, %s159
      %p161 = scmp.eq.s32.totalorder %s19, 0
      %p162 = por %p160, %p161
      %p163 = scmp.le.s32.totalorder 1, %s13
      %p164 = scmp.lt.s32.totalorder %s13, 3
      %p165 = pnand %p163, %p164
      %p166 = pneg %p165
      // Predicated region
      $region9: #{tpu_custom_call.1} parent=5 // pred_check
        _
      $region10: #{tpu_custom_call.1} parent=5 // pred_check_branch
        %168 = sbr.rel (%p165) target = $region12
      $region11: #{tpu_custom_call.1} parent=5 // pred_region
        %s169 = ssub.s32 %s13, 1
        // Predicated region
        $region13: #{tpu_custom_call.1} parent=11 // pred_check
          %p170 = pneg %p106
        $region14: #{tpu_custom_call.1} parent=11 // pred_check_branch
          %172 = sbr.rel (%p170) target = $region16
        $region15: #{tpu_custom_call.1} parent=11 // pred_region
          _
        $region16: #{tpu_custom_call.1} parent=11 // pred_fallthru
          _
        // Predicated region
        $region17: #{tpu_custom_call.1} parent=11 // pred_check
          %p173 = pneg %p127
        $region18: #{tpu_custom_call.1} parent=11 // pred_check_branch
          %175 = sbr.rel (%p173) target = $region20
        $region19: #{tpu_custom_call.1} parent=11 // pred_region
          _
        $region20: #{tpu_custom_call.1} parent=11 // pred_fallthru
          _
      $region12: #{tpu_custom_call.1} parent=5 // pred_fallthru
        _
      %p176 = scmp.lt.s32.totalorder %s13, 2
      // Predicated region
      $region21: #{tpu_custom_call.1} parent=5 // pred_check
        %p177 = pneg %p176
      $region22: #{tpu_custom_call.1} parent=5 // pred_check_branch
        %179 = sbr.rel (%p177) target = $region24
      $region23: #{tpu_custom_call.1} parent=5 // pred_region
        // Predicated region
        $region25: #{tpu_custom_call.1} parent=23 // pred_check
          %p180 = pneg %p47
        $region26: #{tpu_custom_call.1} parent=23 // pred_check_branch
          %182 = sbr.rel (%p180) target = $region28
        $region27: #{tpu_custom_call.1} parent=23 // pred_region
          %s183 = smul.u32 8, %s21
          %s184 = ssub.s32 9, %s183
          %p185 = scmp.lt.s32.totalorder %s184, 8
          %s186 = scalar_select %p185, %s184, 8
          %s187 = smul.u32 128, %s186
          %s188 = smul.u32 %s187, 2
          %s189 = smul.u32 %s188, 2
          %p190 = scmp.lt.s32.totalorder %s20, 1
          %s191 = scalar_select %p190, %s20, 1
          %p192 = scmp.lt.s32.totalorder %s183, 8
          %s193 = scalar_select %p192, %s183, 8
          %s194 = smul.addr %s193, 4
          %s195 = smul.addr %s191, 36
          %s196 = sadd.s32 %s194, %s195
          %s197 = smul.addr %s196, 8
          %s198 = scalar_lea.vmem %s0, %s197
          %s199 = smul.u32 8, %s21
          %s200 = ssub.s32 9, %s199
          %p201 = scmp.lt.s32.totalorder %s200, 8
          %s202 = scalar_select %p201, %s200, 8
          %s203 = smul.u32 128, %s202
          %s204 = smul.u32 %s203, 2
          %s205 = smul.u32 %s204, 2
        $region28: #{tpu_custom_call.1} parent=23 // pred_fallthru
          _
        // Predicated region
        $region29: #{tpu_custom_call.1} parent=23 // pred_check
          %p206 = pneg %p79
        $region30: #{tpu_custom_call.1} parent=23 // pred_check_branch
          %208 = sbr.rel (%p206) target = $region32
        $region31: #{tpu_custom_call.1} parent=23 // pred_region
          %s209 = smul.u32 %s21, 8
          %s210 = sadd.s32 %s209, 8
          %p211 = scmp.lt.s32.totalorder %s20, 1
          %s212 = scalar_select %p211, %s20, 1
          %p213 = scmp.lt.s32.totalorder %s210, 8
          %s214 = scalar_select %p213, %s210, 8
          %s215 = smul.addr %s214, 4
          %s216 = smul.addr %s212, 36
          %s217 = sadd.s32 %s215, %s216
          %s218 = smul.addr %s217, 8
          %s219 = scalar_lea.vmem %s1, %s218
          %s220 = smul.u32 %s21, 8
          %s221 = sadd.s32 %s220, 8
        $region32: #{tpu_custom_call.1} parent=23 // pred_fallthru
          _
      $region24: #{tpu_custom_call.1} parent=5 // pred_fallthru
        _
      %p222 = scmp.le.s32.totalorder 1, %s13
      %p223 = scmp.lt.s32.totalorder %s13, 3
      %p224 = pnand %p222, %p223
      %p225 = pneg %p224
      // Predicated region
      $region33: #{tpu_custom_call.1} parent=5 // pred_check
        _
      $region34: #{tpu_custom_call.1} parent=5 // pred_check_branch
        %227 = sbr.rel (%p224) target = $region36
      $region35: #{tpu_custom_call.1} parent=5 // pred_region
        %s228 = ssub.s32 %s13, 1
        %s229 = smul.u32 8, %s23
        %s230 = ssub.s32 9, %s229
        %p231 = scmp.lt.s32.totalorder %s230, 8
        %s232 = scalar_select %p231, %s230, 8
        %s233 = smul.u32 128, %s232
        %s234 = smul.u32 %s233, 2
        %s235 = smul.u32 %s234, 2
        %p236 = scmp.lt.s32.totalorder %s22, 1
        %s237 = scalar_select %p236, %s22, 1
        %p238 = scmp.lt.s32.totalorder %s229, 8
        %s239 = scalar_select %p238, %s229, 8
        %s240 = smul.addr %s239, 4
        %s241 = smul.addr %s237, 36
        %s242 = sadd.s32 %s240, %s241
        %s243 = smul.addr %s242, 8
        %s244 = scalar_lea.vmem %s0, %s243
        %p245 = pneg %p53
        %p246 = pneg %p50
        %s247 = smul.u32 %s23, 8
        %s248 = sadd.s32 %s247, 8
        %p249 = scmp.lt.s32.totalorder %s22, 1
        %s250 = scalar_select %p249, %s22, 1
        %p251 = scmp.lt.s32.totalorder %s248, 8
        %s252 = scalar_select %p251, %s248, 8
        %s253 = smul.addr %s252, 4
        %s254 = smul.addr %s250, 36
        %s255 = sadd.s32 %s253, %s254
        %s256 = smul.addr %s255, 8
        %s257 = scalar_lea.vmem %s1, %s256
        %p258 = pneg %p85
        %p259 = pneg %p82
        %p260 = pneg %p106
        %p261 = pneg %p103
        %p262 = pneg %p127
        %p263 = pneg %p124
        %p264 = pneg %p155
        %p265 = pneg %p152
        %s266 = sand.u32 %s142, 1
        %s267 = scalar_lea.sflag [#allocation4], %s266
        %s268 = sand.u32 %s142, 1
        %s269 = smul.addr %s268, 8
        %s270 = scalar_lea.vmem [#allocation3], %s269
        %s271 = smul.u32 8, %s23
        %s272 = ssub.s32 9, %s271
        %p273 = scmp.lt.s32.totalorder %s272, 8
        %s274 = scalar_select %p273, %s272, 8
        %s275 = smul.u32 128, %s274
        %s276 = smul.u32 %s275, 2
        %s277 = smul.u32 %s276, 2
        %p278 = scmp.lt.s32.totalorder %s22, 1
        %s279 = scalar_select %p278, %s22, 1
        %p280 = scmp.lt.s32.totalorder %s271, 8
        %s281 = scalar_select %p280, %s271, 8
        %s282 = smul.addr %s281, 4
        %s283 = smul.addr %s279, 36
        %s284 = sadd.s32 %s282, %s283
        %s285 = smul.addr %s284, 8
        %s286 = scalar_lea.vmem %s0, %s285
        %s287 = smul.u32 8, %s23
        %s288 = ssub.s32 9, %s287
        %p289 = scmp.lt.s32.totalorder %s288, 8
        %s290 = scalar_select %p289, %s288, 8
        %s291 = smul.u32 128, %s290
        %s292 = smul.u32 %s291, 2
        %s293 = smul.u32 %s292, 2
        %s294 = smul.u32 %s23, 8
        %s295 = sadd.s32 %s294, 8
        %p296 = scmp.lt.s32.totalorder %s22, 1
        %s297 = scalar_select %p296, %s22, 1
        %p298 = scmp.lt.s32.totalorder %s295, 8
        %s299 = scalar_select %p298, %s295, 8
        %s300 = smul.addr %s299, 4
        %s301 = smul.addr %s297, 36
        %s302 = sadd.s32 %s300, %s301
        %s303 = smul.addr %s302, 8
        %s304 = scalar_lea.vmem %s1, %s303
        %s305 = smul.u32 %s23, 8
        %s306 = sadd.s32 %s305, 8
        %v307 = vld [vmem:[%s2] sm:$0xff]
        %v308 = vld [vmem:[%s286] sm:$0xff]
        %v309 = vld [vmem:[%s286 + $0x20] sm:$0xff]
        %v310 = vld [vmem:[%s286 + $0x40] sm:$0xff]
        %v311 = vld [vmem:[%s286 + $0x60] sm:$0xff]
        %v312 = vld [vmem:[%s286 + $0x80] sm:$0xff]
        %v313 = vld [vmem:[%s286 + $0xa0] sm:$0xff]
        %v314 = vld [vmem:[%s286 + $0xc0] sm:$0xff]
        %v315 = vld [vmem:[%s286 + $0xe0] sm:$0xff]
        %v316 = vld [vmem:[%s3] sm:$0x1]
        %v318 = vlaneseq
        %v319 = vshrl.u32 %v318, 7
        %v320 = vsub.s32 0, %v319
        %v321 = vrot.slane %v316, %v320
        %vm323 = vcmask 64512
        %v325 = vsel %vm323, %v308, 0
        %v328 = vsel %vm323, %v309, 0
        %v331 = vsel %vm323, %v310, 0
        %v334 = vsel %vm323, %v311, 0
        %v337 = vsel %vm323, %v312, 0
        %v340 = vsel %vm323, %v313, 0
        %v343 = vsel %vm323, %v314, 0
        %v346 = vsel %vm323, %v315, 0
        %348 = vmatprep.subr.mxu0 0.0
        %349 = vmatpush1.msra.mxu0 0.0
        %350 = vmatprep.subr.mxu0 0.0
        %351 = vmatpush1.msra.mxu0 0.0
        %352 = vmatprep.subr.mxu0 0.0
        %353 = vmatpush1.msra.mxu0 0.0
        %354 = vmatprep.subr.mxu0 0.0
        %355 = vmatpush1.msra.mxu0 0.0
        %356 = vmatprep.subr.mxu0 0.0
        %357 = vmatpush1.msra.mxu0 0.0
        %358 = vmatprep.subr.mxu0 0.0
        %359 = vmatpush1.msra.mxu0 0.0
        %360 = vmatprep.subr.mxu0 0.0
        %361 = vmatpush1.msra.mxu0 0.0
        %362 = vmatprep.subr.mxu0 0.0
        %363 = vmatpush1.msra.mxu0 0.0
        %364 = vmatprep.subr.mxu0 0.0
        %365 = vmatpush1.msra.mxu0 0.0
        %366 = vmatprep.subr.mxu0 0.0
        %367 = vmatpush1.msra.mxu0 0.0
        %368 = vmatprep.subr.mxu0 0.0
        %369 = vmatpush1.msra.mxu0 0.0
        %370 = vmatprep.subr.mxu0 0.0
        %371 = vmatpush1.msra.mxu0 0.0
        %372 = vmatprep.subr.mxu0 0.0
        %373 = vmatpush1.msra.mxu0 0.0
        %374 = vmatprep.subr.mxu0 0.0
        %375 = vmatpush1.msra.mxu0 0.0
        %376 = vmatprep.subr.mxu0 0.0
        %377 = vmatpush1.msra.mxu0 0.0
        %378 = vmatprep.subr.mxu0 0.0
        %379 = vmatpush1.msra.mxu0 %v307
        %380 = vmatprep.subr.mxu0 0.0
        %381 = vmatpush2.msra.mxu0 0.0
        %382 = vmatprep.subr.mxu0 0.0
        %383 = vmatpush2.msra.mxu0 0.0
        %384 = vmatprep.subr.mxu0 0.0
        %385 = vmatpush2.msra.mxu0 0.0
        %386 = vmatprep.subr.mxu0 0.0
        %387 = vmatpush2.msra.mxu0 0.0
        %388 = vmatprep.subr.mxu0 0.0
        %389 = vmatpush2.msra.mxu0 0.0
        %390 = vmatprep.subr.mxu0 0.0
        %391 = vmatpush2.msra.mxu0 0.0
        %392 = vmatprep.subr.mxu0 0.0
        %393 = vmatpush2.msra.mxu0 0.0
        %394 = vmatprep.subr.mxu0 0.0
        %395 = vmatpush2.msra.mxu0 0.0
        %396 = vmatprep.subr.mxu0 0.0
        %397 = vmatpush2.msra.mxu0 0.0
        %398 = vmatprep.subr.mxu0 0.0
        %399 = vmatpush2.msra.mxu0 0.0
        %400 = vmatprep.subr.mxu0 0.0
        %401 = vmatpush2.msra.mxu0 0.0
        %402 = vmatprep.subr.mxu0 0.0
        %403 = vmatpush2.msra.mxu0 0.0
        %404 = vmatprep.subr.mxu0 0.0
        %405 = vmatpush2.msra.mxu0 0.0
        %406 = vmatprep.subr.mxu0 0.0
        %407 = vmatpush2.msra.mxu0 0.0
        %408 = vmatprep.subr.mxu0 0.0
        %409 = vmatpush2.msra.mxu0 0.0
        %410 = vmatprep.subr.mxu0 0.0
        %411 = vmatpush2.msra.mxu0 0.0
        %412 = vmatprep.mubr.f32.mxu0 0.0
        %413 = vmatmul.mubr.f32.gmra.mxu0 %v325
        %v414 = vpop.f32.mrf.mxu0
        %v415 = vadd.f32 %v321, %v414
        %v416 = vpop.f32.mrf.mxu0
        %417 = vmatprep.mubr.f32.mxu0 0.0
        %418 = vmatmul.mubr.f32.gmra.mxu0 %v328
        %v419 = vpop.f32.mrf.mxu0
        %v420 = vadd.f32 %v321, %v419
        %v421 = vpop.f32.mrf.mxu0
        %422 = vmatprep.mubr.f32.mxu0 0.0
        %423 = vmatmul.mubr.f32.gmra.mxu0 %v331
        %v424 = vpop.f32.mrf.mxu0
        %v425 = vadd.f32 %v321, %v424
        %v426 = vpop.f32.mrf.mxu0
        %427 = vmatprep.mubr.f32.mxu0 0.0
        %428 = vmatmul.mubr.f32.gmra.mxu0 %v334
        %v429 = vpop.f32.mrf.mxu0
        %v430 = vadd.f32 %v321, %v429
        %v431 = vpop.f32.mrf.mxu0
        %432 = vmatprep.mubr.f32.mxu0 0.0
        %433 = vmatmul.mubr.f32.gmra.mxu0 %v337
        %v434 = vpop.f32.mrf.mxu0
        %v435 = vadd.f32 %v321, %v434
        %v436 = vpop.f32.mrf.mxu0
        %437 = vmatprep.mubr.f32.mxu0 0.0
        %438 = vmatmul.mubr.f32.gmra.mxu0 %v340
        %v439 = vpop.f32.mrf.mxu0
        %v440 = vadd.f32 %v321, %v439
        %v441 = vpop.f32.mrf.mxu0
        %442 = vmatprep.mubr.f32.mxu0 0.0
        %443 = vmatmul.mubr.f32.gmra.mxu0 %v343
        %v444 = vpop.f32.mrf.mxu0
        %v445 = vadd.f32 %v321, %v444
        %v446 = vpop.f32.mrf.mxu0
        %447 = vmatprep.mubr.f32.mxu0 0.0
        %448 = vmatmul.mubr.f32.gmra.mxu0 %v346
        %v449 = vpop.f32.mrf.mxu0
        %v450 = vadd.f32 %v321, %v449
        %v451 = vpop.f32.mrf.mxu0
        %452 = vdwg.mxu0
        %453 = vst [vmem:[#allocation2] sm:$0xff] %v415
        %454 = vst [vmem:[#allocation2 + $0x8] sm:$0xff] %v420
        %455 = vst [vmem:[#allocation2 + $0x10] sm:$0xff] %v425
        %456 = vst [vmem:[#allocation2 + $0x18] sm:$0xff] %v430
        %457 = vst [vmem:[#allocation2 + $0x20] sm:$0xff] %v435
        %458 = vst [vmem:[#allocation2 + $0x28] sm:$0xff] %v440
        %459 = vst [vmem:[#allocation2 + $0x30] sm:$0xff] %v445
        %460 = vst [vmem:[#allocation2 + $0x38] sm:$0xff] %v450
        %s461 = scalar_lea.vmem %s2, 8
        %v462 = vld [vmem:[%s461] sm:$0xff]
        %v463 = vld [vmem:[%s286 + $0x1] sm:$0xff]
        %v464 = vld [vmem:[%s286 + $0x21] sm:$0xff]
        %v465 = vld [vmem:[%s286 + $0x41] sm:$0xff]
        %v466 = vld [vmem:[%s286 + $0x61] sm:$0xff]
        %v467 = vld [vmem:[%s286 + $0x81] sm:$0xff]
        %v468 = vld [vmem:[%s286 + $0xa1] sm:$0xff]
        %v469 = vld [vmem:[%s286 + $0xc1] sm:$0xff]
        %v470 = vld [vmem:[%s286 + $0xe1] sm:$0xff]
        %v472 = vsel %vm323, %v463, 0
        %v475 = vsel %vm323, %v464, 0
        %v478 = vsel %vm323, %v465, 0
        %v481 = vsel %vm323, %v466, 0
        %v484 = vsel %vm323, %v467, 0
        %v487 = vsel %vm323, %v468, 0
        %v490 = vsel %vm323, %v469, 0
        %v493 = vsel %vm323, %v470, 0
        %495 = vmatprep.subr.mxu0 0.0
        %496 = vmatpush1.msra.mxu0 0.0
        %497 = vmatprep.subr.mxu0 0.0
        %498 = vmatpush1.msra.mxu0 0.0
        %499 = vmatprep.subr.mxu0 0.0
        %500 = vmatpush1.msra.mxu0 0.0
        %501 = vmatprep.subr.mxu0 0.0
        %502 = vmatpush1.msra.mxu0 0.0
        %503 = vmatprep.subr.mxu0 0.0
        %504 = vmatpush1.msra.mxu0 0.0
        %505 = vmatprep.subr.mxu0 0.0
        %506 = vmatpush1.msra.mxu0 0.0
        %507 = vmatprep.subr.mxu0 0.0
        %508 = vmatpush1.msra.mxu0 0.0
        %509 = vmatprep.subr.mxu0 0.0
        %510 = vmatpush1.msra.mxu0 0.0
        %511 = vmatprep.subr.mxu0 0.0
        %512 = vmatpush1.msra.mxu0 0.0
        %513 = vmatprep.subr.mxu0 0.0
        %514 = vmatpush1.msra.mxu0 0.0
        %515 = vmatprep.subr.mxu0 0.0
        %516 = vmatpush1.msra.mxu0 0.0
        %517 = vmatprep.subr.mxu0 0.0
        %518 = vmatpush1.msra.mxu0 0.0
        %519 = vmatprep.subr.mxu0 0.0
        %520 = vmatpush1.msra.mxu0 0.0
        %521 = vmatprep.subr.mxu0 0.0
        %522 = vmatpush1.msra.mxu0 0.0
        %523 = vmatprep.subr.mxu0 0.0
        %524 = vmatpush1.msra.mxu0 0.0
        %525 = vmatprep.subr.mxu0 0.0
        %526 = vmatpush1.msra.mxu0 %v462
        %527 = vmatprep.subr.mxu0 0.0
        %528 = vmatpush2.msra.mxu0 0.0
        %529 = vmatprep.subr.mxu0 0.0
        %530 = vmatpush2.msra.mxu0 0.0
        %531 = vmatprep.subr.mxu0 0.0
        %532 = vmatpush2.msra.mxu0 0.0
        %533 = vmatprep.subr.mxu0 0.0
        %534 = vmatpush2.msra.mxu0 0.0
        %535 = vmatprep.subr.mxu0 0.0
        %536 = vmatpush2.msra.mxu0 0.0
        %537 = vmatprep.subr.mxu0 0.0
        %538 = vmatpush2.msra.mxu0 0.0
        %539 = vmatprep.subr.mxu0 0.0
        %540 = vmatpush2.msra.mxu0 0.0
        %541 = vmatprep.subr.mxu0 0.0
        %542 = vmatpush2.msra.mxu0 0.0
        %543 = vmatprep.subr.mxu0 0.0
        %544 = vmatpush2.msra.mxu0 0.0
        %545 = vmatprep.subr.mxu0 0.0
        %546 = vmatpush2.msra.mxu0 0.0
        %547 = vmatprep.subr.mxu0 0.0
        %548 = vmatpush2.msra.mxu0 0.0
        %549 = vmatprep.subr.mxu0 0.0
        %550 = vmatpush2.msra.mxu0 0.0
        %551 = vmatprep.subr.mxu0 0.0
        %552 = vmatpush2.msra.mxu0 0.0
        %553 = vmatprep.subr.mxu0 0.0
        %554 = vmatpush2.msra.mxu0 0.0
        %555 = vmatprep.subr.mxu0 0.0
        %556 = vmatpush2.msra.mxu0 0.0
        %557 = vmatprep.subr.mxu0 0.0
        %558 = vmatpush2.msra.mxu0 0.0
        %559 = vmatprep.mubr.f32.mxu0 0.0
        %560 = vmatmul.mubr.f32.gmra.mxu0 %v472
        %v561 = vpop.f32.mrf.mxu0
        %v562 = vadd.f32 0.0, %v561
        %v563 = vpop.f32.mrf.mxu0
        %564 = vmatprep.mubr.f32.mxu0 0.0
        %565 = vmatmul.mubr.f32.gmra.mxu0 %v475
        %v566 = vpop.f32.mrf.mxu0
        %v567 = vadd.f32 0.0, %v566
        %v568 = vpop.f32.mrf.mxu0
        %569 = vmatprep.mubr.f32.mxu0 0.0
        %570 = vmatmul.mubr.f32.gmra.mxu0 %v478
        %v571 = vpop.f32.mrf.mxu0
        %v572 = vadd.f32 0.0, %v571
        %v573 = vpop.f32.mrf.mxu0
        %574 = vmatprep.mubr.f32.mxu0 0.0
        %575 = vmatmul.mubr.f32.gmra.mxu0 %v481
        %v576 = vpop.f32.mrf.mxu0
        %v577 = vadd.f32 0.0, %v576
        %v578 = vpop.f32.mrf.mxu0
        %579 = vmatprep.mubr.f32.mxu0 0.0
        %580 = vmatmul.mubr.f32.gmra.mxu0 %v484
        %v581 = vpop.f32.mrf.mxu0
        %v582 = vadd.f32 0.0, %v581
        %v583 = vpop.f32.mrf.mxu0
        %584 = vmatprep.mubr.f32.mxu0 0.0
        %585 = vmatmul.mubr.f32.gmra.mxu0 %v487
        %v586 = vpop.f32.mrf.mxu0
        %v587 = vadd.f32 0.0, %v586
        %v588 = vpop.f32.mrf.mxu0
        %589 = vmatprep.mubr.f32.mxu0 0.0
        %590 = vmatmul.mubr.f32.gmra.mxu0 %v490
        %v591 = vpop.f32.mrf.mxu0
        %v592 = vadd.f32 0.0, %v591
        %v593 = vpop.f32.mrf.mxu0
        %594 = vmatprep.mubr.f32.mxu0 0.0
        %595 = vmatmul.mubr.f32.gmra.mxu0 %v493
        %v596 = vpop.f32.mrf.mxu0
        %v597 = vadd.f32 0.0, %v596
        %v598 = vpop.f32.mrf.mxu0
        %599 = vdwg.mxu0
        %v600 = vld [vmem:[#allocation2] sm:$0xff]
        %v601 = vld [vmem:[#allocation2 + $0x8] sm:$0xff]
        %v602 = vld [vmem:[#allocation2 + $0x10] sm:$0xff]
        %v603 = vld [vmem:[#allocation2 + $0x18] sm:$0xff]
        %v604 = vld [vmem:[#allocation2 + $0x20] sm:$0xff]
        %v605 = vld [vmem:[#allocation2 + $0x28] sm:$0xff]
        %v606 = vld [vmem:[#allocation2 + $0x30] sm:$0xff]
        %v607 = vld [vmem:[#allocation2 + $0x38] sm:$0xff]
        %v608 = vadd.f32 %v600, %v562
        %v609 = vadd.f32 %v601, %v567
        %v610 = vadd.f32 %v602, %v572
        %v611 = vadd.f32 %v603, %v577
        %v612 = vadd.f32 %v604, %v582
        %v613 = vadd.f32 %v605, %v587
        %v614 = vadd.f32 %v606, %v592
        %v615 = vadd.f32 %v607, %v597
        %616 = vst [vmem:[#allocation2] sm:$0xff] %v608
        %617 = vst [vmem:[#allocation2 + $0x8] sm:$0xff] %v609
        %618 = vst [vmem:[#allocation2 + $0x10] sm:$0xff] %v610
        %619 = vst [vmem:[#allocation2 + $0x18] sm:$0xff] %v611
        %620 = vst [vmem:[#allocation2 + $0x20] sm:$0xff] %v612
        %621 = vst [vmem:[#allocation2 + $0x28] sm:$0xff] %v613
        %622 = vst [vmem:[#allocation2 + $0x30] sm:$0xff] %v614
        %623 = vst [vmem:[#allocation2 + $0x38] sm:$0xff] %v615
        %s624 = scalar_lea.vmem %s2, 16
        %v625 = vld [vmem:[%s624] sm:$0xff]
        %s626 = scalar_lea.vmem %s286, 16
        %v627 = vld [vmem:[%s626] sm:$0xff]
        %v628 = vld [vmem:[%s626 + $0x20] sm:$0xff]
        %v629 = vld [vmem:[%s626 + $0x40] sm:$0xff]
        %v630 = vld [vmem:[%s626 + $0x60] sm:$0xff]
        %v631 = vld [vmem:[%s626 + $0x80] sm:$0xff]
        %v632 = vld [vmem:[%s626 + $0xa0] sm:$0xff]
        %v633 = vld [vmem:[%s626 + $0xc0] sm:$0xff]
        %v634 = vld [vmem:[%s626 + $0xe0] sm:$0xff]
        %v636 = vsel %vm323, %v627, 0
        %v639 = vsel %vm323, %v628, 0
        %v642 = vsel %vm323, %v629, 0
        %v645 = vsel %vm323, %v630, 0
        %v648 = vsel %vm323, %v631, 0
        %v651 = vsel %vm323, %v632, 0
        %v654 = vsel %vm323, %v633, 0
        %v657 = vsel %vm323, %v634, 0
        %659 = vmatprep.subr.mxu0 0.0
        %660 = vmatpush1.msra.mxu0 0.0
        %661 = vmatprep.subr.mxu0 0.0
        %662 = vmatpush1.msra.mxu0 0.0
        %663 = vmatprep.subr.mxu0 0.0
        %664 = vmatpush1.msra.mxu0 0.0
        %665 = vmatprep.subr.mxu0 0.0
        %666 = vmatpush1.msra.mxu0 0.0
        %667 = vmatprep.subr.mxu0 0.0
        %668 = vmatpush1.msra.mxu0 0.0
        %669 = vmatprep.subr.mxu0 0.0
        %670 = vmatpush1.msra.mxu0 0.0
        %671 = vmatprep.subr.mxu0 0.0
        %672 = vmatpush1.msra.mxu0 0.0
        %673 = vmatprep.subr.mxu0 0.0
        %674 = vmatpush1.msra.mxu0 0.0
        %675 = vmatprep.subr.mxu0 0.0
        %676 = vmatpush1.msra.mxu0 0.0
        %677 = vmatprep.subr.mxu0 0.0
        %678 = vmatpush1.msra.mxu0 0.0
        %679 = vmatprep.subr.mxu0 0.0
        %680 = vmatpush1.msra.mxu0 0.0
        %681 = vmatprep.subr.mxu0 0.0
        %682 = vmatpush1.msra.mxu0 0.0
        %683 = vmatprep.subr.mxu0 0.0
        %684 = vmatpush1.msra.mxu0 0.0
        %685 = vmatprep.subr.mxu0 0.0
        %686 = vmatpush1.msra.mxu0 0.0
        %687 = vmatprep.subr.mxu0 0.0
        %688 = vmatpush1.msra.mxu0 0.0
        %689 = vmatprep.subr.mxu0 0.0
        %690 = vmatpush1.msra.mxu0 %v625
        %691 = vmatprep.subr.mxu0 0.0
        %692 = vmatpush2.msra.mxu0 0.0
        %693 = vmatprep.subr.mxu0 0.0
        %694 = vmatpush2.msra.mxu0 0.0
        %695 = vmatprep.subr.mxu0 0.0
        %696 = vmatpush2.msra.mxu0 0.0
        %697 = vmatprep.subr.mxu0 0.0
        %698 = vmatpush2.msra.mxu0 0.0
        %699 = vmatprep.subr.mxu0 0.0
        %700 = vmatpush2.msra.mxu0 0.0
        %701 = vmatprep.subr.mxu0 0.0
        %702 = vmatpush2.msra.mxu0 0.0
        %703 = vmatprep.subr.mxu0 0.0
        %704 = vmatpush2.msra.mxu0 0.0
        %705 = vmatprep.subr.mxu0 0.0
        %706 = vmatpush2.msra.mxu0 0.0
        %707 = vmatprep.subr.mxu0 0.0
        %708 = vmatpush2.msra.mxu0 0.0
        %709 = vmatprep.subr.mxu0 0.0
        %710 = vmatpush2.msra.mxu0 0.0
        %711 = vmatprep.subr.mxu0 0.0
        %712 = vmatpush2.msra.mxu0 0.0
        %713 = vmatprep.subr.mxu0 0.0
        %714 = vmatpush2.msra.mxu0 0.0
        %715 = vmatprep.subr.mxu0 0.0
        %716 = vmatpush2.msra.mxu0 0.0
        %717 = vmatprep.subr.mxu0 0.0
        %718 = vmatpush2.msra.mxu0 0.0
        %719 = vmatprep.subr.mxu0 0.0
        %720 = vmatpush2.msra.mxu0 0.0
        %721 = vmatprep.subr.mxu0 0.0
        %722 = vmatpush2.msra.mxu0 0.0
        %723 = vmatprep.mubr.f32.mxu0 0.0
        %724 = vmatmul.mubr.f32.gmra.mxu0 %v636
        %v725 = vpop.f32.mrf.mxu0
        %v726 = vadd.f32 0.0, %v725
        %v727 = vpop.f32.mrf.mxu0
        %728 = vmatprep.mubr.f32.mxu0 0.0
        %729 = vmatmul.mubr.f32.gmra.mxu0 %v639
        %v730 = vpop.f32.mrf.mxu0
        %v731 = vadd.f32 0.0, %v730
        %v732 = vpop.f32.mrf.mxu0
        %733 = vmatprep.mubr.f32.mxu0 0.0
        %734 = vmatmul.mubr.f32.gmra.mxu0 %v642
        %v735 = vpop.f32.mrf.mxu0
        %v736 = vadd.f32 0.0, %v735
        %v737 = vpop.f32.mrf.mxu0
        %738 = vmatprep.mubr.f32.mxu0 0.0
        %739 = vmatmul.mubr.f32.gmra.mxu0 %v645
        %v740 = vpop.f32.mrf.mxu0
        %v741 = vadd.f32 0.0, %v740
        %v742 = vpop.f32.mrf.mxu0
        %743 = vmatprep.mubr.f32.mxu0 0.0
        %744 = vmatmul.mubr.f32.gmra.mxu0 %v648
        %v745 = vpop.f32.mrf.mxu0
        %v746 = vadd.f32 0.0, %v745
        %v747 = vpop.f32.mrf.mxu0
        %748 = vmatprep.mubr.f32.mxu0 0.0
        %749 = vmatmul.mubr.f32.gmra.mxu0 %v651
        %v750 = vpop.f32.mrf.mxu0
        %v751 = vadd.f32 0.0, %v750
        %v752 = vpop.f32.mrf.mxu0
        %753 = vmatprep.mubr.f32.mxu0 0.0
        %754 = vmatmul.mubr.f32.gmra.mxu0 %v654
        %v755 = vpop.f32.mrf.mxu0
        %v756 = vadd.f32 0.0, %v755
        %v757 = vpop.f32.mrf.mxu0
        %758 = vmatprep.mubr.f32.mxu0 0.0
        %759 = vmatmul.mubr.f32.gmra.mxu0 %v657
        %v760 = vpop.f32.mrf.mxu0
        %v761 = vadd.f32 0.0, %v760
        %v762 = vpop.f32.mrf.mxu0
        %763 = vdwg.mxu0
        %v764 = vld [vmem:[#allocation2] sm:$0xff]
        %v765 = vld [vmem:[#allocation2 + $0x8] sm:$0xff]
        %v766 = vld [vmem:[#allocation2 + $0x10] sm:$0xff]
        %v767 = vld [vmem:[#allocation2 + $0x18] sm:$0xff]
        %v768 = vld [vmem:[#allocation2 + $0x20] sm:$0xff]
        %v769 = vld [vmem:[#allocation2 + $0x28] sm:$0xff]
        %v770 = vld [vmem:[#allocation2 + $0x30] sm:$0xff]
        %v771 = vld [vmem:[#allocation2 + $0x38] sm:$0xff]
        %v772 = vadd.f32 %v764, %v726
        %v773 = vadd.f32 %v765, %v731
        %v774 = vadd.f32 %v766, %v736
        %v775 = vadd.f32 %v767, %v741
        %v776 = vadd.f32 %v768, %v746
        %v777 = vadd.f32 %v769, %v751
        %v778 = vadd.f32 %v770, %v756
        %v779 = vadd.f32 %v771, %v761
        %780 = vst [vmem:[#allocation2] sm:$0xff] %v772
        %781 = vst [vmem:[#allocation2 + $0x8] sm:$0xff] %v773
        %782 = vst [vmem:[#allocation2 + $0x10] sm:$0xff] %v774
        %783 = vst [vmem:[#allocation2 + $0x18] sm:$0xff] %v775
        %784 = vst [vmem:[#allocation2 + $0x20] sm:$0xff] %v776
        %785 = vst [vmem:[#allocation2 + $0x28] sm:$0xff] %v777
        %786 = vst [vmem:[#allocation2 + $0x30] sm:$0xff] %v778
        %787 = vst [vmem:[#allocation2 + $0x38] sm:$0xff] %v779
        %s788 = scalar_lea.vmem %s2, 24
        %v789 = vld [vmem:[%s788] sm:$0xff]
        %v790 = vld [vmem:[%s626 + $0x1] sm:$0xff]
        %v791 = vld [vmem:[%s626 + $0x21] sm:$0xff]
        %v792 = vld [vmem:[%s626 + $0x41] sm:$0xff]
        %v793 = vld [vmem:[%s626 + $0x61] sm:$0xff]
        %v794 = vld [vmem:[%s626 + $0x81] sm:$0xff]
        %v795 = vld [vmem:[%s626 + $0xa1] sm:$0xff]
        %v796 = vld [vmem:[%s626 + $0xc1] sm:$0xff]
        %v797 = vld [vmem:[%s626 + $0xe1] sm:$0xff]
        %v799 = vsel %vm323, %v790, 0
        %v802 = vsel %vm323, %v791, 0
        %v805 = vsel %vm323, %v792, 0
        %v808 = vsel %vm323, %v793, 0
        %v811 = vsel %vm323, %v794, 0
        %v814 = vsel %vm323, %v795, 0
        %v817 = vsel %vm323, %v796, 0
        %v820 = vsel %vm323, %v797, 0
        %822 = vmatprep.subr.mxu0 0.0
        %823 = vmatpush1.msra.mxu0 0.0
        %824 = vmatprep.subr.mxu0 0.0
        %825 = vmatpush1.msra.mxu0 0.0
        %826 = vmatprep.subr.mxu0 0.0
        %827 = vmatpush1.msra.mxu0 0.0
        %828 = vmatprep.subr.mxu0 0.0
        %829 = vmatpush1.msra.mxu0 0.0
        %830 = vmatprep.subr.mxu0 0.0
        %831 = vmatpush1.msra.mxu0 0.0
        %832 = vmatprep.subr.mxu0 0.0
        %833 = vmatpush1.msra.mxu0 0.0
        %834 = vmatprep.subr.mxu0 0.0
        %835 = vmatpush1.msra.mxu0 0.0
        %836 = vmatprep.subr.mxu0 0.0
        %837 = vmatpush1.msra.mxu0 0.0
        %838 = vmatprep.subr.mxu0 0.0
        %839 = vmatpush1.msra.mxu0 0.0
        %840 = vmatprep.subr.mxu0 0.0
        %841 = vmatpush1.msra.mxu0 0.0
        %842 = vmatprep.subr.mxu0 0.0
        %843 = vmatpush1.msra.mxu0 0.0
        %844 = vmatprep.subr.mxu0 0.0
        %845 = vmatpush1.msra.mxu0 0.0
        %846 = vmatprep.subr.mxu0 0.0
        %847 = vmatpush1.msra.mxu0 0.0
        %848 = vmatprep.subr.mxu0 0.0
        %849 = vmatpush1.msra.mxu0 0.0
        %850 = vmatprep.subr.mxu0 0.0
        %851 = vmatpush1.msra.mxu0 0.0
        %852 = vmatprep.subr.mxu0 0.0
        %853 = vmatpush1.msra.mxu0 %v789
        %854 = vmatprep.subr.mxu0 0.0
        %855 = vmatpush2.msra.mxu0 0.0
        %856 = vmatprep.subr.mxu0 0.0
        %857 = vmatpush2.msra.mxu0 0.0
        %858 = vmatprep.subr.mxu0 0.0
        %859 = vmatpush2.msra.mxu0 0.0
        %860 = vmatprep.subr.mxu0 0.0
        %861 = vmatpush2.msra.mxu0 0.0
        %862 = vmatprep.subr.mxu0 0.0
        %863 = vmatpush2.msra.mxu0 0.0
        %864 = vmatprep.subr.mxu0 0.0
        %865 = vmatpush2.msra.mxu0 0.0
        %866 = vmatprep.subr.mxu0 0.0
        %867 = vmatpush2.msra.mxu0 0.0
        %868 = vmatprep.subr.mxu0 0.0
        %869 = vmatpush2.msra.mxu0 0.0
        %870 = vmatprep.subr.mxu0 0.0
        %871 = vmatpush2.msra.mxu0 0.0
        %872 = vmatprep.subr.mxu0 0.0
        %873 = vmatpush2.msra.mxu0 0.0
        %874 = vmatprep.subr.mxu0 0.0
        %875 = vmatpush2.msra.mxu0 0.0
        %876 = vmatprep.subr.mxu0 0.0
        %877 = vmatpush2.msra.mxu0 0.0
        %878 = vmatprep.subr.mxu0 0.0
        %879 = vmatpush2.msra.mxu0 0.0
        %880 = vmatprep.subr.mxu0 0.0
        %881 = vmatpush2.msra.mxu0 0.0
        %882 = vmatprep.subr.mxu0 0.0
        %883 = vmatpush2.msra.mxu0 0.0
        %884 = vmatprep.subr.mxu0 0.0
        %885 = vmatpush2.msra.mxu0 0.0
        %886 = vmatprep.mubr.f32.mxu0 0.0
        %887 = vmatmul.mubr.f32.gmra.mxu0 %v799
        %v888 = vpop.f32.mrf.mxu0
        %v889 = vadd.f32 0.0, %v888
        %v890 = vpop.f32.mrf.mxu0
        %891 = vmatprep.mubr.f32.mxu0 0.0
        %892 = vmatmul.mubr.f32.gmra.mxu0 %v802
        %v893 = vpop.f32.mrf.mxu0
        %v894 = vadd.f32 0.0, %v893
        %v895 = vpop.f32.mrf.mxu0
        %896 = vmatprep.mubr.f32.mxu0 0.0
        %897 = vmatmul.mubr.f32.gmra.mxu0 %v805
        %v898 = vpop.f32.mrf.mxu0
        %v899 = vadd.f32 0.0, %v898
        %v900 = vpop.f32.mrf.mxu0
        %901 = vmatprep.mubr.f32.mxu0 0.0
        %902 = vmatmul.mubr.f32.gmra.mxu0 %v808
        %v903 = vpop.f32.mrf.mxu0
        %v904 = vadd.f32 0.0, %v903
        %v905 = vpop.f32.mrf.mxu0
        %906 = vmatprep.mubr.f32.mxu0 0.0
        %907 = vmatmul.mubr.f32.gmra.mxu0 %v811
        %v908 = vpop.f32.mrf.mxu0
        %v909 = vadd.f32 0.0, %v908
        %v910 = vpop.f32.mrf.mxu0
        %911 = vmatprep.mubr.f32.mxu0 0.0
        %912 = vmatmul.mubr.f32.gmra.mxu0 %v814
        %v913 = vpop.f32.mrf.mxu0
        %v914 = vadd.f32 0.0, %v913
        %v915 = vpop.f32.mrf.mxu0
        %916 = vmatprep.mubr.f32.mxu0 0.0
        %917 = vmatmul.mubr.f32.gmra.mxu0 %v817
        %v918 = vpop.f32.mrf.mxu0
        %v919 = vadd.f32 0.0, %v918
        %v920 = vpop.f32.mrf.mxu0
        %921 = vmatprep.mubr.f32.mxu0 0.0
        %922 = vmatmul.mubr.f32.gmra.mxu0 %v820
        %v923 = vpop.f32.mrf.mxu0
        %v924 = vadd.f32 0.0, %v923
        %v925 = vpop.f32.mrf.mxu0
        %926 = vdwg.mxu0
        %v927 = vld [vmem:[#allocation2] sm:$0xff]
        %v928 = vld [vmem:[#allocation2 + $0x8] sm:$0xff]
        %v929 = vld [vmem:[#allocation2 + $0x10] sm:$0xff]
        %v930 = vld [vmem:[#allocation2 + $0x18] sm:$0xff]
        %v931 = vld [vmem:[#allocation2 + $0x20] sm:$0xff]
        %v932 = vld [vmem:[#allocation2 + $0x28] sm:$0xff]
        %v933 = vld [vmem:[#allocation2 + $0x30] sm:$0xff]
        %v934 = vld [vmem:[#allocation2 + $0x38] sm:$0xff]
        %v935 = vadd.f32 %v927, %v889
        %v936 = vadd.f32 %v928, %v894
        %v937 = vadd.f32 %v929, %v899
        %v938 = vadd.f32 %v930, %v904
        %v939 = vadd.f32 %v931, %v909
        %v940 = vadd.f32 %v932, %v914
        %v941 = vadd.f32 %v933, %v919
        %v942 = vadd.f32 %v934, %v924
        %943 = vst [vmem:[#allocation2] sm:$0xff] %v935
        %944 = vst [vmem:[#allocation2 + $0x8] sm:$0xff] %v936
        %945 = vst [vmem:[#allocation2 + $0x10] sm:$0xff] %v937
        %946 = vst [vmem:[#allocation2 + $0x18] sm:$0xff] %v938
        %947 = vst [vmem:[#allocation2 + $0x20] sm:$0xff] %v939
        %948 = vst [vmem:[#allocation2 + $0x28] sm:$0xff] %v940
        %949 = vst [vmem:[#allocation2 + $0x30] sm:$0xff] %v941
        %950 = vst [vmem:[#allocation2 + $0x38] sm:$0xff] %v942
        %s951 = scalar_lea.vmem %s2, 32
        %v952 = vld [vmem:[%s951] sm:$0xff]
        %s953 = scalar_lea.vmem %s286, 32
        %v954 = vld [vmem:[%s953] sm:$0xff]
        %v955 = vld [vmem:[%s953 + $0x20] sm:$0xff]
        %v956 = vld [vmem:[%s953 + $0x40] sm:$0xff]
        %v957 = vld [vmem:[%s953 + $0x60] sm:$0xff]
        %v958 = vld [vmem:[%s953 + $0x80] sm:$0xff]
        %v959 = vld [vmem:[%s953 + $0xa0] sm:$0xff]
        %v960 = vld [vmem:[%s953 + $0xc0] sm:$0xff]
        %v961 = vld [vmem:[#allocation2] sm:$0xff]
        %v962 = vld [vmem:[#allocation2 + $0x8] sm:$0xff]
        %v963 = vld [vmem:[#allocation2 + $0x10] sm:$0xff]
        %v964 = vld [vmem:[#allocation2 + $0x18] sm:$0xff]
        %v965 = vld [vmem:[#allocation2 + $0x20] sm:$0xff]
        %v966 = vld [vmem:[#allocation2 + $0x28] sm:$0xff]
        %v967 = vld [vmem:[#allocation2 + $0x30] sm:$0xff]
        %v969 = vsel %vm323, %v954, 0
        %v972 = vsel %vm323, %v955, 0
        %v975 = vsel %vm323, %v956, 0
        %v978 = vsel %vm323, %v957, 0
        %v981 = vsel %vm323, %v958, 0
        %v984 = vsel %vm323, %v959, 0
        %v987 = vsel %vm323, %v960, 0
        %989 = vmatprep.subr.mxu0 0.0
        %990 = vmatpush1.msra.mxu0 0.0
        %991 = vmatprep.subr.mxu0 0.0
        %992 = vmatpush1.msra.mxu0 0.0
        %993 = vmatprep.subr.mxu0 0.0
        %994 = vmatpush1.msra.mxu0 0.0
        %995 = vmatprep.subr.mxu0 0.0
        %996 = vmatpush1.msra.mxu0 0.0
        %997 = vmatprep.subr.mxu0 0.0
        %998 = vmatpush1.msra.mxu0 0.0
        %999 = vmatprep.subr.mxu0 0.0
        %1000 = vmatpush1.msra.mxu0 0.0
        %1001 = vmatprep.subr.mxu0 0.0
        %1002 = vmatpush1.msra.mxu0 0.0
        %1003 = vmatprep.subr.mxu0 0.0
        %1004 = vmatpush1.msra.mxu0 0.0
        %1005 = vmatprep.subr.mxu0 0.0
        %1006 = vmatpush1.msra.mxu0 0.0
        %1007 = vmatprep.subr.mxu0 0.0
        %1008 = vmatpush1.msra.mxu0 0.0
        %1009 = vmatprep.subr.mxu0 0.0
        %1010 = vmatpush1.msra.mxu0 0.0
        %1011 = vmatprep.subr.mxu0 0.0
        %1012 = vmatpush1.msra.mxu0 0.0
        %1013 = vmatprep.subr.mxu0 0.0
        %1014 = vmatpush1.msra.mxu0 0.0
        %1015 = vmatprep.subr.mxu0 0.0
        %1016 = vmatpush1.msra.mxu0 0.0
        %1017 = vmatprep.subr.mxu0 0.0
        %1018 = vmatpush1.msra.mxu0 0.0
        %1019 = vmatprep.subr.mxu0 0.0
        %1020 = vmatpush1.msra.mxu0 %v952
        %1021 = vmatprep.subr.mxu0 0.0
        %1022 = vmatpush2.msra.mxu0 0.0
        %1023 = vmatprep.subr.mxu0 0.0
        %1024 = vmatpush2.msra.mxu0 0.0
        %1025 = vmatprep.subr.mxu0 0.0
        %1026 = vmatpush2.msra.mxu0 0.0
        %1027 = vmatprep.subr.mxu0 0.0
        %1028 = vmatpush2.msra.mxu0 0.0
        %1029 = vmatprep.subr.mxu0 0.0
        %1030 = vmatpush2.msra.mxu0 0.0
        %1031 = vmatprep.subr.mxu0 0.0
        %1032 = vmatpush2.msra.mxu0 0.0
        %1033 = vmatprep.subr.mxu0 0.0
        %1034 = vmatpush2.msra.mxu0 0.0
        %1035 = vmatprep.subr.mxu0 0.0
        %1036 = vmatpush2.msra.mxu0 0.0
        %1037 = vmatprep.subr.mxu0 0.0
        %1038 = vmatpush2.msra.mxu0 0.0
        %1039 = vmatprep.subr.mxu0 0.0
        %1040 = vmatpush2.msra.mxu0 0.0
        %1041 = vmatprep.subr.mxu0 0.0
        %1042 = vmatpush2.msra.mxu0 0.0
        %1043 = vmatprep.subr.mxu0 0.0
        %1044 = vmatpush2.msra.mxu0 0.0
        %1045 = vmatprep.subr.mxu0 0.0
        %1046 = vmatpush2.msra.mxu0 0.0
        %1047 = vmatprep.subr.mxu0 0.0
        %1048 = vmatpush2.msra.mxu0 0.0
        %1049 = vmatprep.subr.mxu0 0.0
        %1050 = vmatpush2.msra.mxu0 0.0
        %1051 = vmatprep.subr.mxu0 0.0
        %1052 = vmatpush2.msra.mxu0 0.0
        %1053 = vmatprep.mubr.f32.mxu0 0.0
        %1054 = vmatmul.mubr.f32.gmra.mxu0 %v969
        %v1055 = vpop.f32.mrf.mxu0
        %v1056 = vadd.f32 0.0, %v1055
        %v1057 = vpop.f32.mrf.mxu0
        %1058 = vmatprep.mubr.f32.mxu0 0.0
        %1059 = vmatmul.mubr.f32.gmra.mxu0 %v972
        %v1060 = vpop.f32.mrf.mxu0
        %v1061 = vadd.f32 0.0, %v1060
        %v1062 = vpop.f32.mrf.mxu0
        %1063 = vmatprep.mubr.f32.mxu0 0.0
        %1064 = vmatmul.mubr.f32.gmra.mxu0 %v975
        %v1065 = vpop.f32.mrf.mxu0
        %v1066 = vadd.f32 0.0, %v1065
        %v1067 = vpop.f32.mrf.mxu0
        %1068 = vmatprep.mubr.f32.mxu0 0.0
        %1069 = vmatmul.mubr.f32.gmra.mxu0 %v978
        %v1070 = vpop.f32.mrf.mxu0
        %v1071 = vadd.f32 0.0, %v1070
        %v1072 = vpop.f32.mrf.mxu0
        %1073 = vmatprep.mubr.f32.mxu0 0.0
        %1074 = vmatmul.mubr.f32.gmra.mxu0 %v981
        %v1075 = vpop.f32.mrf.mxu0
        %v1076 = vadd.f32 0.0, %v1075
        %v1077 = vpop.f32.mrf.mxu0
        %1078 = vmatprep.mubr.f32.mxu0 0.0
        %1079 = vmatmul.mubr.f32.gmra.mxu0 %v984
        %v1080 = vpop.f32.mrf.mxu0
        %v1081 = vadd.f32 0.0, %v1080
        %v1082 = vpop.f32.mrf.mxu0
        %1083 = vmatprep.mubr.f32.mxu0 0.0
        %1084 = vmatmul.mubr.f32.gmra.mxu0 %v987
        %v1085 = vpop.f32.mrf.mxu0
        %v1086 = vadd.f32 0.0, %v1085
        %v1087 = vpop.f32.mrf.mxu0
        %1088 = vdwg.mxu0
        %v1089 = vadd.f32 %v961, %v1056
        %v1090 = vadd.f32 %v962, %v1061
        %v1091 = vadd.f32 %v963, %v1066
        %v1092 = vadd.f32 %v964, %v1071
        %v1093 = vadd.f32 %v965, %v1076
        %v1094 = vadd.f32 %v966, %v1081
        %v1095 = vadd.f32 %v967, %v1086
        %1096 = vst [vmem:[#allocation2] sm:$0xff] %v1089
        %1097 = vst [vmem:[#allocation2 + $0x8] sm:$0xff] %v1090
        %1098 = vst [vmem:[#allocation2 + $0x10] sm:$0xff] %v1091
        %1099 = vst [vmem:[#allocation2 + $0x18] sm:$0xff] %v1092
        %1100 = vst [vmem:[#allocation2 + $0x20] sm:$0xff] %v1093
        %1101 = vst [vmem:[#allocation2 + $0x28] sm:$0xff] %v1094
        %1102 = vst [vmem:[#allocation2 + $0x30] sm:$0xff] %v1095
        %v1103 = vld [vmem:[%s304] sm:$0xff]
        %v1104 = vld [vmem:[#allocation2 + $0x38] sm:$0xff]
        %v1106 = vsel %vm323, %v1103, 0
        %1108 = vmatprep.subr.mxu0 0.0
        %1109 = vmatpush1.msra.mxu0 0.0
        %1110 = vmatprep.subr.mxu0 0.0
        %1111 = vmatpush1.msra.mxu0 0.0
        %1112 = vmatprep.subr.mxu0 0.0
        %1113 = vmatpush1.msra.mxu0 0.0
        %1114 = vmatprep.subr.mxu0 0.0
        %1115 = vmatpush1.msra.mxu0 0.0
        %1116 = vmatprep.subr.mxu0 0.0
        %1117 = vmatpush1.msra.mxu0 0.0
        %1118 = vmatprep.subr.mxu0 0.0
        %1119 = vmatpush1.msra.mxu0 0.0
        %1120 = vmatprep.subr.mxu0 0.0
        %1121 = vmatpush1.msra.mxu0 0.0
        %1122 = vmatprep.subr.mxu0 0.0
        %1123 = vmatpush1.msra.mxu0 0.0
        %1124 = vmatprep.subr.mxu0 0.0
        %1125 = vmatpush1.msra.mxu0 0.0
        %1126 = vmatprep.subr.mxu0 0.0
        %1127 = vmatpush1.msra.mxu0 0.0
        %1128 = vmatprep.subr.mxu0 0.0
        %1129 = vmatpush1.msra.mxu0 0.0
        %1130 = vmatprep.subr.mxu0 0.0
        %1131 = vmatpush1.msra.mxu0 0.0
        %1132 = vmatprep.subr.mxu0 0.0
        %1133 = vmatpush1.msra.mxu0 0.0
        %1134 = vmatprep.subr.mxu0 0.0
        %1135 = vmatpush1.msra.mxu0 0.0
        %1136 = vmatprep.subr.mxu0 0.0
        %1137 = vmatpush1.msra.mxu0 0.0
        %1138 = vmatprep.subr.mxu0 0.0
        %1139 = vmatpush1.msra.mxu0 %v952
        %1140 = vmatprep.subr.mxu0 0.0
        %1141 = vmatpush2.msra.mxu0 0.0
        %1142 = vmatprep.subr.mxu0 0.0
        %1143 = vmatpush2.msra.mxu0 0.0
        %1144 = vmatprep.subr.mxu0 0.0
        %1145 = vmatpush2.msra.mxu0 0.0
        %1146 = vmatprep.subr.mxu0 0.0
        %1147 = vmatpush2.msra.mxu0 0.0
        %1148 = vmatprep.subr.mxu0 0.0
        %1149 = vmatpush2.msra.mxu0 0.0
        %1150 = vmatprep.subr.mxu0 0.0
        %1151 = vmatpush2.msra.mxu0 0.0
        %1152 = vmatprep.subr.mxu0 0.0
        %1153 = vmatpush2.msra.mxu0 0.0
        %1154 = vmatprep.subr.mxu0 0.0
        %1155 = vmatpush2.msra.mxu0 0.0
        %1156 = vmatprep.subr.mxu0 0.0
        %1157 = vmatpush2.msra.mxu0 0.0
        %1158 = vmatprep.subr.mxu0 0.0
        %1159 = vmatpush2.msra.mxu0 0.0
        %1160 = vmatprep.subr.mxu0 0.0
        %1161 = vmatpush2.msra.mxu0 0.0
        %1162 = vmatprep.subr.mxu0 0.0
        %1163 = vmatpush2.msra.mxu0 0.0
        %1164 = vmatprep.subr.mxu0 0.0
        %1165 = vmatpush2.msra.mxu0 0.0
        %1166 = vmatprep.subr.mxu0 0.0
        %1167 = vmatpush2.msra.mxu0 0.0
        %1168 = vmatprep.subr.mxu0 0.0
        %1169 = vmatpush2.msra.mxu0 0.0
        %1170 = vmatprep.subr.mxu0 0.0
        %1171 = vmatpush2.msra.mxu0 0.0
        %1172 = vmatprep.mubr.f32.mxu0 0.0
        %1173 = vmatmul.mubr.f32.gmra.mxu0 %v1106
        %v1174 = vpop.f32.mrf.mxu0
        %v1175 = vadd.f32 0.0, %v1174
        %v1176 = vpop.f32.mrf.mxu0
        %1177 = vdwg.mxu0
        %v1178 = vadd.f32 %v1104, %v1175
        %1179 = vst [vmem:[#allocation2 + $0x38] sm:$0xff] %v1178
        %s1180 = scalar_lea.vmem %s2, 40
        %v1181 = vld [vmem:[%s1180] sm:$0xff]
        %v1182 = vld [vmem:[%s953 + $0x1] sm:$0xff]
        %v1183 = vld [vmem:[%s953 + $0x21] sm:$0xff]
        %v1184 = vld [vmem:[%s953 + $0x41] sm:$0xff]
        %v1185 = vld [vmem:[%s953 + $0x61] sm:$0xff]
        %v1186 = vld [vmem:[%s953 + $0x81] sm:$0xff]
        %v1187 = vld [vmem:[%s953 + $0xa1] sm:$0xff]
        %v1188 = vld [vmem:[%s953 + $0xc1] sm:$0xff]
        %v1189 = vld [vmem:[#allocation2] sm:$0xff]
        %v1190 = vld [vmem:[#allocation2 + $0x8] sm:$0xff]
        %v1191 = vld [vmem:[#allocation2 + $0x10] sm:$0xff]
        %v1192 = vld [vmem:[#allocation2 + $0x18] sm:$0xff]
        %v1193 = vld [vmem:[#allocation2 + $0x20] sm:$0xff]
        %v1194 = vld [vmem:[#allocation2 + $0x28] sm:$0xff]
        %v1195 = vld [vmem:[#allocation2 + $0x30] sm:$0xff]
        %v1197 = vsel %vm323, %v1182, 0
        %v1200 = vsel %vm323, %v1183, 0
        %v1203 = vsel %vm323, %v1184, 0
        %v1206 = vsel %vm323, %v1185, 0
        %v1209 = vsel %vm323, %v1186, 0
        %v1212 = vsel %vm323, %v1187, 0
        %v1215 = vsel %vm323, %v1188, 0
        %1217 = vmatprep.subr.mxu0 0.0
        %1218 = vmatpush1.msra.mxu0 0.0
        %1219 = vmatprep.subr.mxu0 0.0
        %1220 = vmatpush1.msra.mxu0 0.0
        %1221 = vmatprep.subr.mxu0 0.0
        %1222 = vmatpush1.msra.mxu0 0.0
        %1223 = vmatprep.subr.mxu0 0.0
        %1224 = vmatpush1.msra.mxu0 0.0
        %1225 = vmatprep.subr.mxu0 0.0
        %1226 = vmatpush1.msra.mxu0 0.0
        %1227 = vmatprep.subr.mxu0 0.0
        %1228 = vmatpush1.msra.mxu0 0.0
        %1229 = vmatprep.subr.mxu0 0.0
        %1230 = vmatpush1.msra.mxu0 0.0
        %1231 = vmatprep.subr.mxu0 0.0
        %1232 = vmatpush1.msra.mxu0 0.0
        %1233 = vmatprep.subr.mxu0 0.0
        %1234 = vmatpush1.msra.mxu0 0.0
        %1235 = vmatprep.subr.mxu0 0.0
        %1236 = vmatpush1.msra.mxu0 0.0
        %1237 = vmatprep.subr.mxu0 0.0
        %1238 = vmatpush1.msra.mxu0 0.0
        %1239 = vmatprep.subr.mxu0 0.0
        %1240 = vmatpush1.msra.mxu0 0.0
        %1241 = vmatprep.subr.mxu0 0.0
        %1242 = vmatpush1.msra.mxu0 0.0
        %1243 = vmatprep.subr.mxu0 0.0
        %1244 = vmatpush1.msra.mxu0 0.0
        %1245 = vmatprep.subr.mxu0 0.0
        %1246 = vmatpush1.msra.mxu0 0.0
        %1247 = vmatprep.subr.mxu0 0.0
        %1248 = vmatpush1.msra.mxu0 %v1181
        %1249 = vmatprep.subr.mxu0 0.0
        %1250 = vmatpush2.msra.mxu0 0.0
        %1251 = vmatprep.subr.mxu0 0.0
        %1252 = vmatpush2.msra.mxu0 0.0
        %1253 = vmatprep.subr.mxu0 0.0
        %1254 = vmatpush2.msra.mxu0 0.0
        %1255 = vmatprep.subr.mxu0 0.0
        %1256 = vmatpush2.msra.mxu0 0.0
        %1257 = vmatprep.subr.mxu0 0.0
        %1258 = vmatpush2.msra.mxu0 0.0
        %1259 = vmatprep.subr.mxu0 0.0
        %1260 = vmatpush2.msra.mxu0 0.0
        %1261 = vmatprep.subr.mxu0 0.0
        %1262 = vmatpush2.msra.mxu0 0.0
        %1263 = vmatprep.subr.mxu0 0.0
        %1264 = vmatpush2.msra.mxu0 0.0
        %1265 = vmatprep.subr.mxu0 0.0
        %1266 = vmatpush2.msra.mxu0 0.0
        %1267 = vmatprep.subr.mxu0 0.0
        %1268 = vmatpush2.msra.mxu0 0.0
        %1269 = vmatprep.subr.mxu0 0.0
        %1270 = vmatpush2.msra.mxu0 0.0
        %1271 = vmatprep.subr.mxu0 0.0
        %1272 = vmatpush2.msra.mxu0 0.0
        %1273 = vmatprep.subr.mxu0 0.0
        %1274 = vmatpush2.msra.mxu0 0.0
        %1275 = vmatprep.subr.mxu0 0.0
        %1276 = vmatpush2.msra.mxu0 0.0
        %1277 = vmatprep.subr.mxu0 0.0
        %1278 = vmatpush2.msra.mxu0 0.0
        %1279 = vmatprep.subr.mxu0 0.0
        %1280 = vmatpush2.msra.mxu0 0.0
        %1281 = vmatprep.mubr.f32.mxu0 0.0
        %1282 = vmatmul.mubr.f32.gmra.mxu0 %v1197
        %v1283 = vpop.f32.mrf.mxu0
        %v1284 = vadd.f32 0.0, %v1283
        %v1285 = vpop.f32.mrf.mxu0
        %1286 = vmatprep.mubr.f32.mxu0 0.0
        %1287 = vmatmul.mubr.f32.gmra.mxu0 %v1200
        %v1288 = vpop.f32.mrf.mxu0
        %v1289 = vadd.f32 0.0, %v1288
        %v1290 = vpop.f32.mrf.mxu0
        %1291 = vmatprep.mubr.f32.mxu0 0.0
        %1292 = vmatmul.mubr.f32.gmra.mxu0 %v1203
        %v1293 = vpop.f32.mrf.mxu0
        %v1294 = vadd.f32 0.0, %v1293
        %v1295 = vpop.f32.mrf.mxu0
        %1296 = vmatprep.mubr.f32.mxu0 0.0
        %1297 = vmatmul.mubr.f32.gmra.mxu0 %v1206
        %v1298 = vpop.f32.mrf.mxu0
        %v1299 = vadd.f32 0.0, %v1298
        %v1300 = vpop.f32.mrf.mxu0
        %1301 = vmatprep.mubr.f32.mxu0 0.0
        %1302 = vmatmul.mubr.f32.gmra.mxu0 %v1209
        %v1303 = vpop.f32.mrf.mxu0
        %v1304 = vadd.f32 0.0, %v1303
        %v1305 = vpop.f32.mrf.mxu0
        %1306 = vmatprep.mubr.f32.mxu0 0.0
        %1307 = vmatmul.mubr.f32.gmra.mxu0 %v1212
        %v1308 = vpop.f32.mrf.mxu0
        %v1309 = vadd.f32 0.0, %v1308
        %v1310 = vpop.f32.mrf.mxu0
        %1311 = vmatprep.mubr.f32.mxu0 0.0
        %1312 = vmatmul.mubr.f32.gmra.mxu0 %v1215
        %v1313 = vpop.f32.mrf.mxu0
        %v1314 = vadd.f32 0.0, %v1313
        %v1315 = vpop.f32.mrf.mxu0
        %1316 = vdwg.mxu0
        %v1317 = vadd.f32 %v1189, %v1284
        %v1318 = vadd.f32 %v1190, %v1289
        %v1319 = vadd.f32 %v1191, %v1294
        %v1320 = vadd.f32 %v1192, %v1299
        %v1321 = vadd.f32 %v1193, %v1304
        %v1322 = vadd.f32 %v1194, %v1309
        %v1323 = vadd.f32 %v1195, %v1314
        %1324 = vst [vmem:[#allocation2] sm:$0xff] %v1317
        %1325 = vst [vmem:[#allocation2 + $0x8] sm:$0xff] %v1318
        %1326 = vst [vmem:[#allocation2 + $0x10] sm:$0xff] %v1319
        %1327 = vst [vmem:[#allocation2 + $0x18] sm:$0xff] %v1320
        %1328 = vst [vmem:[#allocation2 + $0x20] sm:$0xff] %v1321
        %1329 = vst [vmem:[#allocation2 + $0x28] sm:$0xff] %v1322
        %1330 = vst [vmem:[#allocation2 + $0x30] sm:$0xff] %v1323
        %v1331 = vld [vmem:[%s304 + $0x1] sm:$0xff]
        %v1332 = vld [vmem:[#allocation2 + $0x38] sm:$0xff]
        %v1334 = vsel %vm323, %v1331, 0
        %1336 = vmatprep.subr.mxu0 0.0
        %1337 = vmatpush1.msra.mxu0 0.0
        %1338 = vmatprep.subr.mxu0 0.0
        %1339 = vmatpush1.msra.mxu0 0.0
        %1340 = vmatprep.subr.mxu0 0.0
        %1341 = vmatpush1.msra.mxu0 0.0
        %1342 = vmatprep.subr.mxu0 0.0
        %1343 = vmatpush1.msra.mxu0 0.0
        %1344 = vmatprep.subr.mxu0 0.0
        %1345 = vmatpush1.msra.mxu0 0.0
        %1346 = vmatprep.subr.mxu0 0.0
        %1347 = vmatpush1.msra.mxu0 0.0
        %1348 = vmatprep.subr.mxu0 0.0
        %1349 = vmatpush1.msra.mxu0 0.0
        %1350 = vmatprep.subr.mxu0 0.0
        %1351 = vmatpush1.msra.mxu0 0.0
        %1352 = vmatprep.subr.mxu0 0.0
        %1353 = vmatpush1.msra.mxu0 0.0
        %1354 = vmatprep.subr.mxu0 0.0
        %1355 = vmatpush1.msra.mxu0 0.0
        %1356 = vmatprep.subr.mxu0 0.0
        %1357 = vmatpush1.msra.mxu0 0.0
        %1358 = vmatprep.subr.mxu0 0.0
        %1359 = vmatpush1.msra.mxu0 0.0
        %1360 = vmatprep.subr.mxu0 0.0
        %1361 = vmatpush1.msra.mxu0 0.0
        %1362 = vmatprep.subr.mxu0 0.0
        %1363 = vmatpush1.msra.mxu0 0.0
        %1364 = vmatprep.subr.mxu0 0.0
        %1365 = vmatpush1.msra.mxu0 0.0
        %1366 = vmatprep.subr.mxu0 0.0
        %1367 = vmatpush1.msra.mxu0 %v1181
        %1368 = vmatprep.subr.mxu0 0.0
        %1369 = vmatpush2.msra.mxu0 0.0
        %1370 = vmatprep.subr.mxu0 0.0
        %1371 = vmatpush2.msra.mxu0 0.0
        %1372 = vmatprep.subr.mxu0 0.0
        %1373 = vmatpush2.msra.mxu0 0.0
        %1374 = vmatprep.subr.mxu0 0.0
        %1375 = vmatpush2.msra.mxu0 0.0
        %1376 = vmatprep.subr.mxu0 0.0
        %1377 = vmatpush2.msra.mxu0 0.0
        %1378 = vmatprep.subr.mxu0 0.0
        %1379 = vmatpush2.msra.mxu0 0.0
        %1380 = vmatprep.subr.mxu0 0.0
        %1381 = vmatpush2.msra.mxu0 0.0
        %1382 = vmatprep.subr.mxu0 0.0
        %1383 = vmatpush2.msra.mxu0 0.0
        %1384 = vmatprep.subr.mxu0 0.0
        %1385 = vmatpush2.msra.mxu0 0.0
        %1386 = vmatprep.subr.mxu0 0.0
        %1387 = vmatpush2.msra.mxu0 0.0
        %1388 = vmatprep.subr.mxu0 0.0
        %1389 = vmatpush2.msra.mxu0 0.0
        %1390 = vmatprep.subr.mxu0 0.0
        %1391 = vmatpush2.msra.mxu0 0.0
        %1392 = vmatprep.subr.mxu0 0.0
        %1393 = vmatpush2.msra.mxu0 0.0
        %1394 = vmatprep.subr.mxu0 0.0
        %1395 = vmatpush2.msra.mxu0 0.0
        %1396 = vmatprep.subr.mxu0 0.0
        %1397 = vmatpush2.msra.mxu0 0.0
        %1398 = vmatprep.subr.mxu0 0.0
        %1399 = vmatpush2.msra.mxu0 0.0
        %1400 = vmatprep.mubr.f32.mxu0 0.0
        %1401 = vmatmul.mubr.f32.gmra.mxu0 %v1334
        %v1402 = vpop.f32.mrf.mxu0
        %v1403 = vadd.f32 0.0, %v1402
        %v1404 = vpop.f32.mrf.mxu0
        %1405 = vdwg.mxu0
        %v1406 = vadd.f32 %v1332, %v1403
        %1407 = vst [vmem:[#allocation2 + $0x38] sm:$0xff] %v1406
        %s1408 = scalar_lea.vmem %s2, 48
        %v1409 = vld [vmem:[%s1408] sm:$0xff]
        %s1410 = scalar_lea.vmem %s286, 48
        %v1411 = vld [vmem:[%s1410] sm:$0xff]
        %v1412 = vld [vmem:[%s1410 + $0x20] sm:$0xff]
        %v1413 = vld [vmem:[%s1410 + $0x40] sm:$0xff]
        %v1414 = vld [vmem:[%s1410 + $0x60] sm:$0xff]
        %v1415 = vld [vmem:[%s1410 + $0x80] sm:$0xff]
        %v1416 = vld [vmem:[%s1410 + $0xa0] sm:$0xff]
        %v1417 = vld [vmem:[%s1410 + $0xc0] sm:$0xff]
        %v1418 = vld [vmem:[#allocation2] sm:$0xff]
        %v1419 = vld [vmem:[#allocation2 + $0x8] sm:$0xff]
        %v1420 = vld [vmem:[#allocation2 + $0x10] sm:$0xff]
        %v1421 = vld [vmem:[#allocation2 + $0x18] sm:$0xff]
        %v1422 = vld [vmem:[#allocation2 + $0x20] sm:$0xff]
        %v1423 = vld [vmem:[#allocation2 + $0x28] sm:$0xff]
        %v1424 = vld [vmem:[#allocation2 + $0x30] sm:$0xff]
        %v1426 = vsel %vm323, %v1411, 0
        %v1429 = vsel %vm323, %v1412, 0
        %v1432 = vsel %vm323, %v1413, 0
        %v1435 = vsel %vm323, %v1414, 0
        %v1438 = vsel %vm323, %v1415, 0
        %v1441 = vsel %vm323, %v1416, 0
        %v1444 = vsel %vm323, %v1417, 0
        %1446 = vmatprep.subr.mxu0 0.0
        %1447 = vmatpush1.msra.mxu0 0.0
        %1448 = vmatprep.subr.mxu0 0.0
        %1449 = vmatpush1.msra.mxu0 0.0
        %1450 = vmatprep.subr.mxu0 0.0
        %1451 = vmatpush1.msra.mxu0 0.0
        %1452 = vmatprep.subr.mxu0 0.0
        %1453 = vmatpush1.msra.mxu0 0.0
        %1454 = vmatprep.subr.mxu0 0.0
        %1455 = vmatpush1.msra.mxu0 0.0
        %1456 = vmatprep.subr.mxu0 0.0
        %1457 = vmatpush1.msra.mxu0 0.0
        %1458 = vmatprep.subr.mxu0 0.0
        %1459 = vmatpush1.msra.mxu0 0.0
        %1460 = vmatprep.subr.mxu0 0.0
        %1461 = vmatpush1.msra.mxu0 0.0
        %1462 = vmatprep.subr.mxu0 0.0
        %1463 = vmatpush1.msra.mxu0 0.0
        %1464 = vmatprep.subr.mxu0 0.0
        %1465 = vmatpush1.msra.mxu0 0.0
        %1466 = vmatprep.subr.mxu0 0.0
        %1467 = vmatpush1.msra.mxu0 0.0
        %1468 = vmatprep.subr.mxu0 0.0
        %1469 = vmatpush1.msra.mxu0 0.0
        %1470 = vmatprep.subr.mxu0 0.0
        %1471 = vmatpush1.msra.mxu0 0.0
        %1472 = vmatprep.subr.mxu0 0.0
        %1473 = vmatpush1.msra.mxu0 0.0
        %1474 = vmatprep.subr.mxu0 0.0
        %1475 = vmatpush1.msra.mxu0 0.0
        %1476 = vmatprep.subr.mxu0 0.0
        %1477 = vmatpush1.msra.mxu0 %v1409
        %1478 = vmatprep.subr.mxu0 0.0
        %1479 = vmatpush2.msra.mxu0 0.0
        %1480 = vmatprep.subr.mxu0 0.0
        %1481 = vmatpush2.msra.mxu0 0.0
        %1482 = vmatprep.subr.mxu0 0.0
        %1483 = vmatpush2.msra.mxu0 0.0
        %1484 = vmatprep.subr.mxu0 0.0
        %1485 = vmatpush2.msra.mxu0 0.0
        %1486 = vmatprep.subr.mxu0 0.0
        %1487 = vmatpush2.msra.mxu0 0.0
        %1488 = vmatprep.subr.mxu0 0.0
        %1489 = vmatpush2.msra.mxu0 0.0
        %1490 = vmatprep.subr.mxu0 0.0
        %1491 = vmatpush2.msra.mxu0 0.0
        %1492 = vmatprep.subr.mxu0 0.0
        %1493 = vmatpush2.msra.mxu0 0.0
        %1494 = vmatprep.subr.mxu0 0.0
        %1495 = vmatpush2.msra.mxu0 0.0
        %1496 = vmatprep.subr.mxu0 0.0
        %1497 = vmatpush2.msra.mxu0 0.0
        %1498 = vmatprep.subr.mxu0 0.0
        %1499 = vmatpush2.msra.mxu0 0.0
        %1500 = vmatprep.subr.mxu0 0.0
        %1501 = vmatpush2.msra.mxu0 0.0
        %1502 = vmatprep.subr.mxu0 0.0
        %1503 = vmatpush2.msra.mxu0 0.0
        %1504 = vmatprep.subr.mxu0 0.0
        %1505 = vmatpush2.msra.mxu0 0.0
        %1506 = vmatprep.subr.mxu0 0.0
        %1507 = vmatpush2.msra.mxu0 0.0
        %1508 = vmatprep.subr.mxu0 0.0
        %1509 = vmatpush2.msra.mxu0 0.0
        %1510 = vmatprep.mubr.f32.mxu0 0.0
        %1511 = vmatmul.mubr.f32.gmra.mxu0 %v1426
        %v1512 = vpop.f32.mrf.mxu0
        %v1513 = vadd.f32 0.0, %v1512
        %v1514 = vpop.f32.mrf.mxu0
        %1515 = vmatprep.mubr.f32.mxu0 0.0
        %1516 = vmatmul.mubr.f32.gmra.mxu0 %v1429
        %v1517 = vpop.f32.mrf.mxu0
        %v1518 = vadd.f32 0.0, %v1517
        %v1519 = vpop.f32.mrf.mxu0
        %1520 = vmatprep.mubr.f32.mxu0 0.0
        %1521 = vmatmul.mubr.f32.gmra.mxu0 %v1432
        %v1522 = vpop.f32.mrf.mxu0
        %v1523 = vadd.f32 0.0, %v1522
        %v1524 = vpop.f32.mrf.mxu0
        %1525 = vmatprep.mubr.f32.mxu0 0.0
        %1526 = vmatmul.mubr.f32.gmra.mxu0 %v1435
        %v1527 = vpop.f32.mrf.mxu0
        %v1528 = vadd.f32 0.0, %v1527
        %v1529 = vpop.f32.mrf.mxu0
        %1530 = vmatprep.mubr.f32.mxu0 0.0
        %1531 = vmatmul.mubr.f32.gmra.mxu0 %v1438
        %v1532 = vpop.f32.mrf.mxu0
        %v1533 = vadd.f32 0.0, %v1532
        %v1534 = vpop.f32.mrf.mxu0
        %1535 = vmatprep.mubr.f32.mxu0 0.0
        %1536 = vmatmul.mubr.f32.gmra.mxu0 %v1441
        %v1537 = vpop.f32.mrf.mxu0
        %v1538 = vadd.f32 0.0, %v1537
        %v1539 = vpop.f32.mrf.mxu0
        %1540 = vmatprep.mubr.f32.mxu0 0.0
        %1541 = vmatmul.mubr.f32.gmra.mxu0 %v1444
        %v1542 = vpop.f32.mrf.mxu0
        %v1543 = vadd.f32 0.0, %v1542
        %v1544 = vpop.f32.mrf.mxu0
        %1545 = vdwg.mxu0
        %v1546 = vadd.f32 %v1418, %v1513
        %v1547 = vadd.f32 %v1419, %v1518
        %v1548 = vadd.f32 %v1420, %v1523
        %v1549 = vadd.f32 %v1421, %v1528
        %v1550 = vadd.f32 %v1422, %v1533
        %v1551 = vadd.f32 %v1423, %v1538
        %v1552 = vadd.f32 %v1424, %v1543
        %1553 = vst [vmem:[#allocation2] sm:$0xff] %v1546
        %1554 = vst [vmem:[#allocation2 + $0x8] sm:$0xff] %v1547
        %1555 = vst [vmem:[#allocation2 + $0x10] sm:$0xff] %v1548
        %1556 = vst [vmem:[#allocation2 + $0x18] sm:$0xff] %v1549
        %1557 = vst [vmem:[#allocation2 + $0x20] sm:$0xff] %v1550
        %1558 = vst [vmem:[#allocation2 + $0x28] sm:$0xff] %v1551
        %1559 = vst [vmem:[#allocation2 + $0x30] sm:$0xff] %v1552
        %s1560 = scalar_lea.vmem %s304, 16
        %v1561 = vld [vmem:[%s1560] sm:$0xff]
        %v1562 = vld [vmem:[#allocation2 + $0x38] sm:$0xff]
        %v1564 = vsel %vm323, %v1561, 0
        %1566 = vmatprep.subr.mxu0 0.0
        %1567 = vmatpush1.msra.mxu0 0.0
        %1568 = vmatprep.subr.mxu0 0.0
        %1569 = vmatpush1.msra.mxu0 0.0
        %1570 = vmatprep.subr.mxu0 0.0
        %1571 = vmatpush1.msra.mxu0 0.0
        %1572 = vmatprep.subr.mxu0 0.0
        %1573 = vmatpush1.msra.mxu0 0.0
        %1574 = vmatprep.subr.mxu0 0.0
        %1575 = vmatpush1.msra.mxu0 0.0
        %1576 = vmatprep.subr.mxu0 0.0
        %1577 = vmatpush1.msra.mxu0 0.0
        %1578 = vmatprep.subr.mxu0 0.0
        %1579 = vmatpush1.msra.mxu0 0.0
        %1580 = vmatprep.subr.mxu0 0.0
        %1581 = vmatpush1.msra.mxu0 0.0
        %1582 = vmatprep.subr.mxu0 0.0
        %1583 = vmatpush1.msra.mxu0 0.0
        %1584 = vmatprep.subr.mxu0 0.0
        %1585 = vmatpush1.msra.mxu0 0.0
        %1586 = vmatprep.subr.mxu0 0.0
        %1587 = vmatpush1.msra.mxu0 0.0
        %1588 = vmatprep.subr.mxu0 0.0
        %1589 = vmatpush1.msra.mxu0 0.0
        %1590 = vmatprep.subr.mxu0 0.0
        %1591 = vmatpush1.msra.mxu0 0.0
        %1592 = vmatprep.subr.mxu0 0.0
        %1593 = vmatpush1.msra.mxu0 0.0
        %1594 = vmatprep.subr.mxu0 0.0
        %1595 = vmatpush1.msra.mxu0 0.0
        %1596 = vmatprep.subr.mxu0 0.0
        %1597 = vmatpush1.msra.mxu0 %v1409
        %1598 = vmatprep.subr.mxu0 0.0
        %1599 = vmatpush2.msra.mxu0 0.0
        %1600 = vmatprep.subr.mxu0 0.0
        %1601 = vmatpush2.msra.mxu0 0.0
        %1602 = vmatprep.subr.mxu0 0.0
        %1603 = vmatpush2.msra.mxu0 0.0
        %1604 = vmatprep.subr.mxu0 0.0
        %1605 = vmatpush2.msra.mxu0 0.0
        %1606 = vmatprep.subr.mxu0 0.0
        %1607 = vmatpush2.msra.mxu0 0.0
        %1608 = vmatprep.subr.mxu0 0.0
        %1609 = vmatpush2.msra.mxu0 0.0
        %1610 = vmatprep.subr.mxu0 0.0
        %1611 = vmatpush2.msra.mxu0 0.0
        %1612 = vmatprep.subr.mxu0 0.0
        %1613 = vmatpush2.msra.mxu0 0.0
        %1614 = vmatprep.subr.mxu0 0.0
        %1615 = vmatpush2.msra.mxu0 0.0
        %1616 = vmatprep.subr.mxu0 0.0
        %1617 = vmatpush2.msra.mxu0 0.0
        %1618 = vmatprep.subr.mxu0 0.0
        %1619 = vmatpush2.msra.mxu0 0.0
        %1620 = vmatprep.subr.mxu0 0.0
        %1621 = vmatpush2.msra.mxu0 0.0
        %1622 = vmatprep.subr.mxu0 0.0
        %1623 = vmatpush2.msra.mxu0 0.0
        %1624 = vmatprep.subr.mxu0 0.0
        %1625 = vmatpush2.msra.mxu0 0.0
        %1626 = vmatprep.subr.mxu0 0.0
        %1627 = vmatpush2.msra.mxu0 0.0
        %1628 = vmatprep.subr.mxu0 0.0
        %1629 = vmatpush2.msra.mxu0 0.0
        %1630 = vmatprep.mubr.f32.mxu0 0.0
        %1631 = vmatmul.mubr.f32.gmra.mxu0 %v1564
        %v1632 = vpop.f32.mrf.mxu0
        %v1633 = vadd.f32 0.0, %v1632
        %v1634 = vpop.f32.mrf.mxu0
        %1635 = vdwg.mxu0
        %v1636 = vadd.f32 %v1562, %v1633
        %1637 = vst [vmem:[#allocation2 + $0x38] sm:$0xff] %v1636
        %s1638 = scalar_lea.vmem %s2, 56
        %v1639 = vld [vmem:[%s1638] sm:$0xff]
        %v1640 = vld [vmem:[%s1410 + $0x1] sm:$0xff]
        %v1641 = vld [vmem:[%s1410 + $0x21] sm:$0xff]
        %v1642 = vld [vmem:[%s1410 + $0x41] sm:$0xff]
        %v1643 = vld [vmem:[%s1410 + $0x61] sm:$0xff]
        %v1644 = vld [vmem:[%s1410 + $0x81] sm:$0xff]
        %v1645 = vld [vmem:[%s1410 + $0xa1] sm:$0xff]
        %v1646 = vld [vmem:[%s1410 + $0xc1] sm:$0xff]
        %v1647 = vld [vmem:[#allocation2] sm:$0xff]
        %v1648 = vld [vmem:[#allocation2 + $0x8] sm:$0xff]
        %v1649 = vld [vmem:[#allocation2 + $0x10] sm:$0xff]
        %v1650 = vld [vmem:[#allocation2 + $0x18] sm:$0xff]
        %v1651 = vld [vmem:[#allocation2 + $0x20] sm:$0xff]
        %v1652 = vld [vmem:[#allocation2 + $0x28] sm:$0xff]
        %v1653 = vld [vmem:[#allocation2 + $0x30] sm:$0xff]
        %v1655 = vsel %vm323, %v1640, 0
        %v1658 = vsel %vm323, %v1641, 0
        %v1661 = vsel %vm323, %v1642, 0
        %v1664 = vsel %vm323, %v1643, 0
        %v1667 = vsel %vm323, %v1644, 0
        %v1670 = vsel %vm323, %v1645, 0
        %v1673 = vsel %vm323, %v1646, 0
        %1675 = vmatprep.subr.mxu0 0.0
        %1676 = vmatpush1.msra.mxu0 0.0
        %1677 = vmatprep.subr.mxu0 0.0
        %1678 = vmatpush1.msra.mxu0 0.0
        %1679 = vmatprep.subr.mxu0 0.0
        %1680 = vmatpush1.msra.mxu0 0.0
        %1681 = vmatprep.subr.mxu0 0.0
        %1682 = vmatpush1.msra.mxu0 0.0
        %1683 = vmatprep.subr.mxu0 0.0
        %1684 = vmatpush1.msra.mxu0 0.0
        %1685 = vmatprep.subr.mxu0 0.0
        %1686 = vmatpush1.msra.mxu0 0.0
        %1687 = vmatprep.subr.mxu0 0.0
        %1688 = vmatpush1.msra.mxu0 0.0
        %1689 = vmatprep.subr.mxu0 0.0
        %1690 = vmatpush1.msra.mxu0 0.0
        %1691 = vmatprep.subr.mxu0 0.0
        %1692 = vmatpush1.msra.mxu0 0.0
        %1693 = vmatprep.subr.mxu0 0.0
        %1694 = vmatpush1.msra.mxu0 0.0
        %1695 = vmatprep.subr.mxu0 0.0
        %1696 = vmatpush1.msra.mxu0 0.0
        %1697 = vmatprep.subr.mxu0 0.0
        %1698 = vmatpush1.msra.mxu0 0.0
        %1699 = vmatprep.subr.mxu0 0.0
        %1700 = vmatpush1.msra.mxu0 0.0
        %1701 = vmatprep.subr.mxu0 0.0
        %1702 = vmatpush1.msra.mxu0 0.0
        %1703 = vmatprep.subr.mxu0 0.0
        %1704 = vmatpush1.msra.mxu0 0.0
        %1705 = vmatprep.subr.mxu0 0.0
        %1706 = vmatpush1.msra.mxu0 %v1639
        %1707 = vmatprep.subr.mxu0 0.0
        %1708 = vmatpush2.msra.mxu0 0.0
        %1709 = vmatprep.subr.mxu0 0.0
        %1710 = vmatpush2.msra.mxu0 0.0
        %1711 = vmatprep.subr.mxu0 0.0
        %1712 = vmatpush2.msra.mxu0 0.0
        %1713 = vmatprep.subr.mxu0 0.0
        %1714 = vmatpush2.msra.mxu0 0.0
        %1715 = vmatprep.subr.mxu0 0.0
        %1716 = vmatpush2.msra.mxu0 0.0
        %1717 = vmatprep.subr.mxu0 0.0
        %1718 = vmatpush2.msra.mxu0 0.0
        %1719 = vmatprep.subr.mxu0 0.0
        %1720 = vmatpush2.msra.mxu0 0.0
        %1721 = vmatprep.subr.mxu0 0.0
        %1722 = vmatpush2.msra.mxu0 0.0
        %1723 = vmatprep.subr.mxu0 0.0
        %1724 = vmatpush2.msra.mxu0 0.0
        %1725 = vmatprep.subr.mxu0 0.0
        %1726 = vmatpush2.msra.mxu0 0.0
        %1727 = vmatprep.subr.mxu0 0.0
        %1728 = vmatpush2.msra.mxu0 0.0
        %1729 = vmatprep.subr.mxu0 0.0
        %1730 = vmatpush2.msra.mxu0 0.0
        %1731 = vmatprep.subr.mxu0 0.0
        %1732 = vmatpush2.msra.mxu0 0.0
        %1733 = vmatprep.subr.mxu0 0.0
        %1734 = vmatpush2.msra.mxu0 0.0
        %1735 = vmatprep.subr.mxu0 0.0
        %1736 = vmatpush2.msra.mxu0 0.0
        %1737 = vmatprep.subr.mxu0 0.0
        %1738 = vmatpush2.msra.mxu0 0.0
        %1739 = vmatprep.mubr.f32.mxu0 0.0
        %1740 = vmatmul.mubr.f32.gmra.mxu0 %v1655
        %v1741 = vpop.f32.mrf.mxu0
        %v1742 = vadd.f32 0.0, %v1741
        %v1743 = vpop.f32.mrf.mxu0
        %1744 = vmatprep.mubr.f32.mxu0 0.0
        %1745 = vmatmul.mubr.f32.gmra.mxu0 %v1658
        %v1746 = vpop.f32.mrf.mxu0
        %v1747 = vadd.f32 0.0, %v1746
        %v1748 = vpop.f32.mrf.mxu0
        %1749 = vmatprep.mubr.f32.mxu0 0.0
        %1750 = vmatmul.mubr.f32.gmra.mxu0 %v1661
        %v1751 = vpop.f32.mrf.mxu0
        %v1752 = vadd.f32 0.0, %v1751
        %v1753 = vpop.f32.mrf.mxu0
        %1754 = vmatprep.mubr.f32.mxu0 0.0
        %1755 = vmatmul.mubr.f32.gmra.mxu0 %v1664
        %v1756 = vpop.f32.mrf.mxu0
        %v1757 = vadd.f32 0.0, %v1756
        %v1758 = vpop.f32.mrf.mxu0
        %1759 = vmatprep.mubr.f32.mxu0 0.0
        %1760 = vmatmul.mubr.f32.gmra.mxu0 %v1667
        %v1761 = vpop.f32.mrf.mxu0
        %v1762 = vadd.f32 0.0, %v1761
        %v1763 = vpop.f32.mrf.mxu0
        %1764 = vmatprep.mubr.f32.mxu0 0.0
        %1765 = vmatmul.mubr.f32.gmra.mxu0 %v1670
        %v1766 = vpop.f32.mrf.mxu0
        %v1767 = vadd.f32 0.0, %v1766
        %v1768 = vpop.f32.mrf.mxu0
        %1769 = vmatprep.mubr.f32.mxu0 0.0
        %1770 = vmatmul.mubr.f32.gmra.mxu0 %v1673
        %v1771 = vpop.f32.mrf.mxu0
        %v1772 = vadd.f32 0.0, %v1771
        %v1773 = vpop.f32.mrf.mxu0
        %1774 = vdwg.mxu0
        %v1775 = vadd.f32 %v1647, %v1742
        %v1776 = vadd.f32 %v1648, %v1747
        %v1777 = vadd.f32 %v1649, %v1752
        %v1778 = vadd.f32 %v1650, %v1757
        %v1779 = vadd.f32 %v1651, %v1762
        %v1780 = vadd.f32 %v1652, %v1767
        %v1781 = vadd.f32 %v1653, %v1772
        %1782 = vst [vmem:[#allocation2] sm:$0xff] %v1775
        %1783 = vst [vmem:[#allocation2 + $0x8] sm:$0xff] %v1776
        %1784 = vst [vmem:[#allocation2 + $0x10] sm:$0xff] %v1777
        %1785 = vst [vmem:[#allocation2 + $0x18] sm:$0xff] %v1778
        %1786 = vst [vmem:[#allocation2 + $0x20] sm:$0xff] %v1779
        %1787 = vst [vmem:[#allocation2 + $0x28] sm:$0xff] %v1780
        %1788 = vst [vmem:[#allocation2 + $0x30] sm:$0xff] %v1781
        %v1789 = vld [vmem:[%s1560 + $0x1] sm:$0xff]
        %v1790 = vld [vmem:[#allocation2 + $0x38] sm:$0xff]
        %v1792 = vsel %vm323, %v1789, 0
        %1794 = vmatprep.subr.mxu0 0.0
        %1795 = vmatpush1.msra.mxu0 0.0
        %1796 = vmatprep.subr.mxu0 0.0
        %1797 = vmatpush1.msra.mxu0 0.0
        %1798 = vmatprep.subr.mxu0 0.0
        %1799 = vmatpush1.msra.mxu0 0.0
        %1800 = vmatprep.subr.mxu0 0.0
        %1801 = vmatpush1.msra.mxu0 0.0
        %1802 = vmatprep.subr.mxu0 0.0
        %1803 = vmatpush1.msra.mxu0 0.0
        %1804 = vmatprep.subr.mxu0 0.0
        %1805 = vmatpush1.msra.mxu0 0.0
        %1806 = vmatprep.subr.mxu0 0.0
        %1807 = vmatpush1.msra.mxu0 0.0
        %1808 = vmatprep.subr.mxu0 0.0
        %1809 = vmatpush1.msra.mxu0 0.0
        %1810 = vmatprep.subr.mxu0 0.0
        %1811 = vmatpush1.msra.mxu0 0.0
        %1812 = vmatprep.subr.mxu0 0.0
        %1813 = vmatpush1.msra.mxu0 0.0
        %1814 = vmatprep.subr.mxu0 0.0
        %1815 = vmatpush1.msra.mxu0 0.0
        %1816 = vmatprep.subr.mxu0 0.0
        %1817 = vmatpush1.msra.mxu0 0.0
        %1818 = vmatprep.subr.mxu0 0.0
        %1819 = vmatpush1.msra.mxu0 0.0
        %1820 = vmatprep.subr.mxu0 0.0
        %1821 = vmatpush1.msra.mxu0 0.0
        %1822 = vmatprep.subr.mxu0 0.0
        %1823 = vmatpush1.msra.mxu0 0.0
        %1824 = vmatprep.subr.mxu0 0.0
        %1825 = vmatpush1.msra.mxu0 %v1639
        %1826 = vmatprep.subr.mxu0 0.0
        %1827 = vmatpush2.msra.mxu0 0.0
        %1828 = vmatprep.subr.mxu0 0.0
        %1829 = vmatpush2.msra.mxu0 0.0
        %1830 = vmatprep.subr.mxu0 0.0
        %1831 = vmatpush2.msra.mxu0 0.0
        %1832 = vmatprep.subr.mxu0 0.0
        %1833 = vmatpush2.msra.mxu0 0.0
        %1834 = vmatprep.subr.mxu0 0.0
        %1835 = vmatpush2.msra.mxu0 0.0
        %1836 = vmatprep.subr.mxu0 0.0
        %1837 = vmatpush2.msra.mxu0 0.0
        %1838 = vmatprep.subr.mxu0 0.0
        %1839 = vmatpush2.msra.mxu0 0.0
        %1840 = vmatprep.subr.mxu0 0.0
        %1841 = vmatpush2.msra.mxu0 0.0
        %1842 = vmatprep.subr.mxu0 0.0
        %1843 = vmatpush2.msra.mxu0 0.0
        %1844 = vmatprep.subr.mxu0 0.0
        %1845 = vmatpush2.msra.mxu0 0.0
        %1846 = vmatprep.subr.mxu0 0.0
        %1847 = vmatpush2.msra.mxu0 0.0
        %1848 = vmatprep.subr.mxu0 0.0
        %1849 = vmatpush2.msra.mxu0 0.0
        %1850 = vmatprep.subr.mxu0 0.0
        %1851 = vmatpush2.msra.mxu0 0.0
        %1852 = vmatprep.subr.mxu0 0.0
        %1853 = vmatpush2.msra.mxu0 0.0
        %1854 = vmatprep.subr.mxu0 0.0
        %1855 = vmatpush2.msra.mxu0 0.0
        %1856 = vmatprep.subr.mxu0 0.0
        %1857 = vmatpush2.msra.mxu0 0.0
        %1858 = vmatprep.mubr.f32.mxu0 0.0
        %1859 = vmatmul.mubr.f32.gmra.mxu0 %v1792
        %v1860 = vpop.f32.mrf.mxu0
        %v1861 = vadd.f32 0.0, %v1860
        %v1862 = vpop.f32.mrf.mxu0
        %1863 = vdwg.mxu0
        %v1864 = vadd.f32 %v1790, %v1861
        %1865 = vst [vmem:[#allocation2 + $0x38] sm:$0xff] %v1864
        %v1866 = vld [vmem:[#allocation2] sm:$0xff]
        %v1867 = vld [vmem:[#allocation2 + $0x8] sm:$0xff]
        %v1868 = vld [vmem:[#allocation2 + $0x10] sm:$0xff]
        %v1869 = vld [vmem:[#allocation2 + $0x18] sm:$0xff]
        %v1870 = vld [vmem:[#allocation2 + $0x20] sm:$0xff]
        %v1871 = vld [vmem:[#allocation2 + $0x28] sm:$0xff]
        %v1872 = vld [vmem:[#allocation2 + $0x30] sm:$0xff]
        %v1873 = vld [vmem:[#allocation2 + $0x38] sm:$0xff]
        %1874 = vxpose.xlu0.b32.start [1/16] %v1866, 128
        %1875 = vxpose.xlu0.b32.cont [2/16] %v1867, 128
        %1876 = vxpose.xlu0.b32.cont [3/16] %v1868, 128
        %1877 = vxpose.xlu0.b32.cont [4/16] %v1869, 128
        %1878 = vxpose.xlu0.b32.cont [5/16] %v1870, 128
        %1879 = vxpose.xlu0.b32.cont [6/16] %v1871, 128
        %1880 = vxpose.xlu0.b32.cont [7/16] %v1872, 128
        %1881 = vxpose.xlu0.b32.cont [8/16] %v1873, 128
        %1882 = vxpose.xlu0.b32.cont [9/16] 0.0, 128
        %1883 = vxpose.xlu0.b32.cont [10/16] 0.0, 128
        %1884 = vxpose.xlu0.b32.cont [11/16] 0.0, 128
        %1885 = vxpose.xlu0.b32.cont [12/16] 0.0, 128
        %1886 = vxpose.xlu0.b32.cont [13/16] 0.0, 128
        %1887 = vxpose.xlu0.b32.cont [14/16] 0.0, 128
        %1888 = vxpose.xlu0.b32.cont [15/16] 0.0, 128
        %1889 = vxpose.xlu0.b32.end [16/16] 0.0, 128
        %v1890 = vpop.trf.xlu0
        %v1891 = vpop.trf.xlu0
        %v1892 = vpop.trf.xlu0
        %v1893 = vpop.trf.xlu0
        %v1894 = vpop.trf.xlu0
        %v1895 = vpop.trf.xlu0
        %v1896 = vpop.trf.xlu0
        %v1897 = vpop.trf.xlu0
        %v1898 = vpop.trf.xlu0
        %v1899 = vpop.trf.xlu0
        %v1900 = vpop.trf.xlu0
        %v1901 = vpop.trf.xlu0
        %v1902 = vpop.trf.xlu0
        %v1903 = vpop.trf.xlu0
        %v1904 = vpop.trf.xlu0
        %v1905 = vpop.trf.xlu0
        %vm1906 = vcmask 523264
        %1907 = vst.msk [vmem:[%s270] sm:$0xff] %vm1906, %v1890
        %s1908 = sand.u32 %s142, 1
        %s1909 = scalar_lea.sflag [#allocation4], %s1908
        %s1910 = sand.u32 %s142, 1
        %s1911 = smul.addr %s1910, 8
        %s1912 = scalar_lea.vmem [#allocation3], %s1911
        // Predicated region
        $region37: #{tpu_custom_call.1} parent=35 // pred_check
          %p1913 = pneg %p152
        $region38: #{tpu_custom_call.1} parent=35 // pred_check_branch
          %1915 = sbr.rel (%p1913) target = $region40
        $region39: #{tpu_custom_call.1} parent=35 // pred_region
          %s1917 = ssub.s32 128, 128
          %1918 = vsyncadd %s1909, %s1917
          %s1919 = sadd.s32 %s23, %s22
          %s1920 = smul.addr %s1919, 128
          %s1921 = scalar_lea.hbm %s4, %s1920
          %s1923 = sshll.u32 %s1912, 4
          %s1924 = int_to_ptr.vmem [resolvable:$true] %s1923
          %1926 = dma.vmem_to_hbm [thread:$0]  %s1924, 128, %s1921, %s1909
        $region40: #{tpu_custom_call.1} parent=35 // pred_fallthru
          _
      $region36: #{tpu_custom_call.1} parent=5 // pred_fallthru
        _
      %p1927 = scmp.le.s32.totalorder 2, %s13
      // Predicated region
      $region41: #{tpu_custom_call.1} parent=5 // pred_check
        %p1928 = pneg %p1927
      $region42: #{tpu_custom_call.1} parent=5 // pred_check_branch
        %1930 = sbr.rel (%p1928) target = $region44
      $region43: #{tpu_custom_call.1} parent=5 // pred_region
        %s1931 = ssub.s32 %s13, 2
        // Predicated region
        $region45: #{tpu_custom_call.1} parent=43 // pred_check
          %p1932 = pneg %p158
        $region46: #{tpu_custom_call.1} parent=43 // pred_check_branch
          %1934 = sbr.rel (%p1932) target = $region48
        $region47: #{tpu_custom_call.1} parent=43 // pred_region
          %s1935 = sand.u32 %s143, 1
          %s1936 = scalar_lea.sflag [#allocation4], %s1935
          %s1937 = sand.u32 %s143, 1
          %s1938 = smul.addr %s1937, 8
          %s1939 = scalar_lea.vmem [#allocation3], %s1938
          %1940 = dma.done %s1936, 128
        $region48: #{tpu_custom_call.1} parent=43 // pred_fallthru
          _
      $region44: #{tpu_custom_call.1} parent=5 // pred_fallthru
        _
    $region6: #{tpu_custom_call.1} parent=1 // loop_footer
      %s17 = sadd.s32 1, %s13
    $region7: #{tpu_custom_call.1} parent=1 // loop_footer_branch
      %12 = sbr.rel target = $region3
    $region8: #{tpu_custom_call.1} parent=1 // loop_exit
      _
    %1941 = vsyncpa [#allocation4], 1
    %s1942 = scalar_lea.sflag [#allocation4], 1
    %1943 = vsyncpa %s1942, 1

</llo_original>
